<compile_context>
chip_gen: v5e
topology: v5e:2x2
jax: 0.10.0
libtpu: 0.0.40
codegen_flags: <defaults>
</compile_context>

<pallas_src>
import functools

import jax
import jax.numpy as jnp
from jax.experimental import pallas as pl
from jax.experimental.pallas import tpu as pltpu


# ---------------------------------------------------------------------------
# Fused forward kernel: TB images per grid step, one matmul per layer.
# ---------------------------------------------------------------------------
def _fused_forward_kernel(xq_ref, w1_ref, b1_ref, w2_ref, b2_ref,
                          wfc_ref, bfc_ref, wh_ref, bh_ref, out_ref, *, tb):
    f32 = jnp.float32
    bf16 = jnp.bfloat16

    # ---- conv1 (9x9, 1->10) + 2x2 max-pool + bias + ReLU -------------------
    # xq block: (1, 4, 9*tb, 36); row (t*tb + i) of plane m holds image row
    # 4*t + m of image i.  The four pooling phases (q, dh) are stacked along M
    # so the whole layer is one MXU matmul (4*7*tb, 324) @ (324, 280).
    phase_slabs = []
    for q in (0, 1):                       # pooled-row parity: hp = 2*t + q
        for dh in (0, 1):                  # pooling row phase
            pieces = []
            for ki in range(9):            # conv kernel row offset
                s = 2 * q + dh + ki        # needed image row = 4*t + s
                m, t0 = s % 4, s // 4
                pieces.append(xq_ref[0, m, t0 * tb:(t0 + 7) * tb, :])  # (7tb,36)
            phase_slabs.append(jnp.concatenate(pieces, axis=1))       # (7tb,324)
    lhs1 = jnp.concatenate(phase_slabs, axis=0)                        # (28tb,324)
    acc1 = jnp.dot(lhs1, w1_ref[...], preferred_element_type=f32)      # (28tb,280)

    n7 = 7 * tb
    h1 = []
    for q in (0, 1):
        aq = jnp.maximum(acc1[(2 * q) * n7:(2 * q + 1) * n7],
                         acc1[(2 * q + 1) * n7:(2 * q + 2) * n7])      # max over dh
        aq = jnp.maximum(aq[:, :140], aq[:, 140:])                     # max over dw
        h1.append(jnp.maximum(aq + b1_ref[...], 0.0).astype(bf16))     # (7tb,140)

    # ---- conv2 (5x5, 10->20) + 2x2 max-pool + bias + ReLU -------------------
    # One matmul (2*5*tb, 700) @ (700, 200); h1[q] rows are (t*tb + i).
    phase_slabs2 = []
    for dh in (0, 1):
        pieces = []
        for ki in range(5):
            s = dh + ki                     # needed pooled1 row = 2*t2 + s
            q, t0 = s % 2, s // 2
            pieces.append(h1[q][t0 * tb:(t0 + 5) * tb, :])             # (5tb,140)
        phase_slabs2.append(jnp.concatenate(pieces, axis=1))           # (5tb,700)
    lhs2 = jnp.concatenate(phase_slabs2, axis=0)                       # (10tb,700)
    acc2 = jnp.dot(lhs2, w2_ref[...], preferred_element_type=f32)      # (10tb,200)

    n5 = 5 * tb
    a2 = jnp.maximum(acc2[0:n5], acc2[n5:2 * n5])                      # max over dh
    a2 = jnp.maximum(a2[:, :100], a2[:, 100:])                         # max over dw
    h2 = jnp.maximum(a2 + b2_ref[...], 0.0).astype(bf16)               # (5tb,100)

    # ---- fc1 (500 -> 50, padded to 64) + ReLU: one K=500 matmul ------------
    lhs_fc = jnp.concatenate([h2[r * tb:(r + 1) * tb, :] for r in range(5)],
                             axis=1)                                   # (tb,500)
    f = jnp.dot(lhs_fc, wfc_ref[...], preferred_element_type=f32) + bfc_ref[...]
    f = jnp.maximum(f, 0.0).astype(bf16)                               # (tb,64)

    # ---- all task heads in one matmul (50 -> n_tasks*10, lane-padded) ------
    out = jnp.dot(f, wh_ref[...], preferred_element_type=f32) + bh_ref[...]
    out_ref[...] = out                                                 # (tb, nt_pad)


# ---------------------------------------------------------------------------
# Wrapper-side weight packing (run ONCE at init, not per forward call).
# ---------------------------------------------------------------------------
def _band_weight(w, ki, in_w, out_wp, dw):
    """Banded matrix folding the (width, channel) contraction of a VALID conv
    (and the 2x2-pool column phase `dw`) into a dense matmul.

    w: (OC, C, KH, KW).  Returns (in_w*C, out_wp*OC) with
    entry[(wi*C + c), (wp*OC + oc)] = w[oc, c, ki, wi - (2*wp + dw)]
    (zero outside the band)."""
    OC, C, KH, KW = w.shape
    wi = jnp.arange(in_w)[:, None, None, None]
    c = jnp.arange(C)[None, :, None, None]
    wp = jnp.arange(out_wp)[None, None, :, None]
    oc = jnp.arange(OC)[None, None, None, :]
    kj = wi - (2 * wp + dw)
    valid = (kj >= 0) & (kj < KW)
    vals = w[oc, c, ki, jnp.clip(kj, 0, KW - 1)]      # (in_w, C, out_wp, OC)
    vals = jnp.where(valid, vals, 0.0)
    return vals.reshape(in_w * C, out_wp * OC)


def pack_params(params):
    """Repack PyTorch-layout parameters into the kernel's banded/padded
    matrices.  Call once; pass the result dict to regression_model_forward."""
    n_tasks = params["task_w"].shape[0]
    nt_pad = max(128, ((n_tasks * 10 + 127) // 128) * 128)

    w1 = params["conv1_w"].astype(jnp.float32)        # (10, 1, 9, 9)
    w2 = params["conv2_w"].astype(jnp.float32)        # (20, 10, 5, 5)

    # K-concat over kernel-row ki, N-concat over pooling column phase dw.
    w1cat = jnp.concatenate(
        [jnp.concatenate([_band_weight(w1, ki, 36, 14, dw) for dw in (0, 1)],
                         axis=1) for ki in range(9)], axis=0)     # (324, 280)
    w2cat = jnp.concatenate(
        [jnp.concatenate([_band_weight(w2, ki, 14, 5, dw) for dw in (0, 1)],
                         axis=1) for ki in range(5)], axis=0)     # (700, 200)

    b1big = jnp.tile(params["conv1_b"].astype(jnp.float32), 14).reshape(1, 140)
    b2big = jnp.tile(params["conv2_b"].astype(jnp.float32), 5).reshape(1, 100)

    # fc1: permute columns from torch's (c, h, w) flatten order to the kernel's
    # (h*100 + w*20 + c) activation layout, pad 50 -> 64 outputs.
    fw = params["fc1_w"].astype(jnp.float32).reshape(50, 20, 5, 5)
    fw = fw.transpose(2, 3, 1, 0).reshape(500, 50)                # (h*100+w*20+c, out)
    wfc = jnp.pad(fw, ((0, 0), (0, 14)))                          # (500, 64)
    bfc = jnp.pad(params["fc1_b"].astype(jnp.float32), (0, 14)).reshape(1, 64)

    # All task heads batched into one (64, nt_pad) matrix.
    hw = params["task_w"].astype(jnp.float32).transpose(2, 0, 1)
    hw = hw.reshape(50, n_tasks * 10)
    whead = jnp.zeros((64, nt_pad), jnp.float32).at[:50, :n_tasks * 10].set(hw)
    bhead = jnp.zeros((1, nt_pad), jnp.float32).at[0, :n_tasks * 10].set(
        params["task_b"].astype(jnp.float32).reshape(-1))

    return dict(
        w1=w1cat.astype(jnp.bfloat16), b1=b1big,
        w2=w2cat.astype(jnp.bfloat16), b2=b2big,
        wfc=wfc.astype(jnp.bfloat16), bfc=bfc,
        whead=whead.astype(jnp.bfloat16), bhead=bhead,
    )


# ---------------------------------------------------------------------------
# Model forward
# ---------------------------------------------------------------------------
def regression_model_forward(packed, x, n_tasks, tb=32):
    """packed: output of pack_params; x: (B, 1, 36, 36) f32 -> (B, n_tasks, 10)."""
    B = x.shape[0]
    # tb must be a multiple of 8; don't pad the batch more than necessary.
    tb = max(8, (tb // 8) * 8)
    tb = min(tb, ((B + 7) // 8) * 8)
    bp = ((B + tb - 1) // tb) * tb
    g = bp // tb
    nt_pad = packed["whead"].shape[1]

    xp = x if bp == B else jnp.pad(x, ((0, bp - B), (0, 0), (0, 0), (0, 0)))
    # Relayout: xq[gi, m, t*tb + i, w] = x[gi*tb + i, 0, 4*t + m, w]
    # so every kernel row-slab is a contiguous (7*tb, 36) slice.
    xq = xp[:, 0].astype(jnp.bfloat16).reshape(g, tb, 9, 4, 36)
    xq = xq.transpose(0, 3, 2, 1, 4).reshape(g, 4, 9 * tb, 36)

    kernel = functools.partial(_fused_forward_kernel, tb=tb)

    out = pl.pallas_call(
        kernel,
        out_shape=jax.ShapeDtypeStruct((bp, nt_pad), jnp.float32),
        grid=(g,),
        in_specs=[
            pl.BlockSpec((1, 4, 9 * tb, 36), lambda b: (b, 0, 0, 0)),  # TB images
            pl.BlockSpec((324, 280), lambda b: (0, 0)),   # conv1 weights (resident)
            pl.BlockSpec((1, 140), lambda b: (0, 0)),
            pl.BlockSpec((700, 200), lambda b: (0, 0)),   # conv2 weights (resident)
            pl.BlockSpec((1, 100), lambda b: (0, 0)),
            pl.BlockSpec((500, 64), lambda b: (0, 0)),    # fc1 weights (resident)
            pl.BlockSpec((1, 64), lambda b: (0, 0)),
            pl.BlockSpec((64, nt_pad), lambda b: (0, 0)), # head weights (resident)
            pl.BlockSpec((1, nt_pad), lambda b: (0, 0)),
        ],
        out_specs=pl.BlockSpec((tb, nt_pad), lambda b: (b, 0)),
        compiler_params=pltpu.CompilerParams(
            dimension_semantics=("parallel",)),
    )(xq, packed["w1"], packed["b1"], packed["w2"], packed["b2"],
      packed["wfc"], packed["bfc"], packed["whead"], packed["bhead"])

    return out[:B, :n_tasks * 10].reshape(B, n_tasks, 10)


# ---------------------------------------------------------------------------
# Parameter init (PyTorch-style uniform) and pure-JAX reference for the test.
# ---------------------------------------------------------------------------
def init_params(key, n_tasks):
    ks = jax.random.split(key, 8)

    def u(k, shape, fan_in):
        bound = 1.0 / float(fan_in) ** 0.5
        return jax.random.uniform(k, shape, jnp.float32, -bound, bound)

    return dict(
        conv1_w=u(ks[0], (10, 1, 9, 9), 1 * 9 * 9),
        conv1_b=u(ks[1], (10,), 1 * 9 * 9),
        conv2_w=u(ks[2], (20, 10, 5, 5), 10 * 5 * 5),
        conv2_b=u(ks[3], (20,), 10 * 5 * 5),
        fc1_w=u(ks[4], (50, 5 * 5 * 20), 5 * 5 * 20),
        fc1_b=u(ks[5], (50,), 5 * 5 * 20),
        task_w=u(ks[6], (n_tasks, 10, 50), 50),
        task_b=u(ks[7], (n_tasks, 10), 50),
    )


def reference_forward(params, x):
    def conv(h, w, b):
        dn = jax.lax.conv_dimension_numbers(h.shape, w.shape,
                                            ("NCHW", "OIHW", "NCHW"))
        h = jax.lax.conv_general_dilated(h, w, (1, 1), "VALID",
                                         dimension_numbers=dn)
        return jax.nn.relu(h + b[None, :, None, None])

    def pool(h):
        return jax.lax.reduce_window(h, -jnp.inf, jax.lax.max,
                                     (1, 1, 2, 2), (1, 1, 2, 2), "VALID")

    h = pool(conv(x, params["conv1_w"], params["conv1_b"]))
    h = pool(conv(h, params["conv2_w"], params["conv2_b"]))
    h = h.reshape(h.shape[0], -1)
    h = jax.nn.relu(h @ params["fc1_w"].T + params["fc1_b"])
    outs = [h @ params["task_w"][t].T + params["task_b"][t]
            for t in range(params["task_w"].shape[0])]
    return jnp.stack(outs, axis=1)


if __name__ == "__main__":
    key = jax.random.PRNGKey(0)
    pkey, xkey = jax.random.split(key)

    n_tasks = 3
    batch = 12          # -> 2 grid steps of tb=8 (exercises padding + megacore)
    params = init_params(pkey, n_tasks)
    x = jax.random.normal(xkey, (batch, 1, 36, 36), jnp.float32)

    packed = pack_params(params)        # packing hoisted out of the call path
    fwd = jax.jit(functools.partial(regression_model_forward,
                                    n_tasks=n_tasks, tb=8))
    out = jax.block_until_ready(fwd(packed, x))
    assert out.shape == (batch, n_tasks, 10), out.shape

    ref = reference_forward(params, x)
    assert jnp.allclose(out, ref, rtol=2e-2, atol=2e-2), \
        float(jnp.max(jnp.abs(out - ref)))

    print("KERNEL_OK")
</pallas_src>

<mosaic_0001>
module attributes {stable_mosaic.version = 11 : i64} {
  func.func @_fused_forward_kernel(%arg0: i32, %arg1: memref<1x4x72x36xbf16, #tpu.memory_space<vmem>>, %arg2: memref<324x280xbf16, #tpu.memory_space<vmem>>, %arg3: memref<1x140xf32, #tpu.memory_space<vmem>>, %arg4: memref<700x200xbf16, #tpu.memory_space<vmem>>, %arg5: memref<1x100xf32, #tpu.memory_space<vmem>>, %arg6: memref<500x64xbf16, #tpu.memory_space<vmem>>, %arg7: memref<1x64xf32, #tpu.memory_space<vmem>>, %arg8: memref<64x128xbf16, #tpu.memory_space<vmem>>, %arg9: memref<1x128xf32, #tpu.memory_space<vmem>>, %arg10: memref<8x128xf32, #tpu.memory_space<vmem>>) attributes {dimension_semantics = [#tpu.dimension_semantics<parallel>], iteration_bounds = array<i64: 2>, scalar_prefetch = 0 : i64, scratch_operands = 0 : i64, tpu.core_type = #tpu.core_type<tc>, window_params = [{transform_indices = @transform_0, window_bounds = array<i64: 1, 4, 72, 36>}, {pipeline_mode = #tpu.pipeline_mode<synchronous>, transform_indices = @transform_1, window_bounds = array<i64: 324, 280>}, {pipeline_mode = #tpu.pipeline_mode<synchronous>, transform_indices = @transform_2, window_bounds = array<i64: 1, 140>}, {pipeline_mode = #tpu.pipeline_mode<synchronous>, transform_indices = @transform_3, window_bounds = array<i64: 700, 200>}, {pipeline_mode = #tpu.pipeline_mode<synchronous>, transform_indices = @transform_4, window_bounds = array<i64: 1, 100>}, {pipeline_mode = #tpu.pipeline_mode<synchronous>, transform_indices = @transform_5, window_bounds = array<i64: 500, 64>}, {pipeline_mode = #tpu.pipeline_mode<synchronous>, transform_indices = @transform_6, window_bounds = array<i64: 1, 64>}, {pipeline_mode = #tpu.pipeline_mode<synchronous>, transform_indices = @transform_7, window_bounds = array<i64: 64, 128>}, {pipeline_mode = #tpu.pipeline_mode<synchronous>, transform_indices = @transform_8, window_bounds = array<i64: 1, 128>}, {transform_indices = @transform_9, window_bounds = array<i64: 8, 128>}]} {
    %c0 = arith.constant 0 : index
    %c0_0 = arith.constant 0 : index
    %c0_1 = arith.constant 0 : index
    %c0_2 = arith.constant 0 : index
    %0 = vector.load %arg1[%c0, %c0_0, %c0_1, %c0_2] : memref<1x4x72x36xbf16, #tpu.memory_space<vmem>>, vector<1x1x56x36xbf16>
    %1 = vector.shape_cast %0 : vector<1x1x56x36xbf16> to vector<56x36xbf16>
    %c0_3 = arith.constant 0 : index
    %c1 = arith.constant 1 : index
    %c0_4 = arith.constant 0 : index
    %c0_5 = arith.constant 0 : index
    %2 = vector.load %arg1[%c0_3, %c1, %c0_4, %c0_5] : memref<1x4x72x36xbf16, #tpu.memory_space<vmem>>, vector<1x1x56x36xbf16>
    %3 = vector.shape_cast %2 : vector<1x1x56x36xbf16> to vector<56x36xbf16>
    %c0_6 = arith.constant 0 : index
    %c2 = arith.constant 2 : index
    %c0_7 = arith.constant 0 : index
    %c0_8 = arith.constant 0 : index
    %4 = vector.load %arg1[%c0_6, %c2, %c0_7, %c0_8] : memref<1x4x72x36xbf16, #tpu.memory_space<vmem>>, vector<1x1x56x36xbf16>
    %5 = vector.shape_cast %4 : vector<1x1x56x36xbf16> to vector<56x36xbf16>
    %c0_9 = arith.constant 0 : index
    %c3 = arith.constant 3 : index
    %c0_10 = arith.constant 0 : index
    %c0_11 = arith.constant 0 : index
    %6 = vector.load %arg1[%c0_9, %c3, %c0_10, %c0_11] : memref<1x4x72x36xbf16, #tpu.memory_space<vmem>>, vector<1x1x56x36xbf16>
    %7 = vector.shape_cast %6 : vector<1x1x56x36xbf16> to vector<56x36xbf16>
    %c0_12 = arith.constant 0 : index
    %c0_13 = arith.constant 0 : index
    %c8 = arith.constant 8 : index
    %c0_14 = arith.constant 0 : index
    %8 = vector.load %arg1[%c0_12, %c0_13, %c8, %c0_14] : memref<1x4x72x36xbf16, #tpu.memory_space<vmem>>, vector<1x1x56x36xbf16>
    %9 = vector.shape_cast %8 : vector<1x1x56x36xbf16> to vector<56x36xbf16>
    %c0_15 = arith.constant 0 : index
    %c1_16 = arith.constant 1 : index
    %c8_17 = arith.constant 8 : index
    %c0_18 = arith.constant 0 : index
    %10 = vector.load %arg1[%c0_15, %c1_16, %c8_17, %c0_18] : memref<1x4x72x36xbf16, #tpu.memory_space<vmem>>, vector<1x1x56x36xbf16>
    %11 = vector.shape_cast %10 : vector<1x1x56x36xbf16> to vector<56x36xbf16>
    %c0_19 = arith.constant 0 : index
    %c2_20 = arith.constant 2 : index
    %c8_21 = arith.constant 8 : index
    %c0_22 = arith.constant 0 : index
    %12 = vector.load %arg1[%c0_19, %c2_20, %c8_21, %c0_22] : memref<1x4x72x36xbf16, #tpu.memory_space<vmem>>, vector<1x1x56x36xbf16>
    %13 = vector.shape_cast %12 : vector<1x1x56x36xbf16> to vector<56x36xbf16>
    %c0_23 = arith.constant 0 : index
    %c3_24 = arith.constant 3 : index
    %c8_25 = arith.constant 8 : index
    %c0_26 = arith.constant 0 : index
    %14 = vector.load %arg1[%c0_23, %c3_24, %c8_25, %c0_26] : memref<1x4x72x36xbf16, #tpu.memory_space<vmem>>, vector<1x1x56x36xbf16>
    %15 = vector.shape_cast %14 : vector<1x1x56x36xbf16> to vector<56x36xbf16>
    %c0_27 = arith.constant 0 : index
    %c0_28 = arith.constant 0 : index
    %c16 = arith.constant 16 : index
    %c0_29 = arith.constant 0 : index
    %16 = vector.load %arg1[%c0_27, %c0_28, %c16, %c0_29] : memref<1x4x72x36xbf16, #tpu.memory_space<vmem>>, vector<1x1x56x36xbf16>
    %17 = vector.shape_cast %16 : vector<1x1x56x36xbf16> to vector<56x36xbf16>
    %18 = tpu.concatenate %1, %3, %5, %7, %9, %11, %13, %15, %17 in 1 : vector<56x36xbf16>, vector<56x36xbf16>, vector<56x36xbf16>, vector<56x36xbf16>, vector<56x36xbf16>, vector<56x36xbf16>, vector<56x36xbf16>, vector<56x36xbf16>, vector<56x36xbf16> -> vector<56x324xbf16>
    %c0_30 = arith.constant 0 : index
    %c1_31 = arith.constant 1 : index
    %c0_32 = arith.constant 0 : index
    %c0_33 = arith.constant 0 : index
    %19 = vector.load %arg1[%c0_30, %c1_31, %c0_32, %c0_33] : memref<1x4x72x36xbf16, #tpu.memory_space<vmem>>, vector<1x1x56x36xbf16>
    %20 = vector.shape_cast %19 : vector<1x1x56x36xbf16> to vector<56x36xbf16>
    %c0_34 = arith.constant 0 : index
    %c2_35 = arith.constant 2 : index
    %c0_36 = arith.constant 0 : index
    %c0_37 = arith.constant 0 : index
    %21 = vector.load %arg1[%c0_34, %c2_35, %c0_36, %c0_37] : memref<1x4x72x36xbf16, #tpu.memory_space<vmem>>, vector<1x1x56x36xbf16>
    %22 = vector.shape_cast %21 : vector<1x1x56x36xbf16> to vector<56x36xbf16>
    %c0_38 = arith.constant 0 : index
    %c3_39 = arith.constant 3 : index
    %c0_40 = arith.constant 0 : index
    %c0_41 = arith.constant 0 : index
    %23 = vector.load %arg1[%c0_38, %c3_39, %c0_40, %c0_41] : memref<1x4x72x36xbf16, #tpu.memory_space<vmem>>, vector<1x1x56x36xbf16>
    %24 = vector.shape_cast %23 : vector<1x1x56x36xbf16> to vector<56x36xbf16>
    %c0_42 = arith.constant 0 : index
    %c0_43 = arith.constant 0 : index
    %c8_44 = arith.constant 8 : index
    %c0_45 = arith.constant 0 : index
    %25 = vector.load %arg1[%c0_42, %c0_43, %c8_44, %c0_45] : memref<1x4x72x36xbf16, #tpu.memory_space<vmem>>, vector<1x1x56x36xbf16>
    %26 = vector.shape_cast %25 : vector<1x1x56x36xbf16> to vector<56x36xbf16>
    %c0_46 = arith.constant 0 : index
    %c1_47 = arith.constant 1 : index
    %c8_48 = arith.constant 8 : index
    %c0_49 = arith.constant 0 : index
    %27 = vector.load %arg1[%c0_46, %c1_47, %c8_48, %c0_49] : memref<1x4x72x36xbf16, #tpu.memory_space<vmem>>, vector<1x1x56x36xbf16>
    %28 = vector.shape_cast %27 : vector<1x1x56x36xbf16> to vector<56x36xbf16>
    %c0_50 = arith.constant 0 : index
    %c2_51 = arith.constant 2 : index
    %c8_52 = arith.constant 8 : index
    %c0_53 = arith.constant 0 : index
    %29 = vector.load %arg1[%c0_50, %c2_51, %c8_52, %c0_53] : memref<1x4x72x36xbf16, #tpu.memory_space<vmem>>, vector<1x1x56x36xbf16>
    %30 = vector.shape_cast %29 : vector<1x1x56x36xbf16> to vector<56x36xbf16>
    %c0_54 = arith.constant 0 : index
    %c3_55 = arith.constant 3 : index
    %c8_56 = arith.constant 8 : index
    %c0_57 = arith.constant 0 : index
    %31 = vector.load %arg1[%c0_54, %c3_55, %c8_56, %c0_57] : memref<1x4x72x36xbf16, #tpu.memory_space<vmem>>, vector<1x1x56x36xbf16>
    %32 = vector.shape_cast %31 : vector<1x1x56x36xbf16> to vector<56x36xbf16>
    %c0_58 = arith.constant 0 : index
    %c0_59 = arith.constant 0 : index
    %c16_60 = arith.constant 16 : index
    %c0_61 = arith.constant 0 : index
    %33 = vector.load %arg1[%c0_58, %c0_59, %c16_60, %c0_61] : memref<1x4x72x36xbf16, #tpu.memory_space<vmem>>, vector<1x1x56x36xbf16>
    %34 = vector.shape_cast %33 : vector<1x1x56x36xbf16> to vector<56x36xbf16>
    %c0_62 = arith.constant 0 : index
    %c1_63 = arith.constant 1 : index
    %c16_64 = arith.constant 16 : index
    %c0_65 = arith.constant 0 : index
    %35 = vector.load %arg1[%c0_62, %c1_63, %c16_64, %c0_65] : memref<1x4x72x36xbf16, #tpu.memory_space<vmem>>, vector<1x1x56x36xbf16>
    %36 = vector.shape_cast %35 : vector<1x1x56x36xbf16> to vector<56x36xbf16>
    %37 = tpu.concatenate %20, %22, %24, %26, %28, %30, %32, %34, %36 in 1 : vector<56x36xbf16>, vector<56x36xbf16>, vector<56x36xbf16>, vector<56x36xbf16>, vector<56x36xbf16>, vector<56x36xbf16>, vector<56x36xbf16>, vector<56x36xbf16>, vector<56x36xbf16> -> vector<56x324xbf16>
    %c0_66 = arith.constant 0 : index
    %c2_67 = arith.constant 2 : index
    %c0_68 = arith.constant 0 : index
    %c0_69 = arith.constant 0 : index
    %38 = vector.load %arg1[%c0_66, %c2_67, %c0_68, %c0_69] : memref<1x4x72x36xbf16, #tpu.memory_space<vmem>>, vector<1x1x56x36xbf16>
    %39 = vector.shape_cast %38 : vector<1x1x56x36xbf16> to vector<56x36xbf16>
    %c0_70 = arith.constant 0 : index
    %c3_71 = arith.constant 3 : index
    %c0_72 = arith.constant 0 : index
    %c0_73 = arith.constant 0 : index
    %40 = vector.load %arg1[%c0_70, %c3_71, %c0_72, %c0_73] : memref<1x4x72x36xbf16, #tpu.memory_space<vmem>>, vector<1x1x56x36xbf16>
    %41 = vector.shape_cast %40 : vector<1x1x56x36xbf16> to vector<56x36xbf16>
    %c0_74 = arith.constant 0 : index
    %c0_75 = arith.constant 0 : index
    %c8_76 = arith.constant 8 : index
    %c0_77 = arith.constant 0 : index
    %42 = vector.load %arg1[%c0_74, %c0_75, %c8_76, %c0_77] : memref<1x4x72x36xbf16, #tpu.memory_space<vmem>>, vector<1x1x56x36xbf16>
    %43 = vector.shape_cast %42 : vector<1x1x56x36xbf16> to vector<56x36xbf16>
    %c0_78 = arith.constant 0 : index
    %c1_79 = arith.constant 1 : index
    %c8_80 = arith.constant 8 : index
    %c0_81 = arith.constant 0 : index
    %44 = vector.load %arg1[%c0_78, %c1_79, %c8_80, %c0_81] : memref<1x4x72x36xbf16, #tpu.memory_space<vmem>>, vector<1x1x56x36xbf16>
    %45 = vector.shape_cast %44 : vector<1x1x56x36xbf16> to vector<56x36xbf16>
    %c0_82 = arith.constant 0 : index
    %c2_83 = arith.constant 2 : index
    %c8_84 = arith.constant 8 : index
    %c0_85 = arith.constant 0 : index
    %46 = vector.load %arg1[%c0_82, %c2_83, %c8_84, %c0_85] : memref<1x4x72x36xbf16, #tpu.memory_space<vmem>>, vector<1x1x56x36xbf16>
    %47 = vector.shape_cast %46 : vector<1x1x56x36xbf16> to vector<56x36xbf16>
    %c0_86 = arith.constant 0 : index
    %c3_87 = arith.constant 3 : index
    %c8_88 = arith.constant 8 : index
    %c0_89 = arith.constant 0 : index
    %48 = vector.load %arg1[%c0_86, %c3_87, %c8_88, %c0_89] : memref<1x4x72x36xbf16, #tpu.memory_space<vmem>>, vector<1x1x56x36xbf16>
    %49 = vector.shape_cast %48 : vector<1x1x56x36xbf16> to vector<56x36xbf16>
    %c0_90 = arith.constant 0 : index
    %c0_91 = arith.constant 0 : index
    %c16_92 = arith.constant 16 : index
    %c0_93 = arith.constant 0 : index
    %50 = vector.load %arg1[%c0_90, %c0_91, %c16_92, %c0_93] : memref<1x4x72x36xbf16, #tpu.memory_space<vmem>>, vector<1x1x56x36xbf16>
    %51 = vector.shape_cast %50 : vector<1x1x56x36xbf16> to vector<56x36xbf16>
    %c0_94 = arith.constant 0 : index
    %c1_95 = arith.constant 1 : index
    %c16_96 = arith.constant 16 : index
    %c0_97 = arith.constant 0 : index
    %52 = vector.load %arg1[%c0_94, %c1_95, %c16_96, %c0_97] : memref<1x4x72x36xbf16, #tpu.memory_space<vmem>>, vector<1x1x56x36xbf16>
    %53 = vector.shape_cast %52 : vector<1x1x56x36xbf16> to vector<56x36xbf16>
    %c0_98 = arith.constant 0 : index
    %c2_99 = arith.constant 2 : index
    %c16_100 = arith.constant 16 : index
    %c0_101 = arith.constant 0 : index
    %54 = vector.load %arg1[%c0_98, %c2_99, %c16_100, %c0_101] : memref<1x4x72x36xbf16, #tpu.memory_space<vmem>>, vector<1x1x56x36xbf16>
    %55 = vector.shape_cast %54 : vector<1x1x56x36xbf16> to vector<56x36xbf16>
    %56 = tpu.concatenate %39, %41, %43, %45, %47, %49, %51, %53, %55 in 1 : vector<56x36xbf16>, vector<56x36xbf16>, vector<56x36xbf16>, vector<56x36xbf16>, vector<56x36xbf16>, vector<56x36xbf16>, vector<56x36xbf16>, vector<56x36xbf16>, vector<56x36xbf16> -> vector<56x324xbf16>
    %c0_102 = arith.constant 0 : index
    %c3_103 = arith.constant 3 : index
    %c0_104 = arith.constant 0 : index
    %c0_105 = arith.constant 0 : index
    %57 = vector.load %arg1[%c0_102, %c3_103, %c0_104, %c0_105] : memref<1x4x72x36xbf16, #tpu.memory_space<vmem>>, vector<1x1x56x36xbf16>
    %58 = vector.shape_cast %57 : vector<1x1x56x36xbf16> to vector<56x36xbf16>
    %c0_106 = arith.constant 0 : index
    %c0_107 = arith.constant 0 : index
    %c8_108 = arith.constant 8 : index
    %c0_109 = arith.constant 0 : index
    %59 = vector.load %arg1[%c0_106, %c0_107, %c8_108, %c0_109] : memref<1x4x72x36xbf16, #tpu.memory_space<vmem>>, vector<1x1x56x36xbf16>
    %60 = vector.shape_cast %59 : vector<1x1x56x36xbf16> to vector<56x36xbf16>
    %c0_110 = arith.constant 0 : index
    %c1_111 = arith.constant 1 : index
    %c8_112 = arith.constant 8 : index
    %c0_113 = arith.constant 0 : index
    %61 = vector.load %arg1[%c0_110, %c1_111, %c8_112, %c0_113] : memref<1x4x72x36xbf16, #tpu.memory_space<vmem>>, vector<1x1x56x36xbf16>
    %62 = vector.shape_cast %61 : vector<1x1x56x36xbf16> to vector<56x36xbf16>
    %c0_114 = arith.constant 0 : index
    %c2_115 = arith.constant 2 : index
    %c8_116 = arith.constant 8 : index
    %c0_117 = arith.constant 0 : index
    %63 = vector.load %arg1[%c0_114, %c2_115, %c8_116, %c0_117] : memref<1x4x72x36xbf16, #tpu.memory_space<vmem>>, vector<1x1x56x36xbf16>
    %64 = vector.shape_cast %63 : vector<1x1x56x36xbf16> to vector<56x36xbf16>
    %c0_118 = arith.constant 0 : index
    %c3_119 = arith.constant 3 : index
    %c8_120 = arith.constant 8 : index
    %c0_121 = arith.constant 0 : index
    %65 = vector.load %arg1[%c0_118, %c3_119, %c8_120, %c0_121] : memref<1x4x72x36xbf16, #tpu.memory_space<vmem>>, vector<1x1x56x36xbf16>
    %66 = vector.shape_cast %65 : vector<1x1x56x36xbf16> to vector<56x36xbf16>
    %c0_122 = arith.constant 0 : index
    %c0_123 = arith.constant 0 : index
    %c16_124 = arith.constant 16 : index
    %c0_125 = arith.constant 0 : index
    %67 = vector.load %arg1[%c0_122, %c0_123, %c16_124, %c0_125] : memref<1x4x72x36xbf16, #tpu.memory_space<vmem>>, vector<1x1x56x36xbf16>
    %68 = vector.shape_cast %67 : vector<1x1x56x36xbf16> to vector<56x36xbf16>
    %c0_126 = arith.constant 0 : index
    %c1_127 = arith.constant 1 : index
    %c16_128 = arith.constant 16 : index
    %c0_129 = arith.constant 0 : index
    %69 = vector.load %arg1[%c0_126, %c1_127, %c16_128, %c0_129] : memref<1x4x72x36xbf16, #tpu.memory_space<vmem>>, vector<1x1x56x36xbf16>
    %70 = vector.shape_cast %69 : vector<1x1x56x36xbf16> to vector<56x36xbf16>
    %c0_130 = arith.constant 0 : index
    %c2_131 = arith.constant 2 : index
    %c16_132 = arith.constant 16 : index
    %c0_133 = arith.constant 0 : index
    %71 = vector.load %arg1[%c0_130, %c2_131, %c16_132, %c0_133] : memref<1x4x72x36xbf16, #tpu.memory_space<vmem>>, vector<1x1x56x36xbf16>
    %72 = vector.shape_cast %71 : vector<1x1x56x36xbf16> to vector<56x36xbf16>
    %c0_134 = arith.constant 0 : index
    %c3_135 = arith.constant 3 : index
    %c16_136 = arith.constant 16 : index
    %c0_137 = arith.constant 0 : index
    %73 = vector.load %arg1[%c0_134, %c3_135, %c16_136, %c0_137] : memref<1x4x72x36xbf16, #tpu.memory_space<vmem>>, vector<1x1x56x36xbf16>
    %74 = vector.shape_cast %73 : vector<1x1x56x36xbf16> to vector<56x36xbf16>
    %75 = tpu.concatenate %58, %60, %62, %64, %66, %68, %70, %72, %74 in 1 : vector<56x36xbf16>, vector<56x36xbf16>, vector<56x36xbf16>, vector<56x36xbf16>, vector<56x36xbf16>, vector<56x36xbf16>, vector<56x36xbf16>, vector<56x36xbf16>, vector<56x36xbf16> -> vector<56x324xbf16>
    %76 = tpu.concatenate %18, %37, %56, %75 in 0 : vector<56x324xbf16>, vector<56x324xbf16>, vector<56x324xbf16>, vector<56x324xbf16> -> vector<224x324xbf16>
    %c0_138 = arith.constant 0 : index
    %c0_139 = arith.constant 0 : index
    %77 = vector.load %arg2[%c0_138, %c0_139] : memref<324x280xbf16, #tpu.memory_space<vmem>>, vector<324x280xbf16>
    %cst = arith.constant dense<0.000000e+00> : vector<224x280xf32>
    %78 = tpu.matmul %76, %77, %cst {dimension_numbers = #tpu.dot_dimension_numbers<[1], [0], [0], [1], [0, 0, 1, 1], [], []>} : vector<224x324xbf16>, vector<324x280xbf16>, vector<224x280xf32> -> vector<224x280xf32>
    %79 = vector.extract_strided_slice %78 {offsets = [0, 0], sizes = [56, 280], strides = [1, 1]} : vector<224x280xf32> to vector<56x280xf32>
    %80 = vector.extract_strided_slice %78 {offsets = [56, 0], sizes = [56, 280], strides = [1, 1]} : vector<224x280xf32> to vector<56x280xf32>
    %81 = arith.maximumf %79, %80 : vector<56x280xf32>
    %82 = vector.extract_strided_slice %81 {offsets = [0, 0], sizes = [56, 140], strides = [1, 1]} : vector<56x280xf32> to vector<56x140xf32>
    %83 = vector.extract_strided_slice %81 {offsets = [0, 140], sizes = [56, 140], strides = [1, 1]} : vector<56x280xf32> to vector<56x140xf32>
    %84 = arith.maximumf %82, %83 : vector<56x140xf32>
    %c0_140 = arith.constant 0 : index
    %c0_141 = arith.constant 0 : index
    %85 = vector.load %arg3[%c0_140, %c0_141] : memref<1x140xf32, #tpu.memory_space<vmem>>, vector<1x140xf32>
    %86 = vector.broadcast %85 : vector<1x140xf32> to vector<56x140xf32>
    %87 = arith.addf %84, %86 : vector<56x140xf32>
    %cst_142 = arith.constant 0.000000e+00 : f32
    %88 = vector.broadcast %cst_142 : f32 to vector<56x140xf32>
    %89 = arith.maximumf %87, %88 : vector<56x140xf32>
    %90 = arith.truncf %89 : vector<56x140xf32> to vector<56x140xbf16>
    %91 = vector.extract_strided_slice %78 {offsets = [112, 0], sizes = [56, 280], strides = [1, 1]} : vector<224x280xf32> to vector<56x280xf32>
    %92 = vector.extract_strided_slice %78 {offsets = [168, 0], sizes = [56, 280], strides = [1, 1]} : vector<224x280xf32> to vector<56x280xf32>
    %93 = arith.maximumf %91, %92 : vector<56x280xf32>
    %94 = vector.extract_strided_slice %93 {offsets = [0, 0], sizes = [56, 140], strides = [1, 1]} : vector<56x280xf32> to vector<56x140xf32>
    %95 = vector.extract_strided_slice %93 {offsets = [0, 140], sizes = [56, 140], strides = [1, 1]} : vector<56x280xf32> to vector<56x140xf32>
    %96 = arith.maximumf %94, %95 : vector<56x140xf32>
    %c0_143 = arith.constant 0 : index
    %c0_144 = arith.constant 0 : index
    %97 = vector.load %arg3[%c0_143, %c0_144] : memref<1x140xf32, #tpu.memory_space<vmem>>, vector<1x140xf32>
    %98 = vector.broadcast %97 : vector<1x140xf32> to vector<56x140xf32>
    %99 = arith.addf %96, %98 : vector<56x140xf32>
    %cst_145 = arith.constant 0.000000e+00 : f32
    %100 = vector.broadcast %cst_145 : f32 to vector<56x140xf32>
    %101 = arith.maximumf %99, %100 : vector<56x140xf32>
    %102 = arith.truncf %101 : vector<56x140xf32> to vector<56x140xbf16>
    %103 = vector.extract_strided_slice %90 {offsets = [0, 0], sizes = [40, 140], strides = [1, 1]} : vector<56x140xbf16> to vector<40x140xbf16>
    %104 = vector.extract_strided_slice %102 {offsets = [0, 0], sizes = [40, 140], strides = [1, 1]} : vector<56x140xbf16> to vector<40x140xbf16>
    %105 = vector.extract_strided_slice %90 {offsets = [8, 0], sizes = [40, 140], strides = [1, 1]} : vector<56x140xbf16> to vector<40x140xbf16>
    %106 = vector.extract_strided_slice %102 {offsets = [8, 0], sizes = [40, 140], strides = [1, 1]} : vector<56x140xbf16> to vector<40x140xbf16>
    %107 = vector.extract_strided_slice %90 {offsets = [16, 0], sizes = [40, 140], strides = [1, 1]} : vector<56x140xbf16> to vector<40x140xbf16>
    %108 = tpu.concatenate %103, %104, %105, %106, %107 in 1 : vector<40x140xbf16>, vector<40x140xbf16>, vector<40x140xbf16>, vector<40x140xbf16>, vector<40x140xbf16> -> vector<40x700xbf16>
    %109 = vector.extract_strided_slice %102 {offsets = [0, 0], sizes = [40, 140], strides = [1, 1]} : vector<56x140xbf16> to vector<40x140xbf16>
    %110 = vector.extract_strided_slice %90 {offsets = [8, 0], sizes = [40, 140], strides = [1, 1]} : vector<56x140xbf16> to vector<40x140xbf16>
    %111 = vector.extract_strided_slice %102 {offsets = [8, 0], sizes = [40, 140], strides = [1, 1]} : vector<56x140xbf16> to vector<40x140xbf16>
    %112 = vector.extract_strided_slice %90 {offsets = [16, 0], sizes = [40, 140], strides = [1, 1]} : vector<56x140xbf16> to vector<40x140xbf16>
    %113 = vector.extract_strided_slice %102 {offsets = [16, 0], sizes = [40, 140], strides = [1, 1]} : vector<56x140xbf16> to vector<40x140xbf16>
    %114 = tpu.concatenate %109, %110, %111, %112, %113 in 1 : vector<40x140xbf16>, vector<40x140xbf16>, vector<40x140xbf16>, vector<40x140xbf16>, vector<40x140xbf16> -> vector<40x700xbf16>
    %115 = tpu.concatenate %108, %114 in 0 : vector<40x700xbf16>, vector<40x700xbf16> -> vector<80x700xbf16>
    %c0_146 = arith.constant 0 : index
    %c0_147 = arith.constant 0 : index
    %116 = vector.load %arg4[%c0_146, %c0_147] : memref<700x200xbf16, #tpu.memory_space<vmem>>, vector<700x200xbf16>
    %cst_148 = arith.constant dense<0.000000e+00> : vector<80x200xf32>
    %117 = tpu.matmul %115, %116, %cst_148 {dimension_numbers = #tpu.dot_dimension_numbers<[1], [0], [0], [1], [0, 0, 1, 1], [], []>} : vector<80x700xbf16>, vector<700x200xbf16>, vector<80x200xf32> -> vector<80x200xf32>
    %118 = vector.extract_strided_slice %117 {offsets = [0, 0], sizes = [40, 200], strides = [1, 1]} : vector<80x200xf32> to vector<40x200xf32>
    %119 = vector.extract_strided_slice %117 {offsets = [40, 0], sizes = [40, 200], strides = [1, 1]} : vector<80x200xf32> to vector<40x200xf32>
    %120 = arith.maximumf %118, %119 : vector<40x200xf32>
    %121 = vector.extract_strided_slice %120 {offsets = [0, 0], sizes = [40, 100], strides = [1, 1]} : vector<40x200xf32> to vector<40x100xf32>
    %122 = vector.extract_strided_slice %120 {offsets = [0, 100], sizes = [40, 100], strides = [1, 1]} : vector<40x200xf32> to vector<40x100xf32>
    %123 = arith.maximumf %121, %122 : vector<40x100xf32>
    %c0_149 = arith.constant 0 : index
    %c0_150 = arith.constant 0 : index
    %124 = vector.load %arg5[%c0_149, %c0_150] : memref<1x100xf32, #tpu.memory_space<vmem>>, vector<1x100xf32>
    %125 = vector.broadcast %124 : vector<1x100xf32> to vector<40x100xf32>
    %126 = arith.addf %123, %125 : vector<40x100xf32>
    %cst_151 = arith.constant 0.000000e+00 : f32
    %127 = vector.broadcast %cst_151 : f32 to vector<40x100xf32>
    %128 = arith.maximumf %126, %127 : vector<40x100xf32>
    %129 = arith.truncf %128 : vector<40x100xf32> to vector<40x100xbf16>
    %130 = vector.extract_strided_slice %129 {offsets = [0, 0], sizes = [8, 100], strides = [1, 1]} : vector<40x100xbf16> to vector<8x100xbf16>
    %131 = vector.extract_strided_slice %129 {offsets = [8, 0], sizes = [8, 100], strides = [1, 1]} : vector<40x100xbf16> to vector<8x100xbf16>
    %132 = vector.extract_strided_slice %129 {offsets = [16, 0], sizes = [8, 100], strides = [1, 1]} : vector<40x100xbf16> to vector<8x100xbf16>
    %133 = vector.extract_strided_slice %129 {offsets = [24, 0], sizes = [8, 100], strides = [1, 1]} : vector<40x100xbf16> to vector<8x100xbf16>
    %134 = vector.extract_strided_slice %129 {offsets = [32, 0], sizes = [8, 100], strides = [1, 1]} : vector<40x100xbf16> to vector<8x100xbf16>
    %135 = tpu.concatenate %130, %131, %132, %133, %134 in 1 : vector<8x100xbf16>, vector<8x100xbf16>, vector<8x100xbf16>, vector<8x100xbf16>, vector<8x100xbf16> -> vector<8x500xbf16>
    %c0_152 = arith.constant 0 : index
    %c0_153 = arith.constant 0 : index
    %136 = vector.load %arg6[%c0_152, %c0_153] : memref<500x64xbf16, #tpu.memory_space<vmem>>, vector<500x64xbf16>
    %cst_154 = arith.constant dense<0.000000e+00> : vector<8x64xf32>
    %137 = tpu.matmul %135, %136, %cst_154 {dimension_numbers = #tpu.dot_dimension_numbers<[1], [0], [0], [1], [0, 0, 1, 1], [], []>} : vector<8x500xbf16>, vector<500x64xbf16>, vector<8x64xf32> -> vector<8x64xf32>
    %c0_155 = arith.constant 0 : index
    %c0_156 = arith.constant 0 : index
    %138 = vector.load %arg7[%c0_155, %c0_156] : memref<1x64xf32, #tpu.memory_space<vmem>>, vector<1x64xf32>
    %139 = vector.broadcast %138 : vector<1x64xf32> to vector<8x64xf32>
    %140 = arith.addf %137, %139 : vector<8x64xf32>
    %cst_157 = arith.constant 0.000000e+00 : f32
    %141 = vector.broadcast %cst_157 : f32 to vector<8x64xf32>
    %142 = arith.maximumf %140, %141 : vector<8x64xf32>
    %143 = arith.truncf %142 : vector<8x64xf32> to vector<8x64xbf16>
    %c0_158 = arith.constant 0 : index
    %c0_159 = arith.constant 0 : index
    %144 = vector.load %arg8[%c0_158, %c0_159] : memref<64x128xbf16, #tpu.memory_space<vmem>>, vector<64x128xbf16>
    %cst_160 = arith.constant dense<0.000000e+00> : vector<8x128xf32>
    %145 = tpu.matmul %143, %144, %cst_160 {dimension_numbers = #tpu.dot_dimension_numbers<[1], [0], [0], [1], [0, 0, 1, 1], [], []>} : vector<8x64xbf16>, vector<64x128xbf16>, vector<8x128xf32> -> vector<8x128xf32>
    %c0_161 = arith.constant 0 : index
    %c0_162 = arith.constant 0 : index
    %146 = vector.load %arg9[%c0_161, %c0_162] : memref<1x128xf32, #tpu.memory_space<vmem>>, vector<1x128xf32>
    %147 = vector.broadcast %146 : vector<1x128xf32> to vector<8x128xf32>
    %148 = arith.addf %145, %147 : vector<8x128xf32>
    %c0_163 = arith.constant 0 : index
    %c0_164 = arith.constant 0 : index
    %149 = vector.load %arg10[%c0_163, %c0_164] : memref<8x128xf32, #tpu.memory_space<vmem>>, vector<8x128xf32>
    tpu.vector_store %arg10[%c0_163, %c0_164], %148 {strides = array<i32>} : memref<8x128xf32, #tpu.memory_space<vmem>>, vector<8x128xf32>,
    return
  }
  func.func @transform_0(%arg0: i32) -> (i32, i32, i32, i32) {
    %c0_i32 = arith.constant 0 : i32
    %c0_i32_0 = arith.constant 0 : i32
    %c0_i32_1 = arith.constant 0 : i32
    %c0_i32_2 = arith.constant 0 : i32
    return %arg0, %c0_i32, %c0_i32_0, %c0_i32_1 : i32, i32, i32, i32
  }
  func.func @transform_1(%arg0: i32) -> (i32, i32) {
    %c0_i32 = arith.constant 0 : i32
    %c0_i32_0 = arith.constant 0 : i32
    %c0_i32_1 = arith.constant 0 : i32
    return %c0_i32, %c0_i32_0 : i32, i32
  }
  func.func @transform_2(%arg0: i32) -> (i32, i32) {
    %c0_i32 = arith.constant 0 : i32
    %c0_i32_0 = arith.constant 0 : i32
    %c0_i32_1 = arith.constant 0 : i32
    return %c0_i32, %c0_i32_0 : i32, i32
  }
  func.func @transform_3(%arg0: i32) -> (i32, i32) {
    %c0_i32 = arith.constant 0 : i32
    %c0_i32_0 = arith.constant 0 : i32
    %c0_i32_1 = arith.constant 0 : i32
    return %c0_i32, %c0_i32_0 : i32, i32
  }
  func.func @transform_4(%arg0: i32) -> (i32, i32) {
    %c0_i32 = arith.constant 0 : i32
    %c0_i32_0 = arith.constant 0 : i32
    %c0_i32_1 = arith.constant 0 : i32
    return %c0_i32, %c0_i32_0 : i32, i32
  }
  func.func @transform_5(%arg0: i32) -> (i32, i32) {
    %c0_i32 = arith.constant 0 : i32
    %c0_i32_0 = arith.constant 0 : i32
    %c0_i32_1 = arith.constant 0 : i32
    return %c0_i32, %c0_i32_0 : i32, i32
  }
  func.func @transform_6(%arg0: i32) -> (i32, i32) {
    %c0_i32 = arith.constant 0 : i32
    %c0_i32_0 = arith.constant 0 : i32
    %c0_i32_1 = arith.constant 0 : i32
    return %c0_i32, %c0_i32_0 : i32, i32
  }
  func.func @transform_7(%arg0: i32) -> (i32, i32) {
    %c0_i32 = arith.constant 0 : i32
    %c0_i32_0 = arith.constant 0 : i32
    %c0_i32_1 = arith.constant 0 : i32
    return %c0_i32, %c0_i32_0 : i32, i32
  }
  func.func @transform_8(%arg0: i32) -> (i32, i32) {
    %c0_i32 = arith.constant 0 : i32
    %c0_i32_0 = arith.constant 0 : i32
    %c0_i32_1 = arith.constant 0 : i32
    return %c0_i32, %c0_i32_0 : i32, i32
  }
  func.func @transform_9(%arg0: i32) -> (i32, i32) {
    %c0_i32 = arith.constant 0 : i32
    %c0_i32_0 = arith.constant 0 : i32
    return %arg0, %c0_i32 : i32, i32
  }
}

</mosaic_0001>

<llo_original>
// kernel: regression_model_forward.1
$region0: #{regression_model_forward.1}
  #allocation0 [shape = 'u32[]', space=smem, size = 0x4, offset = 0x4, fixed_abs, tag = 'smem constant byte address 0x4 - core index']
  #allocation1 [shape = 'u32[72,128]{1,0:T(1,128)}', space=vmem, size = 0x9000, scoped, tag = 'internal scratch']
  %s0 = inlined_call_operand.vmem [shape: bf16[2,4,72,36], index: 0, kind: input, shape index: {}]
  %s1 = inlined_call_operand.vmem [shape: bf16[324,280], index: 1, kind: input, shape index: {}]
  %s2 = inlined_call_operand.vmem [shape: f32[1,140], index: 2, kind: input, shape index: {}]
  %s3 = inlined_call_operand.vmem [shape: bf16[700,200], index: 3, kind: input, shape index: {}]
  %s4 = inlined_call_operand.vmem [shape: f32[1,100], index: 4, kind: input, shape index: {}]
  %s5 = inlined_call_operand.vmem [shape: bf16[500,64], index: 5, kind: input, shape index: {}]
  %s6 = inlined_call_operand.vmem [shape: f32[1,64], index: 6, kind: input, shape index: {}]
  %s7 = inlined_call_operand.vmem [shape: bf16[64,128], index: 7, kind: input, shape index: {}]
  %s8 = inlined_call_operand.vmem [shape: f32[1,128], index: 8, kind: input, shape index: {}]
  %s9 = inlined_call_operand.vmem [shape: f32[16,128], index: 9, kind: output, shape index: {}]
  %s10 = sld [smem:[#allocation0]]
  $region69: #{regression_model_forward.1} parent=0
    _
  %s12 = ssub.s32 1, %s10
  %s13 = scalar_select 0, %s12, %s10
  loop: start=0, step=1, limit=4
  $region2: #{regression_model_forward.1} parent=0 // loop_pre_header
    _
  $region3: #{regression_model_forward.1} parent=0 // loop_header
    %s15 = sphi 0, %s19
    %p16 = scmp.ge.s32.totalorder %s15, 4
    %s25 = sphi 0, %s27
    %s28 = sphi 0, %s25
    %s29 = sphi 0, %s28
    %s45 = sphi 0, %s29
    %s49 = sphi 0, %s49
    %s51 = sphi 0, %s49
    %s52 = sphi 0, %s51
    %s66 = sphi 0, %s52
    %s70 = sphi 0, %s70
    %s72 = sphi 0, %s70
    %s73 = sphi 0, %s72
    %s87 = sphi 0, %s73
    %s91 = sphi 0, %s91
    %s93 = sphi 0, %s91
    %s94 = sphi 0, %s93
    %s108 = sphi 0, %s94
    %s112 = sphi 0, %s112
    %s114 = sphi 0, %s112
    %s115 = sphi 0, %s114
    %s129 = sphi 0, %s115
    %s133 = sphi 0, %s133
    %s135 = sphi 0, %s133
    %s136 = sphi 0, %s135
    %s150 = sphi 0, %s136
    %s154 = sphi 0, %s154
    %s156 = sphi 0, %s154
    %s157 = sphi 0, %s156
    %s171 = sphi 0, %s157
    %s175 = sphi 0, %s175
    %s177 = sphi 0, %s175
    %s178 = sphi 0, %s177
    %s192 = sphi 0, %s178
    %s196 = sphi 0, %s196
    %s198 = sphi 0, %s196
    %s199 = sphi 0, %s198
    %s213 = sphi 0, %s199
    %s219 = sphi 0, %s221
    %s222 = sphi 0, %s219
    %s223 = sphi 0, %s222
    %s239 = sphi 0, %s223
  $region4: #{regression_model_forward.1} parent=0 // loop_header_branch
    %18 = sbr.rel (%p16) target = $region8
  $region5: #{regression_model_forward.1} parent=0 // loop_body
    %s20 = ssub.s32 %s15, 1
    %s21 = ssub.s32 %s15, 2
    %s22 = sadd.s32 %s15, 1
    %s23 = ssub.s32 %s15, %s22
    %p24 = scmp.eq.s32.totalorder %s23, 0
    %s26 = sadd.s32 %s25, 1
    %s27 = scalar_select %p24, %s25, %s26
    %p30 = pneg %p24
    %p31 = scmp.eq.s32.totalorder %s15, 1
    %p32 = por %p30, %p31
    %p33 = scmp.ne.s32.totalorder %s25, %s28
    %p34 = scmp.eq.s32.totalorder %s15, 0
    %p35 = por %p33, %p34
    %p36 = scmp.ne.s32.totalorder %s25, %s28
    %p37 = scmp.eq.s32.totalorder %s20, 1
    %p38 = por %p36, %p37
    %p39 = scmp.ne.s32.totalorder %s28, %s29
    %p40 = scmp.eq.s32.totalorder %s20, 0
    %p41 = por %p39, %p40
    %p42 = scmp.ne.s32.totalorder %s28, %s29
    %p43 = scmp.eq.s32.totalorder %s21, 1
    %p44 = por %p42, %p43
    %p46 = scmp.ne.s32.totalorder %s29, %s45
    %p47 = scmp.eq.s32.totalorder %s21, 0
    %p48 = por %p46, %p47
    %s50 = sadd.s32 %s49, 1
    %p53 = scmp.eq.s32.totalorder %s15, 1
    %p54 = scmp.ne.s32.totalorder %s49, %s51
    %p55 = scmp.eq.s32.totalorder %s15, 0
    %p56 = por %p54, %p55
    %p57 = scmp.ne.s32.totalorder %s49, %s51
    %p58 = scmp.eq.s32.totalorder %s20, 1
    %p59 = por %p57, %p58
    %p60 = scmp.ne.s32.totalorder %s51, %s52
    %p61 = scmp.eq.s32.totalorder %s20, 0
    %p62 = por %p60, %p61
    %p63 = scmp.ne.s32.totalorder %s51, %s52
    %p64 = scmp.eq.s32.totalorder %s21, 1
    %p65 = por %p63, %p64
    %p67 = scmp.ne.s32.totalorder %s52, %s66
    %p68 = scmp.eq.s32.totalorder %s21, 0
    %p69 = por %p67, %p68
    %s71 = sadd.s32 %s70, 1
    %p74 = scmp.eq.s32.totalorder %s15, 1
    %p75 = scmp.ne.s32.totalorder %s70, %s72
    %p76 = scmp.eq.s32.totalorder %s15, 0
    %p77 = por %p75, %p76
    %p78 = scmp.ne.s32.totalorder %s70, %s72
    %p79 = scmp.eq.s32.totalorder %s20, 1
    %p80 = por %p78, %p79
    %p81 = scmp.ne.s32.totalorder %s72, %s73
    %p82 = scmp.eq.s32.totalorder %s20, 0
    %p83 = por %p81, %p82
    %p84 = scmp.ne.s32.totalorder %s72, %s73
    %p85 = scmp.eq.s32.totalorder %s21, 1
    %p86 = por %p84, %p85
    %p88 = scmp.ne.s32.totalorder %s73, %s87
    %p89 = scmp.eq.s32.totalorder %s21, 0
    %p90 = por %p88, %p89
    %s92 = sadd.s32 %s91, 1
    %p95 = scmp.eq.s32.totalorder %s15, 1
    %p96 = scmp.ne.s32.totalorder %s91, %s93
    %p97 = scmp.eq.s32.totalorder %s15, 0
    %p98 = por %p96, %p97
    %p99 = scmp.ne.s32.totalorder %s91, %s93
    %p100 = scmp.eq.s32.totalorder %s20, 1
    %p101 = por %p99, %p100
    %p102 = scmp.ne.s32.totalorder %s93, %s94
    %p103 = scmp.eq.s32.totalorder %s20, 0
    %p104 = por %p102, %p103
    %p105 = scmp.ne.s32.totalorder %s93, %s94
    %p106 = scmp.eq.s32.totalorder %s21, 1
    %p107 = por %p105, %p106
    %p109 = scmp.ne.s32.totalorder %s94, %s108
    %p110 = scmp.eq.s32.totalorder %s21, 0
    %p111 = por %p109, %p110
    %s113 = sadd.s32 %s112, 1
    %p116 = scmp.eq.s32.totalorder %s15, 1
    %p117 = scmp.ne.s32.totalorder %s112, %s114
    %p118 = scmp.eq.s32.totalorder %s15, 0
    %p119 = por %p117, %p118
    %p120 = scmp.ne.s32.totalorder %s112, %s114
    %p121 = scmp.eq.s32.totalorder %s20, 1
    %p122 = por %p120, %p121
    %p123 = scmp.ne.s32.totalorder %s114, %s115
    %p124 = scmp.eq.s32.totalorder %s20, 0
    %p125 = por %p123, %p124
    %p126 = scmp.ne.s32.totalorder %s114, %s115
    %p127 = scmp.eq.s32.totalorder %s21, 1
    %p128 = por %p126, %p127
    %p130 = scmp.ne.s32.totalorder %s115, %s129
    %p131 = scmp.eq.s32.totalorder %s21, 0
    %p132 = por %p130, %p131
    %s134 = sadd.s32 %s133, 1
    %p137 = scmp.eq.s32.totalorder %s15, 1
    %p138 = scmp.ne.s32.totalorder %s133, %s135
    %p139 = scmp.eq.s32.totalorder %s15, 0
    %p140 = por %p138, %p139
    %p141 = scmp.ne.s32.totalorder %s133, %s135
    %p142 = scmp.eq.s32.totalorder %s20, 1
    %p143 = por %p141, %p142
    %p144 = scmp.ne.s32.totalorder %s135, %s136
    %p145 = scmp.eq.s32.totalorder %s20, 0
    %p146 = por %p144, %p145
    %p147 = scmp.ne.s32.totalorder %s135, %s136
    %p148 = scmp.eq.s32.totalorder %s21, 1
    %p149 = por %p147, %p148
    %p151 = scmp.ne.s32.totalorder %s136, %s150
    %p152 = scmp.eq.s32.totalorder %s21, 0
    %p153 = por %p151, %p152
    %s155 = sadd.s32 %s154, 1
    %p158 = scmp.eq.s32.totalorder %s15, 1
    %p159 = scmp.ne.s32.totalorder %s154, %s156
    %p160 = scmp.eq.s32.totalorder %s15, 0
    %p161 = por %p159, %p160
    %p162 = scmp.ne.s32.totalorder %s154, %s156
    %p163 = scmp.eq.s32.totalorder %s20, 1
    %p164 = por %p162, %p163
    %p165 = scmp.ne.s32.totalorder %s156, %s157
    %p166 = scmp.eq.s32.totalorder %s20, 0
    %p167 = por %p165, %p166
    %p168 = scmp.ne.s32.totalorder %s156, %s157
    %p169 = scmp.eq.s32.totalorder %s21, 1
    %p170 = por %p168, %p169
    %p172 = scmp.ne.s32.totalorder %s157, %s171
    %p173 = scmp.eq.s32.totalorder %s21, 0
    %p174 = por %p172, %p173
    %s176 = sadd.s32 %s175, 1
    %p179 = scmp.eq.s32.totalorder %s15, 1
    %p180 = scmp.ne.s32.totalorder %s175, %s177
    %p181 = scmp.eq.s32.totalorder %s15, 0
    %p182 = por %p180, %p181
    %p183 = scmp.ne.s32.totalorder %s175, %s177
    %p184 = scmp.eq.s32.totalorder %s20, 1
    %p185 = por %p183, %p184
    %p186 = scmp.ne.s32.totalorder %s177, %s178
    %p187 = scmp.eq.s32.totalorder %s20, 0
    %p188 = por %p186, %p187
    %p189 = scmp.ne.s32.totalorder %s177, %s178
    %p190 = scmp.eq.s32.totalorder %s21, 1
    %p191 = por %p189, %p190
    %p193 = scmp.ne.s32.totalorder %s178, %s192
    %p194 = scmp.eq.s32.totalorder %s21, 0
    %p195 = por %p193, %p194
    %s197 = sadd.s32 %s196, 1
    %p200 = scmp.eq.s32.totalorder %s15, 1
    %p201 = scmp.ne.s32.totalorder %s196, %s198
    %p202 = scmp.eq.s32.totalorder %s15, 0
    %p203 = por %p201, %p202
    %p204 = scmp.ne.s32.totalorder %s196, %s198
    %p205 = scmp.eq.s32.totalorder %s20, 1
    %p206 = por %p204, %p205
    %p207 = scmp.ne.s32.totalorder %s198, %s199
    %p208 = scmp.eq.s32.totalorder %s20, 0
    %p209 = por %p207, %p208
    %p210 = scmp.ne.s32.totalorder %s198, %s199
    %p211 = scmp.eq.s32.totalorder %s21, 1
    %p212 = por %p210, %p211
    %p214 = scmp.ne.s32.totalorder %s199, %s213
    %p215 = scmp.eq.s32.totalorder %s21, 0
    %p216 = por %p214, %p215
    %s217 = ssub.s32 %s15, %s22
    %p218 = scmp.eq.s32.totalorder %s217, 0
    %s220 = sadd.s32 %s219, 1
    %s221 = scalar_select %p218, %s219, %s220
    %p224 = pneg %p218
    %p225 = scmp.eq.s32.totalorder %s15, 1
    %p226 = por %p224, %p225
    %p227 = scmp.ne.s32.totalorder %s219, %s222
    %p228 = scmp.eq.s32.totalorder %s15, 0
    %p229 = por %p227, %p228
    %p230 = scmp.ne.s32.totalorder %s219, %s222
    %p231 = scmp.eq.s32.totalorder %s20, 1
    %p232 = por %p230, %p231
    %p233 = scmp.ne.s32.totalorder %s222, %s223
    %p234 = scmp.eq.s32.totalorder %s20, 0
    %p235 = por %p233, %p234
    %p236 = scmp.ne.s32.totalorder %s222, %s223
    %p237 = scmp.eq.s32.totalorder %s21, 1
    %p238 = por %p236, %p237
    %p240 = scmp.ne.s32.totalorder %s223, %s239
    %p241 = scmp.eq.s32.totalorder %s21, 0
    %p242 = por %p240, %p241
    %p243 = scmp.le.s32.totalorder 1, %s15
    %p244 = scmp.lt.s32.totalorder %s15, 3
    %p245 = pnand %p243, %p244
    %p246 = pneg %p245
    // Predicated region
    $region9: #{regression_model_forward.1} parent=5 // pred_check
      _
    $region10: #{regression_model_forward.1} parent=5 // pred_check_branch
      %248 = sbr.rel (%p245) target = $region12
    $region11: #{regression_model_forward.1} parent=5 // pred_region
      %s249 = ssub.s32 %s15, 1
      // Predicated region
      $region13: #{regression_model_forward.1} parent=11 // pred_check
        %p250 = pneg %p62
      $region14: #{regression_model_forward.1} parent=11 // pred_check_branch
        %252 = sbr.rel (%p250) target = $region16
      $region15: #{regression_model_forward.1} parent=11 // pred_region
        _
      $region16: #{regression_model_forward.1} parent=11 // pred_fallthru
        _
      // Predicated region
      $region17: #{regression_model_forward.1} parent=11 // pred_check
        %p253 = pneg %p83
      $region18: #{regression_model_forward.1} parent=11 // pred_check_branch
        %255 = sbr.rel (%p253) target = $region20
      $region19: #{regression_model_forward.1} parent=11 // pred_region
        _
      $region20: #{regression_model_forward.1} parent=11 // pred_fallthru
        _
      // Predicated region
      $region21: #{regression_model_forward.1} parent=11 // pred_check
        %p256 = pneg %p104
      $region22: #{regression_model_forward.1} parent=11 // pred_check_branch
        %258 = sbr.rel (%p256) target = $region24
      $region23: #{regression_model_forward.1} parent=11 // pred_region
        _
      $region24: #{regression_model_forward.1} parent=11 // pred_fallthru
        _
      // Predicated region
      $region25: #{regression_model_forward.1} parent=11 // pred_check
        %p259 = pneg %p125
      $region26: #{regression_model_forward.1} parent=11 // pred_check_branch
        %261 = sbr.rel (%p259) target = $region28
      $region27: #{regression_model_forward.1} parent=11 // pred_region
        _
      $region28: #{regression_model_forward.1} parent=11 // pred_fallthru
        _
      // Predicated region
      $region29: #{regression_model_forward.1} parent=11 // pred_check
        %p262 = pneg %p146
      $region30: #{regression_model_forward.1} parent=11 // pred_check_branch
        %264 = sbr.rel (%p262) target = $region32
      $region31: #{regression_model_forward.1} parent=11 // pred_region
        _
      $region32: #{regression_model_forward.1} parent=11 // pred_fallthru
        _
      // Predicated region
      $region33: #{regression_model_forward.1} parent=11 // pred_check
        %p265 = pneg %p167
      $region34: #{regression_model_forward.1} parent=11 // pred_check_branch
        %267 = sbr.rel (%p265) target = $region36
      $region35: #{regression_model_forward.1} parent=11 // pred_region
        _
      $region36: #{regression_model_forward.1} parent=11 // pred_fallthru
        _
      // Predicated region
      $region37: #{regression_model_forward.1} parent=11 // pred_check
        %p268 = pneg %p188
      $region38: #{regression_model_forward.1} parent=11 // pred_check_branch
        %270 = sbr.rel (%p268) target = $region40
      $region39: #{regression_model_forward.1} parent=11 // pred_region
        _
      $region40: #{regression_model_forward.1} parent=11 // pred_fallthru
        _
      // Predicated region
      $region41: #{regression_model_forward.1} parent=11 // pred_check
        %p271 = pneg %p209
      $region42: #{regression_model_forward.1} parent=11 // pred_check_branch
        %273 = sbr.rel (%p271) target = $region44
      $region43: #{regression_model_forward.1} parent=11 // pred_region
        _
      $region44: #{regression_model_forward.1} parent=11 // pred_fallthru
        _
    $region12: #{regression_model_forward.1} parent=5 // pred_fallthru
      _
    %p274 = scmp.lt.s32.totalorder %s15, 2
    // Predicated region
    $region45: #{regression_model_forward.1} parent=5 // pred_check
      %p275 = pneg %p274
    $region46: #{regression_model_forward.1} parent=5 // pred_check_branch
      %277 = sbr.rel (%p275) target = $region48
    $region47: #{regression_model_forward.1} parent=5 // pred_region
      // Predicated region
      $region49: #{regression_model_forward.1} parent=47 // pred_check
        %p278 = pneg %p35
      $region50: #{regression_model_forward.1} parent=47 // pred_check_branch
        %280 = sbr.rel (%p278) target = $region52
      $region51: #{regression_model_forward.1} parent=47 // pred_region
        %p281 = scmp.lt.s32.totalorder %s15, 1
        %s282 = scalar_select %p281, %s15, 1
        %s283 = smul.addr %s282, 36
        %s284 = smul.addr %s283, 4
        %s285 = scalar_lea.vmem %s0, %s284
      $region52: #{regression_model_forward.1} parent=47 // pred_fallthru
        _
    $region48: #{regression_model_forward.1} parent=5 // pred_fallthru
      _
    %p286 = scmp.le.s32.totalorder 1, %s15
    %p287 = scmp.lt.s32.totalorder %s15, 3
    %p288 = pnand %p286, %p287
    %p289 = pneg %p288
    // Predicated region
    $region53: #{regression_model_forward.1} parent=5 // pred_check
      _
    $region54: #{regression_model_forward.1} parent=5 // pred_check_branch
      %291 = sbr.rel (%p288) target = $region56
    $region55: #{regression_model_forward.1} parent=5 // pred_region
      %s292 = ssub.s32 %s15, 1
      %p293 = scmp.lt.s32.totalorder %s20, 1
      %s294 = scalar_select %p293, %s20, 1
      %s295 = smul.addr %s294, 36
      %s296 = smul.addr %s295, 4
      %s297 = scalar_lea.vmem %s0, %s296
      %p298 = pneg %p41
      %p299 = pneg %p38
      %p300 = pneg %p62
      %p301 = pneg %p59
      %p302 = pneg %p83
      %p303 = pneg %p80
      %p304 = pneg %p104
      %p305 = pneg %p101
      %p306 = pneg %p125
      %p307 = pneg %p122
      %p308 = pneg %p146
      %p309 = pneg %p143
      %p310 = pneg %p167
      %p311 = pneg %p164
      %p312 = pneg %p188
      %p313 = pneg %p185
      %p314 = pneg %p209
      %p315 = pneg %p206
      %p316 = pneg %p235
      %p317 = pneg %p232
      %p318 = scmp.lt.s32.totalorder %s20, 1
      %s319 = scalar_select %p318, %s20, 1
      %s320 = smul.addr %s319, 8
      %s321 = scalar_lea.vmem %s9, %s320
      %p322 = scmp.lt.s32.totalorder %s20, 1
      %s323 = scalar_select %p322, %s20, 1
      %s324 = smul.addr %s323, 36
      %s325 = smul.addr %s324, 4
      %s326 = scalar_lea.vmem %s0, %s325
      %p327 = scmp.lt.s32.totalorder %s20, 1
      %s328 = scalar_select %p327, %s20, 1
      %s329 = smul.addr %s328, 8
      %s330 = scalar_lea.vmem %s9, %s329
      %v332 = vld [vmem:[%s326] sm:$0xf]
      %v333 = vld [vmem:[%s326 + $0x4] sm:$0xf]
      %v334 = vld [vmem:[%s326 + $0x8] sm:$0xf]
      %v335 = vld [vmem:[%s326 + $0xc] sm:$0xf]
      %v336 = vld [vmem:[%s326 + $0x10] sm:$0xf]
      %v337 = vld [vmem:[%s326 + $0x14] sm:$0xf]
      %v338 = vld [vmem:[%s326 + $0x18] sm:$0xf]
      %s339 = scalar_lea.vmem %s326, 36
      %v340 = vld [vmem:[%s339] sm:$0xf]
      %v341 = vld [vmem:[%s339 + $0x4] sm:$0xf]
      %v342 = vld [vmem:[%s339 + $0x8] sm:$0xf]
      %v343 = vld [vmem:[%s339 + $0xc] sm:$0xf]
      %v344 = vld [vmem:[%s339 + $0x10] sm:$0xf]
      %v345 = vld [vmem:[%s339 + $0x14] sm:$0xf]
      %v346 = vld [vmem:[%s339 + $0x18] sm:$0xf]
      %s347 = scalar_lea.vmem %s326, 72
      %v348 = vld [vmem:[%s347] sm:$0xf]
      %v349 = vld [vmem:[%s347 + $0x4] sm:$0xf]
      %v350 = vld [vmem:[%s347 + $0x8] sm:$0xf]
      %v351 = vld [vmem:[%s347 + $0xc] sm:$0xf]
      %v352 = vld [vmem:[%s347 + $0x10] sm:$0xf]
      %v353 = vld [vmem:[%s347 + $0x14] sm:$0xf]
      %v354 = vld [vmem:[%s347 + $0x18] sm:$0xf]
      %s355 = scalar_lea.vmem %s326, 108
      %v356 = vld [vmem:[%s355] sm:$0xf]
      %v357 = vld [vmem:[%s355 + $0x4] sm:$0xf]
      %v358 = vld [vmem:[%s355 + $0x8] sm:$0xf]
      %v359 = vld [vmem:[%s355 + $0xc] sm:$0xf]
      %v360 = vld [vmem:[%s355 + $0x10] sm:$0xf]
      %v361 = vld [vmem:[%s355 + $0x14] sm:$0xf]
      %v362 = vld [vmem:[%s355 + $0x18] sm:$0xf]
      %v363 = vld [vmem:[%s326 + $0x1c] sm:$0xf]
      %v364 = vld [vmem:[%s339 + $0x1c] sm:$0xf]
      %v365 = vld [vmem:[%s347 + $0x1c] sm:$0xf]
      %v366 = vld [vmem:[%s355 + $0x1c] sm:$0xf]
      %v367 = vld [vmem:[%s326 + $0x20] sm:$0xf]
      %v375 = vunpack.c.l.b16 %v332
      %v376 = vunpack.c.l.b16 %v333
      %v377 = vunpack.c.l.b16 %v334
      %v378 = vunpack.c.l.b16 %v335
      %v379 = vunpack.c.l.b16 %v336
      %v380 = vunpack.c.l.b16 %v337
      %v381 = vunpack.c.l.b16 %v338
      %v382 = vpack.c.b16 %v376, %v375
      %v383 = vpack.c.b16 %v378, %v377
      %v384 = vpack.c.b16 %v380, %v379
      %v385 = vpack.c.b16 %v381, %v381
      %v393 = vunpack.c.l.b16 %v340
      %v394 = vunpack.c.l.b16 %v341
      %v395 = vunpack.c.l.b16 %v342
      %v396 = vunpack.c.l.b16 %v343
      %v397 = vunpack.c.l.b16 %v344
      %v398 = vunpack.c.l.b16 %v345
      %v399 = vunpack.c.l.b16 %v346
      %v400 = vpack.c.b16 %v394, %v393
      %v401 = vpack.c.b16 %v396, %v395
      %v402 = vpack.c.b16 %v398, %v397
      %v403 = vpack.c.b16 %v399, %v399
      %404 = vrot.lane.b32.xlu0 %v400, 36
      %v405 = vpop.permute.xlu0 %404
      %406 = vrot.lane.b32.xlu0 %v401, 36
      %v407 = vpop.permute.xlu0 %406
      %408 = vrot.lane.b32.xlu0 %v402, 36
      %v409 = vpop.permute.xlu0 %408
      %410 = vrot.lane.b32.xlu0 %v403, 36
      %v411 = vpop.permute.xlu0 %410
      %v419 = vunpack.c.l.b16 %v348
      %v420 = vunpack.c.l.b16 %v349
      %v421 = vunpack.c.l.b16 %v350
      %v422 = vunpack.c.l.b16 %v351
      %v423 = vunpack.c.l.b16 %v352
      %v424 = vunpack.c.l.b16 %v353
      %v425 = vunpack.c.l.b16 %v354
      %v426 = vpack.c.b16 %v420, %v419
      %v427 = vpack.c.b16 %v422, %v421
      %v428 = vpack.c.b16 %v424, %v423
      %v429 = vpack.c.b16 %v425, %v425
      %430 = vrot.lane.b32.xlu0 %v426, 72
      %v431 = vpop.permute.xlu0 %430
      %432 = vrot.lane.b32.xlu0 %v427, 72
      %v433 = vpop.permute.xlu0 %432
      %434 = vrot.lane.b32.xlu0 %v428, 72
      %v435 = vpop.permute.xlu0 %434
      %436 = vrot.lane.b32.xlu0 %v429, 72
      %v437 = vpop.permute.xlu0 %436
      %v445 = vunpack.c.l.b16 %v356
      %v446 = vunpack.c.l.b16 %v357
      %v447 = vunpack.c.l.b16 %v358
      %v448 = vunpack.c.l.b16 %v359
      %v449 = vunpack.c.l.b16 %v360
      %v450 = vunpack.c.l.b16 %v361
      %v451 = vunpack.c.l.b16 %v362
      %v452 = vpack.c.b16 %v446, %v445
      %v453 = vpack.c.b16 %v448, %v447
      %v454 = vpack.c.b16 %v450, %v449
      %v455 = vpack.c.b16 %v451, %v451
      %456 = vrot.lane.b32.xlu0 %v452, 108
      %v457 = vpop.permute.xlu0 %456
      %458 = vrot.lane.b32.xlu0 %v453, 108
      %v459 = vpop.permute.xlu0 %458
      %460 = vrot.lane.b32.xlu0 %v454, 108
      %v461 = vpop.permute.xlu0 %460
      %462 = vrot.lane.b32.xlu0 %v455, 108
      %v463 = vpop.permute.xlu0 %462
      %v465 = vunpack.c.l.b16 %v363
      %v466 = vpack.c.b16 %v377, %v376
      %v467 = vpack.c.b16 %v379, %v378
      %v468 = vpack.c.b16 %v381, %v380
      %v469 = vpack.c.b16 %v465, %v465
      %470 = vrot.lane.b32.xlu0 %v466, 16
      %v471 = vpop.permute.xlu0 %470
      %472 = vrot.lane.b32.xlu0 %v467, 16
      %v473 = vpop.permute.xlu0 %472
      %474 = vrot.lane.b32.xlu0 %v468, 16
      %v475 = vpop.permute.xlu0 %474
      %476 = vrot.lane.b32.xlu0 %v469, 16
      %v477 = vpop.permute.xlu0 %476
      %v479 = vunpack.c.l.b16 %v364
      %v480 = vpack.c.b16 %v395, %v394
      %v481 = vpack.c.b16 %v397, %v396
      %v482 = vpack.c.b16 %v399, %v398
      %v483 = vpack.c.b16 %v479, %v479
      %484 = vrot.lane.b32.xlu0 %v480, 52
      %v485 = vpop.permute.xlu0 %484
      %486 = vrot.lane.b32.xlu0 %v481, 52
      %v487 = vpop.permute.xlu0 %486
      %488 = vrot.lane.b32.xlu0 %v482, 52
      %v489 = vpop.permute.xlu0 %488
      %490 = vrot.lane.b32.xlu0 %v483, 52
      %v491 = vpop.permute.xlu0 %490
      %v493 = vunpack.c.l.b16 %v365
      %v494 = vpack.c.b16 %v421, %v420
      %v495 = vpack.c.b16 %v423, %v422
      %v496 = vpack.c.b16 %v425, %v424
      %v497 = vpack.c.b16 %v493, %v493
      %498 = vrot.lane.b32.xlu0 %v494, 88
      %v499 = vpop.permute.xlu0 %498
      %500 = vrot.lane.b32.xlu0 %v495, 88
      %v501 = vpop.permute.xlu0 %500
      %502 = vrot.lane.b32.xlu0 %v496, 88
      %v503 = vpop.permute.xlu0 %502
      %504 = vrot.lane.b32.xlu0 %v497, 88
      %v505 = vpop.permute.xlu0 %504
      %v507 = vunpack.c.l.b16 %v366
      %v508 = vpack.c.b16 %v447, %v446
      %v509 = vpack.c.b16 %v449, %v448
      %v510 = vpack.c.b16 %v451, %v450
      %v511 = vpack.c.b16 %v507, %v507
      %512 = vrot.lane.b32.xlu0 %v508, 124
      %v513 = vpop.permute.xlu0 %512
      %514 = vrot.lane.b32.xlu0 %v509, 124
      %v515 = vpop.permute.xlu0 %514
      %516 = vrot.lane.b32.xlu0 %v510, 124
      %v517 = vpop.permute.xlu0 %516
      %518 = vrot.lane.b32.xlu0 %v511, 124
      %v519 = vpop.permute.xlu0 %518
      %v521 = vunpack.c.l.b16 %v367
      %v522 = vpack.c.b16 %v465, %v381
      %v523 = vpack.c.b16 %v521, %v521
      %524 = vrot.lane.b32.xlu0 %v383, 32
      %v525 = vpop.permute.xlu0 %524
      %526 = vrot.lane.b32.xlu0 %v384, 32
      %v527 = vpop.permute.xlu0 %526
      %528 = vrot.lane.b32.xlu0 %v522, 32
      %v529 = vpop.permute.xlu0 %528
      %530 = vrot.lane.b32.xlu0 %v523, 32
      %v531 = vpop.permute.xlu0 %530
      %vm532 = vcmask 293888
      %v535 = vsel %vm532, %v382, %v405
      %v538 = vsel %vm532, %v383, %v407
      %v541 = vsel %vm532, %v384, %v409
      %v544 = vsel %vm532, %v385, %v411
      %vm545 = vcmask 588800
      %v547 = vsel %vm545, %v535, %v431
      %v549 = vsel %vm545, %v538, %v433
      %v551 = vsel %vm545, %v541, %v435
      %v553 = vsel %vm545, %v544, %v437
      %vm554 = vcmask 883712
      %v556 = vsel %vm554, %v547, %v457
      %v559 = vsel %vm554, %v549, %v459
      %v562 = vsel %vm554, %v551, %v461
      %v565 = vsel %vm554, %v553, %v463
      %vm566 = vcmask 130048
      %v568 = vsel %vm566, %v457, %v471
      %v570 = vsel %vm566, %v459, %v473
      %v572 = vsel %vm566, %v461, %v475
      %v574 = vsel %vm566, %v463, %v477
      %vm575 = vcmask 424960
      %v577 = vsel %vm575, %v568, %v485
      %v579 = vsel %vm575, %v570, %v487
      %v581 = vsel %vm575, %v572, %v489
      %v583 = vsel %vm575, %v574, %v491
      %vm584 = vcmask 719872
      %v586 = vsel %vm584, %v577, %v499
      %v588 = vsel %vm584, %v579, %v501
      %v590 = vsel %vm584, %v581, %v503
      %v592 = vsel %vm584, %v583, %v505
      %vm593 = vcmask 1014784
      %v595 = vsel %vm593, %v586, %v513
      %v598 = vsel %vm593, %v588, %v515
      %v601 = vsel %vm593, %v590, %v517
      %v604 = vsel %vm593, %v592, %v519
      %vm605 = vcmask 261120
      %v607 = vsel %vm605, %v513, %v525
      %v609 = vsel %vm605, %v515, %v527
      %v611 = vsel %vm605, %v517, %v529
      %v613 = vsel %vm605, %v519, %v531
      %v614 = vld [vmem:[%s339 + $0x20] sm:$0xf]
      %615 = vrot.lane.b32.xlu0 %v426, 36
      %v616 = vpop.permute.xlu0 %615
      %617 = vrot.lane.b32.xlu0 %v427, 36
      %v618 = vpop.permute.xlu0 %617
      %619 = vrot.lane.b32.xlu0 %v428, 36
      %v620 = vpop.permute.xlu0 %619
      %621 = vrot.lane.b32.xlu0 %v429, 36
      %v622 = vpop.permute.xlu0 %621
      %623 = vrot.lane.b32.xlu0 %v452, 72
      %v624 = vpop.permute.xlu0 %623
      %625 = vrot.lane.b32.xlu0 %v453, 72
      %v626 = vpop.permute.xlu0 %625
      %627 = vrot.lane.b32.xlu0 %v454, 72
      %v628 = vpop.permute.xlu0 %627
      %629 = vrot.lane.b32.xlu0 %v455, 72
      %v630 = vpop.permute.xlu0 %629
      %631 = vrot.lane.b32.xlu0 %v466, 108
      %v632 = vpop.permute.xlu0 %631
      %633 = vrot.lane.b32.xlu0 %v467, 108
      %v634 = vpop.permute.xlu0 %633
      %635 = vrot.lane.b32.xlu0 %v468, 108
      %v636 = vpop.permute.xlu0 %635
      %637 = vrot.lane.b32.xlu0 %v469, 108
      %v638 = vpop.permute.xlu0 %637
      %639 = vrot.lane.b32.xlu0 %v480, 16
      %v640 = vpop.permute.xlu0 %639
      %641 = vrot.lane.b32.xlu0 %v481, 16
      %v642 = vpop.permute.xlu0 %641
      %643 = vrot.lane.b32.xlu0 %v482, 16
      %v644 = vpop.permute.xlu0 %643
      %645 = vrot.lane.b32.xlu0 %v483, 16
      %v646 = vpop.permute.xlu0 %645
      %647 = vrot.lane.b32.xlu0 %v494, 52
      %v648 = vpop.permute.xlu0 %647
      %649 = vrot.lane.b32.xlu0 %v495, 52
      %v650 = vpop.permute.xlu0 %649
      %651 = vrot.lane.b32.xlu0 %v496, 52
      %v652 = vpop.permute.xlu0 %651
      %653 = vrot.lane.b32.xlu0 %v497, 52
      %v654 = vpop.permute.xlu0 %653
      %655 = vrot.lane.b32.xlu0 %v508, 88
      %v656 = vpop.permute.xlu0 %655
      %657 = vrot.lane.b32.xlu0 %v509, 88
      %v658 = vpop.permute.xlu0 %657
      %659 = vrot.lane.b32.xlu0 %v510, 88
      %v660 = vpop.permute.xlu0 %659
      %661 = vrot.lane.b32.xlu0 %v511, 88
      %v662 = vpop.permute.xlu0 %661
      %663 = vrot.lane.b32.xlu0 %v383, 124
      %v664 = vpop.permute.xlu0 %663
      %665 = vrot.lane.b32.xlu0 %v384, 124
      %v666 = vpop.permute.xlu0 %665
      %667 = vrot.lane.b32.xlu0 %v522, 124
      %v668 = vpop.permute.xlu0 %667
      %669 = vrot.lane.b32.xlu0 %v523, 124
      %v670 = vpop.permute.xlu0 %669
      %v672 = vunpack.c.l.b16 %v614
      %v673 = vpack.c.b16 %v479, %v399
      %v674 = vpack.c.b16 %v672, %v672
      %675 = vrot.lane.b32.xlu0 %v401, 32
      %v676 = vpop.permute.xlu0 %675
      %677 = vrot.lane.b32.xlu0 %v402, 32
      %v678 = vpop.permute.xlu0 %677
      %679 = vrot.lane.b32.xlu0 %v673, 32
      %v680 = vpop.permute.xlu0 %679
      %681 = vrot.lane.b32.xlu0 %v674, 32
      %v682 = vpop.permute.xlu0 %681
      %v685 = vsel %vm532, %v400, %v616
      %v688 = vsel %vm532, %v401, %v618
      %v691 = vsel %vm532, %v402, %v620
      %v694 = vsel %vm532, %v403, %v622
      %v696 = vsel %vm545, %v685, %v624
      %v698 = vsel %vm545, %v688, %v626
      %v700 = vsel %vm545, %v691, %v628
      %v702 = vsel %vm545, %v694, %v630
      %v704 = vsel %vm554, %v696, %v632
      %v706 = vsel %vm554, %v698, %v634
      %v708 = vsel %vm554, %v700, %v636
      %v710 = vsel %vm554, %v702, %v638
      %v712 = vsel %vm566, %v632, %v640
      %v714 = vsel %vm566, %v634, %v642
      %v716 = vsel %vm566, %v636, %v644
      %v718 = vsel %vm566, %v638, %v646
      %v720 = vsel %vm575, %v712, %v648
      %v722 = vsel %vm575, %v714, %v650
      %v724 = vsel %vm575, %v716, %v652
      %v726 = vsel %vm575, %v718, %v654
      %v728 = vsel %vm584, %v720, %v656
      %v730 = vsel %vm584, %v722, %v658
      %v732 = vsel %vm584, %v724, %v660
      %v734 = vsel %vm584, %v726, %v662
      %v736 = vsel %vm593, %v728, %v664
      %v738 = vsel %vm593, %v730, %v666
      %v740 = vsel %vm593, %v732, %v668
      %v742 = vsel %vm593, %v734, %v670
      %v744 = vsel %vm605, %v664, %v676
      %v746 = vsel %vm605, %v666, %v678
      %v748 = vsel %vm605, %v668, %v680
      %v750 = vsel %vm605, %v670, %v682
      %v751 = vld [vmem:[%s347 + $0x20] sm:$0xf]
      %752 = vrot.lane.b32.xlu0 %v452, 36
      %v753 = vpop.permute.xlu0 %752
      %754 = vrot.lane.b32.xlu0 %v453, 36
      %v755 = vpop.permute.xlu0 %754
      %756 = vrot.lane.b32.xlu0 %v454, 36
      %v757 = vpop.permute.xlu0 %756
      %758 = vrot.lane.b32.xlu0 %v455, 36
      %v759 = vpop.permute.xlu0 %758
      %760 = vrot.lane.b32.xlu0 %v466, 72
      %v761 = vpop.permute.xlu0 %760
      %762 = vrot.lane.b32.xlu0 %v467, 72
      %v763 = vpop.permute.xlu0 %762
      %764 = vrot.lane.b32.xlu0 %v468, 72
      %v765 = vpop.permute.xlu0 %764
      %766 = vrot.lane.b32.xlu0 %v469, 72
      %v767 = vpop.permute.xlu0 %766
      %768 = vrot.lane.b32.xlu0 %v480, 108
      %v769 = vpop.permute.xlu0 %768
      %770 = vrot.lane.b32.xlu0 %v481, 108
      %v771 = vpop.permute.xlu0 %770
      %772 = vrot.lane.b32.xlu0 %v482, 108
      %v773 = vpop.permute.xlu0 %772
      %774 = vrot.lane.b32.xlu0 %v483, 108
      %v775 = vpop.permute.xlu0 %774
      %776 = vrot.lane.b32.xlu0 %v494, 16
      %v777 = vpop.permute.xlu0 %776
      %778 = vrot.lane.b32.xlu0 %v495, 16
      %v779 = vpop.permute.xlu0 %778
      %780 = vrot.lane.b32.xlu0 %v496, 16
      %v781 = vpop.permute.xlu0 %780
      %782 = vrot.lane.b32.xlu0 %v497, 16
      %v783 = vpop.permute.xlu0 %782
      %784 = vrot.lane.b32.xlu0 %v508, 52
      %v785 = vpop.permute.xlu0 %784
      %786 = vrot.lane.b32.xlu0 %v509, 52
      %v787 = vpop.permute.xlu0 %786
      %788 = vrot.lane.b32.xlu0 %v510, 52
      %v789 = vpop.permute.xlu0 %788
      %790 = vrot.lane.b32.xlu0 %v511, 52
      %v791 = vpop.permute.xlu0 %790
      %792 = vrot.lane.b32.xlu0 %v383, 88
      %v793 = vpop.permute.xlu0 %792
      %794 = vrot.lane.b32.xlu0 %v384, 88
      %v795 = vpop.permute.xlu0 %794
      %796 = vrot.lane.b32.xlu0 %v522, 88
      %v797 = vpop.permute.xlu0 %796
      %798 = vrot.lane.b32.xlu0 %v523, 88
      %v799 = vpop.permute.xlu0 %798
      %800 = vrot.lane.b32.xlu0 %v401, 124
      %v801 = vpop.permute.xlu0 %800
      %802 = vrot.lane.b32.xlu0 %v402, 124
      %v803 = vpop.permute.xlu0 %802
      %804 = vrot.lane.b32.xlu0 %v673, 124
      %v805 = vpop.permute.xlu0 %804
      %806 = vrot.lane.b32.xlu0 %v674, 124
      %v807 = vpop.permute.xlu0 %806
      %v809 = vunpack.c.l.b16 %v751
      %v810 = vpack.c.b16 %v493, %v425
      %v811 = vpack.c.b16 %v809, %v809
      %812 = vrot.lane.b32.xlu0 %v427, 32
      %v813 = vpop.permute.xlu0 %812
      %814 = vrot.lane.b32.xlu0 %v428, 32
      %v815 = vpop.permute.xlu0 %814
      %816 = vrot.lane.b32.xlu0 %v810, 32
      %v817 = vpop.permute.xlu0 %816
      %818 = vrot.lane.b32.xlu0 %v811, 32
      %v819 = vpop.permute.xlu0 %818
      %v822 = vsel %vm532, %v426, %v753
      %v825 = vsel %vm532, %v427, %v755
      %v828 = vsel %vm532, %v428, %v757
      %v831 = vsel %vm532, %v429, %v759
      %v833 = vsel %vm545, %v822, %v761
      %v835 = vsel %vm545, %v825, %v763
      %v837 = vsel %vm545, %v828, %v765
      %v839 = vsel %vm545, %v831, %v767
      %v841 = vsel %vm554, %v833, %v769
      %v844 = vsel %vm554, %v835, %v771
      %v847 = vsel %vm554, %v837, %v773
      %v850 = vsel %vm554, %v839, %v775
      %v852 = vsel %vm566, %v769, %v777
      %v854 = vsel %vm566, %v771, %v779
      %v856 = vsel %vm566, %v773, %v781
      %v858 = vsel %vm566, %v775, %v783
      %v860 = vsel %vm575, %v852, %v785
      %v862 = vsel %vm575, %v854, %v787
      %v864 = vsel %vm575, %v856, %v789
      %v866 = vsel %vm575, %v858, %v791
      %v868 = vsel %vm584, %v860, %v793
      %v870 = vsel %vm584, %v862, %v795
      %v872 = vsel %vm584, %v864, %v797
      %v874 = vsel %vm584, %v866, %v799
      %v876 = vsel %vm593, %v868, %v801
      %v879 = vsel %vm593, %v870, %v803
      %v882 = vsel %vm593, %v872, %v805
      %v885 = vsel %vm593, %v874, %v807
      %v887 = vsel %vm605, %v801, %v813
      %v889 = vsel %vm605, %v803, %v815
      %v891 = vsel %vm605, %v805, %v817
      %v893 = vsel %vm605, %v807, %v819
      %v894 = vld [vmem:[%s355 + $0x20] sm:$0xf]
      %895 = vrot.lane.b32.xlu0 %v466, 36
      %v896 = vpop.permute.xlu0 %895
      %897 = vrot.lane.b32.xlu0 %v467, 36
      %v898 = vpop.permute.xlu0 %897
      %899 = vrot.lane.b32.xlu0 %v468, 36
      %v900 = vpop.permute.xlu0 %899
      %901 = vrot.lane.b32.xlu0 %v469, 36
      %v902 = vpop.permute.xlu0 %901
      %903 = vrot.lane.b32.xlu0 %v480, 72
      %v904 = vpop.permute.xlu0 %903
      %905 = vrot.lane.b32.xlu0 %v481, 72
      %v906 = vpop.permute.xlu0 %905
      %907 = vrot.lane.b32.xlu0 %v482, 72
      %v908 = vpop.permute.xlu0 %907
      %909 = vrot.lane.b32.xlu0 %v483, 72
      %v910 = vpop.permute.xlu0 %909
      %911 = vrot.lane.b32.xlu0 %v494, 108
      %v912 = vpop.permute.xlu0 %911
      %913 = vrot.lane.b32.xlu0 %v495, 108
      %v914 = vpop.permute.xlu0 %913
      %915 = vrot.lane.b32.xlu0 %v496, 108
      %v916 = vpop.permute.xlu0 %915
      %917 = vrot.lane.b32.xlu0 %v497, 108
      %v918 = vpop.permute.xlu0 %917
      %919 = vrot.lane.b32.xlu0 %v508, 16
      %v920 = vpop.permute.xlu0 %919
      %921 = vrot.lane.b32.xlu0 %v509, 16
      %v922 = vpop.permute.xlu0 %921
      %923 = vrot.lane.b32.xlu0 %v510, 16
      %v924 = vpop.permute.xlu0 %923
      %925 = vrot.lane.b32.xlu0 %v511, 16
      %v926 = vpop.permute.xlu0 %925
      %927 = vrot.lane.b32.xlu0 %v383, 52
      %v928 = vpop.permute.xlu0 %927
      %929 = vrot.lane.b32.xlu0 %v384, 52
      %v930 = vpop.permute.xlu0 %929
      %931 = vrot.lane.b32.xlu0 %v522, 52
      %v932 = vpop.permute.xlu0 %931
      %933 = vrot.lane.b32.xlu0 %v523, 52
      %v934 = vpop.permute.xlu0 %933
      %935 = vrot.lane.b32.xlu0 %v401, 88
      %v936 = vpop.permute.xlu0 %935
      %937 = vrot.lane.b32.xlu0 %v402, 88
      %v938 = vpop.permute.xlu0 %937
      %939 = vrot.lane.b32.xlu0 %v673, 88
      %v940 = vpop.permute.xlu0 %939
      %941 = vrot.lane.b32.xlu0 %v674, 88
      %v942 = vpop.permute.xlu0 %941
      %943 = vrot.lane.b32.xlu0 %v427, 124
      %v944 = vpop.permute.xlu0 %943
      %945 = vrot.lane.b32.xlu0 %v428, 124
      %v946 = vpop.permute.xlu0 %945
      %947 = vrot.lane.b32.xlu0 %v810, 124
      %v948 = vpop.permute.xlu0 %947
      %949 = vrot.lane.b32.xlu0 %v811, 124
      %v950 = vpop.permute.xlu0 %949
      %v952 = vunpack.c.l.b16 %v894
      %v953 = vpack.c.b16 %v507, %v451
      %v954 = vpack.c.b16 %v952, %v952
      %955 = vrot.lane.b32.xlu0 %v453, 32
      %v956 = vpop.permute.xlu0 %955
      %957 = vrot.lane.b32.xlu0 %v454, 32
      %v958 = vpop.permute.xlu0 %957
      %959 = vrot.lane.b32.xlu0 %v953, 32
      %v960 = vpop.permute.xlu0 %959
      %961 = vrot.lane.b32.xlu0 %v954, 32
      %v962 = vpop.permute.xlu0 %961
      %v965 = vsel %vm532, %v452, %v896
      %v968 = vsel %vm532, %v453, %v898
      %v971 = vsel %vm532, %v454, %v900
      %v974 = vsel %vm532, %v455, %v902
      %v976 = vsel %vm545, %v965, %v904
      %v978 = vsel %vm545, %v968, %v906
      %v980 = vsel %vm545, %v971, %v908
      %v982 = vsel %vm545, %v974, %v910
      %v984 = vsel %vm554, %v976, %v912
      %v986 = vsel %vm554, %v978, %v914
      %v988 = vsel %vm554, %v980, %v916
      %v990 = vsel %vm554, %v982, %v918
      %v992 = vsel %vm566, %v912, %v920
      %v994 = vsel %vm566, %v914, %v922
      %v996 = vsel %vm566, %v916, %v924
      %v998 = vsel %vm566, %v918, %v926
      %v1000 = vsel %vm575, %v992, %v928
      %v1002 = vsel %vm575, %v994, %v930
      %v1004 = vsel %vm575, %v996, %v932
      %v1006 = vsel %vm575, %v998, %v934
      %v1008 = vsel %vm584, %v1000, %v936
      %v1010 = vsel %vm584, %v1002, %v938
      %v1012 = vsel %vm584, %v1004, %v940
      %v1014 = vsel %vm584, %v1006, %v942
      %v1016 = vsel %vm593, %v1008, %v944
      %v1018 = vsel %vm593, %v1010, %v946
      %v1020 = vsel %vm593, %v1012, %v948
      %v1022 = vsel %vm593, %v1014, %v950
      %v1024 = vsel %vm605, %v944, %v956
      %v1026 = vsel %vm605, %v946, %v958
      %v1028 = vsel %vm605, %v948, %v960
      %v1030 = vsel %vm605, %v950, %v962
      %vm1043 = vcmask 1043456
      %v1044 = vrot.slane %v704, 4
      %v1045 = vrot.slane %v736, 4
      %v1046 = vrot.slane %v744, 4
      %v1047 = vrot.slane %v706, 4
      %v1048 = vsel %vm1043, %v1044, %v1047
      %v1049 = vrot.slane %v738, 4
      %v1050 = vsel %vm1043, %v1045, %v1049
      %v1051 = vrot.slane %v746, 4
      %v1052 = vsel %vm1043, %v1046, %v1051
      %v1053 = vrot.slane %v708, 4
      %v1054 = vsel %vm1043, %v1047, %v1053
      %v1055 = vrot.slane %v740, 4
      %v1056 = vsel %vm1043, %v1049, %v1055
      %v1057 = vrot.slane %v748, 4
      %v1058 = vsel %vm1043, %v1051, %v1057
      %v1059 = vrot.slane %v710, 4
      %v1060 = vsel %vm1043, %v1053, %v1059
      %v1061 = vrot.slane %v742, 4
      %v1062 = vsel %vm1043, %v1055, %v1061
      %v1063 = vrot.slane %v750, 4
      %v1064 = vsel %vm1043, %v1057, %v1063
      %v1083 = vrot.slane %v984, 4
      %v1084 = vrot.slane %v1016, 4
      %v1085 = vrot.slane %v1024, 4
      %v1086 = vrot.slane %v986, 4
      %v1087 = vsel %vm1043, %v1083, %v1086
      %v1088 = vrot.slane %v1018, 4
      %v1089 = vsel %vm1043, %v1084, %v1088
      %v1090 = vrot.slane %v1026, 4
      %v1091 = vsel %vm1043, %v1085, %v1090
      %v1092 = vrot.slane %v988, 4
      %v1093 = vsel %vm1043, %v1086, %v1092
      %v1094 = vrot.slane %v1020, 4
      %v1095 = vsel %vm1043, %v1088, %v1094
      %v1096 = vrot.slane %v1028, 4
      %v1097 = vsel %vm1043, %v1090, %v1096
      %v1098 = vrot.slane %v990, 4
      %v1099 = vsel %vm1043, %v1092, %v1098
      %v1100 = vrot.slane %v1022, 4
      %v1101 = vsel %vm1043, %v1094, %v1100
      %v1102 = vrot.slane %v1030, 4
      %v1103 = vsel %vm1043, %v1096, %v1102
      %vm1110 = vcmask 1043456
      %v1112 = vsel %vm1110, %v565, %v1044
      %v1115 = vsel %vm1110, %v604, %v1045
      %v1118 = vsel %vm1110, %v613, %v1046
      %v1120 = vsel %vm1110, %v850, %v1083
      %v1123 = vsel %vm1110, %v885, %v1084
      %v1126 = vsel %vm1110, %v893, %v1085
      %v1127 = vld [vmem:[%s1] sm:$0xff]
      %v1128 = vld [vmem:[%s1 + $0x8] sm:$0xf]
      %v1129 = vld [vmem:[%s1 + $0xc] sm:$0xff]
      %v1130 = vld [vmem:[%s1 + $0x14] sm:$0xf]
      %v1131 = vld [vmem:[%s1 + $0x18] sm:$0xff]
      %v1132 = vld [vmem:[%s1 + $0x20] sm:$0xf]
      %v1133 = vld [vmem:[%s1 + $0x24] sm:$0xff]
      %v1134 = vld [vmem:[%s1 + $0x2c] sm:$0xf]
      %v1135 = vld [vmem:[%s1 + $0x30] sm:$0xff]
      %v1136 = vld [vmem:[%s1 + $0x38] sm:$0xf]
      %v1137 = vld [vmem:[%s1 + $0x3c] sm:$0xff]
      %v1138 = vld [vmem:[%s1 + $0x44] sm:$0xf]
      %v1139 = vld [vmem:[%s1 + $0x48] sm:$0xff]
      %v1140 = vld [vmem:[%s1 + $0x50] sm:$0xf]
      %v1141 = vld [vmem:[%s1 + $0x54] sm:$0xff]
      %v1142 = vld [vmem:[%s1 + $0x5c] sm:$0xf]
      %v1143 = vld [vmem:[%s1 + $0x60] sm:$0xff]
      %v1144 = vld [vmem:[%s1 + $0x68] sm:$0xf]
      %v1145 = vld [vmem:[%s1 + $0x6c] sm:$0xff]
      %v1146 = vld [vmem:[%s1 + $0x74] sm:$0xf]
      %v1147 = vld [vmem:[%s1 + $0x78] sm:$0xff]
      %v1148 = vld [vmem:[%s1 + $0x80] sm:$0xf]
      %v1149 = vld [vmem:[%s1 + $0x84] sm:$0xff]
      %v1150 = vld [vmem:[%s1 + $0x8c] sm:$0xf]
      %v1151 = vld [vmem:[%s1 + $0x90] sm:$0xff]
      %v1152 = vld [vmem:[%s1 + $0x98] sm:$0xf]
      %v1153 = vld [vmem:[%s1 + $0x9c] sm:$0xff]
      %v1154 = vld [vmem:[%s1 + $0xa4] sm:$0xf]
      %v1155 = vld [vmem:[%s1 + $0xa8] sm:$0xff]
      %v1156 = vld [vmem:[%s1 + $0xb0] sm:$0xf]
      %v1157 = vld [vmem:[%s1 + $0xb4] sm:$0xff]
      %v1158 = vld [vmem:[%s1 + $0xbc] sm:$0xf]
      %v1159 = vld [vmem:[%s1 + $0xc0] sm:$0xff]
      %v1160 = vld [vmem:[%s1 + $0xc8] sm:$0xf]
      %v1161 = vld [vmem:[%s1 + $0xcc] sm:$0xff]
      %v1162 = vld [vmem:[%s1 + $0xd4] sm:$0xf]
      %v1163 = vld [vmem:[%s1 + $0xd8] sm:$0xff]
      %v1164 = vld [vmem:[%s1 + $0xe0] sm:$0xf]
      %v1165 = vld [vmem:[%s1 + $0xe4] sm:$0xff]
      %v1166 = vld [vmem:[%s1 + $0xec] sm:$0xf]
      %v1167 = vld [vmem:[%s1 + $0xf0] sm:$0xff]
      %v1168 = vld [vmem:[%s1 + $0xf8] sm:$0xf]
      %v1169 = vld [vmem:[%s1 + $0xfc] sm:$0xff]
      %v1170 = vld [vmem:[%s1 + $0x104] sm:$0xf]
      %v1171 = vld [vmem:[%s1 + $0x108] sm:$0xff]
      %v1172 = vld [vmem:[%s1 + $0x110] sm:$0xf]
      %v1173 = vld [vmem:[%s1 + $0x114] sm:$0xff]
      %v1174 = vld [vmem:[%s1 + $0x11c] sm:$0xf]
      %v1175 = vld [vmem:[%s1 + $0x120] sm:$0xff]
      %v1176 = vld [vmem:[%s1 + $0x128] sm:$0xf]
      %v1177 = vld [vmem:[%s1 + $0x12c] sm:$0xff]
      %v1178 = vld [vmem:[%s1 + $0x134] sm:$0xf]
      %v1179 = vld [vmem:[%s1 + $0x138] sm:$0xff]
      %v1180 = vld [vmem:[%s1 + $0x140] sm:$0xf]
      %v1181 = vld [vmem:[%s1 + $0x144] sm:$0xff]
      %v1182 = vld [vmem:[%s1 + $0x14c] sm:$0xf]
      %v1183 = vld [vmem:[%s1 + $0x150] sm:$0xff]
      %v1184 = vld [vmem:[%s1 + $0x158] sm:$0xf]
      %v1185 = vld [vmem:[%s1 + $0x15c] sm:$0xff]
      %v1186 = vld [vmem:[%s1 + $0x164] sm:$0xf]
      %v1187 = vld [vmem:[%s1 + $0x168] sm:$0xff]
      %v1188 = vld [vmem:[%s1 + $0x170] sm:$0xf]
      %v1189 = vld [vmem:[%s1 + $0x174] sm:$0xff]
      %v1190 = vld [vmem:[%s1 + $0x17c] sm:$0xf]
      %v1191 = vld [vmem:[%s1 + $0x180] sm:$0xff]
      %v1192 = vld [vmem:[%s1 + $0x188] sm:$0xf]
      %v1193 = vld [vmem:[%s1 + $0x18c] sm:$0xff]
      %v1194 = vld [vmem:[%s1 + $0x194] sm:$0xf]
      %v1195 = vld [vmem:[%s1 + $0x198] sm:$0xff]
      %v1196 = vld [vmem:[%s1 + $0x1a0] sm:$0xf]
      %v1197 = vld [vmem:[%s1 + $0x1a4] sm:$0xff]
      %v1198 = vld [vmem:[%s1 + $0x1ac] sm:$0xf]
      %v1199 = vld [vmem:[%s1 + $0x1b0] sm:$0xff]
      %v1200 = vld [vmem:[%s1 + $0x1b8] sm:$0xf]
      %v1201 = vld [vmem:[%s1 + $0x1bc] sm:$0xff]
      %v1202 = vld [vmem:[%s1 + $0x1c4] sm:$0xf]
      %v1203 = vld [vmem:[%s1 + $0x1c8] sm:$0xff]
      %v1204 = vld [vmem:[%s1 + $0x1d0] sm:$0xf]
      %v1205 = vld [vmem:[%s1 + $0x1d4] sm:$0xff]
      %v1206 = vld [vmem:[%s1 + $0x1dc] sm:$0xf]
      %v1207 = vld [vmem:[%s1 + $0x1e0] sm:$0x33]
      %v1208 = vld [vmem:[%s1 + $0x1e8] sm:$0x3]
      %v1291 = vunpack.c.l.b16 %v1127
      %v1292 = vunpack.c.h.b16 %v1127
      %v1293 = vunpack.c.l.b16 %v1128
      %v1294 = vunpack.c.l.b16 %v1129
      %v1295 = vunpack.c.h.b16 %v1129
      %v1296 = vunpack.c.l.b16 %v1130
      %v1297 = vunpack.c.l.b16 %v1131
      %v1298 = vunpack.c.h.b16 %v1131
      %v1299 = vunpack.c.l.b16 %v1132
      %v1300 = vunpack.c.l.b16 %v1133
      %v1301 = vunpack.c.h.b16 %v1133
      %v1302 = vunpack.c.l.b16 %v1134
      %v1303 = vunpack.c.l.b16 %v1135
      %v1304 = vunpack.c.h.b16 %v1135
      %v1305 = vunpack.c.l.b16 %v1136
      %v1306 = vunpack.c.l.b16 %v1137
      %v1307 = vunpack.c.h.b16 %v1137
      %v1308 = vunpack.c.l.b16 %v1138
      %v1309 = vunpack.c.l.b16 %v1139
      %v1310 = vunpack.c.h.b16 %v1139
      %v1311 = vunpack.c.l.b16 %v1140
      %v1312 = vunpack.c.l.b16 %v1141
      %v1313 = vunpack.c.h.b16 %v1141
      %v1314 = vunpack.c.l.b16 %v1142
      %v1315 = vunpack.c.l.b16 %v1143
      %v1316 = vunpack.c.h.b16 %v1143
      %v1317 = vunpack.c.l.b16 %v1144
      %v1318 = vunpack.c.l.b16 %v1145
      %v1319 = vunpack.c.h.b16 %v1145
      %v1320 = vunpack.c.l.b16 %v1146
      %v1321 = vunpack.c.l.b16 %v1147
      %v1322 = vunpack.c.h.b16 %v1147
      %v1323 = vunpack.c.l.b16 %v1148
      %v1324 = vunpack.c.l.b16 %v1149
      %v1325 = vunpack.c.h.b16 %v1149
      %v1326 = vunpack.c.l.b16 %v1150
      %v1327 = vunpack.c.l.b16 %v1151
      %v1328 = vunpack.c.h.b16 %v1151
      %v1329 = vunpack.c.l.b16 %v1152
      %v1330 = vunpack.c.l.b16 %v1153
      %v1331 = vunpack.c.h.b16 %v1153
      %v1332 = vunpack.c.l.b16 %v1154
      %v1333 = vunpack.c.l.b16 %v1155
      %v1334 = vunpack.c.h.b16 %v1155
      %v1335 = vunpack.c.l.b16 %v1156
      %v1336 = vunpack.c.l.b16 %v1157
      %v1337 = vunpack.c.h.b16 %v1157
      %v1338 = vunpack.c.l.b16 %v1158
      %v1339 = vunpack.c.l.b16 %v1159
      %v1340 = vunpack.c.h.b16 %v1159
      %v1341 = vunpack.c.l.b16 %v1160
      %v1342 = vunpack.c.l.b16 %v1161
      %v1343 = vunpack.c.h.b16 %v1161
      %v1344 = vunpack.c.l.b16 %v1162
      %v1345 = vunpack.c.l.b16 %v1163
      %v1346 = vunpack.c.h.b16 %v1163
      %v1347 = vunpack.c.l.b16 %v1164
      %v1348 = vunpack.c.l.b16 %v1165
      %v1349 = vunpack.c.h.b16 %v1165
      %v1350 = vunpack.c.l.b16 %v1166
      %v1351 = vunpack.c.l.b16 %v1167
      %v1352 = vunpack.c.h.b16 %v1167
      %v1353 = vunpack.c.l.b16 %v1168
      %v1354 = vunpack.c.l.b16 %v1169
      %v1355 = vunpack.c.h.b16 %v1169
      %v1356 = vunpack.c.l.b16 %v1170
      %v1357 = vunpack.c.l.b16 %v1171
      %v1358 = vunpack.c.h.b16 %v1171
      %v1359 = vunpack.c.l.b16 %v1172
      %v1360 = vunpack.c.l.b16 %v1173
      %v1361 = vunpack.c.h.b16 %v1173
      %v1362 = vunpack.c.l.b16 %v1174
      %v1363 = vunpack.c.l.b16 %v1175
      %v1364 = vunpack.c.h.b16 %v1175
      %v1365 = vunpack.c.l.b16 %v1176
      %v1366 = vunpack.c.l.b16 %v1177
      %v1367 = vunpack.c.h.b16 %v1177
      %v1368 = vunpack.c.l.b16 %v1178
      %v1369 = vunpack.c.l.b16 %v1179
      %v1370 = vunpack.c.h.b16 %v1179
      %v1371 = vunpack.c.l.b16 %v1180
      %v1372 = vunpack.c.l.b16 %v1181
      %v1373 = vunpack.c.h.b16 %v1181
      %v1374 = vunpack.c.l.b16 %v1182
      %v1375 = vunpack.c.l.b16 %v1183
      %v1376 = vunpack.c.h.b16 %v1183
      %v1377 = vunpack.c.l.b16 %v1184
      %v1378 = vunpack.c.l.b16 %v1185
      %v1379 = vunpack.c.h.b16 %v1185
      %v1380 = vunpack.c.l.b16 %v1186
      %v1381 = vunpack.c.l.b16 %v1187
      %v1382 = vunpack.c.h.b16 %v1187
      %v1383 = vunpack.c.l.b16 %v1188
      %v1384 = vunpack.c.l.b16 %v1189
      %v1385 = vunpack.c.h.b16 %v1189
      %v1386 = vunpack.c.l.b16 %v1190
      %v1387 = vunpack.c.l.b16 %v1191
      %v1388 = vunpack.c.h.b16 %v1191
      %v1389 = vunpack.c.l.b16 %v1192
      %v1390 = vunpack.c.l.b16 %v1193
      %v1391 = vunpack.c.h.b16 %v1193
      %v1392 = vunpack.c.l.b16 %v1194
      %v1393 = vunpack.c.l.b16 %v1195
      %v1394 = vunpack.c.h.b16 %v1195
      %v1395 = vunpack.c.l.b16 %v1196
      %v1396 = vunpack.c.l.b16 %v1197
      %v1397 = vunpack.c.h.b16 %v1197
      %v1398 = vunpack.c.l.b16 %v1198
      %v1399 = vunpack.c.l.b16 %v1199
      %v1400 = vunpack.c.h.b16 %v1199
      %v1401 = vunpack.c.l.b16 %v1200
      %v1402 = vunpack.c.l.b16 %v1201
      %v1403 = vunpack.c.h.b16 %v1201
      %v1404 = vunpack.c.l.b16 %v1202
      %v1405 = vunpack.c.l.b16 %v1203
      %v1406 = vunpack.c.h.b16 %v1203
      %v1407 = vunpack.c.l.b16 %v1204
      %v1408 = vunpack.c.l.b16 %v1205
      %v1409 = vunpack.c.h.b16 %v1205
      %v1410 = vunpack.c.l.b16 %v1206
      %v1411 = vunpack.c.l.b16 %v1207
      %v1412 = vunpack.c.h.b16 %v1207
      %v1413 = vunpack.c.l.b16 %v1208
      %v1414 = vpack.c.b16 %v1294, %v1291
      %v1415 = vpack.c.b16 %v1295, %v1292
      %v1416 = vpack.c.b16 %v1296, %v1293
      %v1417 = vpack.c.b16 %v1300, %v1297
      %v1418 = vpack.c.b16 %v1301, %v1298
      %v1419 = vpack.c.b16 %v1302, %v1299
      %v1420 = vpack.c.b16 %v1306, %v1303
      %v1421 = vpack.c.b16 %v1307, %v1304
      %v1422 = vpack.c.b16 %v1308, %v1305
      %v1423 = vpack.c.b16 %v1312, %v1309
      %v1424 = vpack.c.b16 %v1313, %v1310
      %v1425 = vpack.c.b16 %v1314, %v1311
      %v1426 = vpack.c.b16 %v1318, %v1315
      %v1427 = vpack.c.b16 %v1319, %v1316
      %v1428 = vpack.c.b16 %v1320, %v1317
      %v1429 = vpack.c.b16 %v1324, %v1321
      %v1430 = vpack.c.b16 %v1325, %v1322
      %v1431 = vpack.c.b16 %v1326, %v1323
      %v1432 = vpack.c.b16 %v1330, %v1327
      %v1433 = vpack.c.b16 %v1331, %v1328
      %v1434 = vpack.c.b16 %v1332, %v1329
      %v1435 = vpack.c.b16 %v1336, %v1333
      %v1436 = vpack.c.b16 %v1337, %v1334
      %v1437 = vpack.c.b16 %v1338, %v1335
      %v1438 = vpack.c.b16 %v1342, %v1339
      %v1439 = vpack.c.b16 %v1343, %v1340
      %v1440 = vpack.c.b16 %v1344, %v1341
      %v1441 = vpack.c.b16 %v1348, %v1345
      %v1442 = vpack.c.b16 %v1349, %v1346
      %v1443 = vpack.c.b16 %v1350, %v1347
      %v1444 = vpack.c.b16 %v1354, %v1351
      %v1445 = vpack.c.b16 %v1355, %v1352
      %v1446 = vpack.c.b16 %v1356, %v1353
      %v1447 = vpack.c.b16 %v1360, %v1357
      %v1448 = vpack.c.b16 %v1361, %v1358
      %v1449 = vpack.c.b16 %v1362, %v1359
      %v1450 = vpack.c.b16 %v1366, %v1363
      %v1451 = vpack.c.b16 %v1367, %v1364
      %v1452 = vpack.c.b16 %v1368, %v1365
      %v1453 = vpack.c.b16 %v1372, %v1369
      %v1454 = vpack.c.b16 %v1373, %v1370
      %v1455 = vpack.c.b16 %v1374, %v1371
      %v1456 = vpack.c.b16 %v1378, %v1375
      %v1457 = vpack.c.b16 %v1379, %v1376
      %v1458 = vpack.c.b16 %v1380, %v1377
      %v1459 = vpack.c.b16 %v1384, %v1381
      %v1460 = vpack.c.b16 %v1385, %v1382
      %v1461 = vpack.c.b16 %v1386, %v1383
      %v1462 = vpack.c.b16 %v1390, %v1387
      %v1463 = vpack.c.b16 %v1391, %v1388
      %v1464 = vpack.c.b16 %v1392, %v1389
      %v1465 = vpack.c.b16 %v1396, %v1393
      %v1466 = vpack.c.b16 %v1397, %v1394
      %v1467 = vpack.c.b16 %v1398, %v1395
      %v1468 = vpack.c.b16 %v1402, %v1399
      %v1469 = vpack.c.b16 %v1403, %v1400
      %v1470 = vpack.c.b16 %v1404, %v1401
      %v1471 = vpack.c.b16 %v1408, %v1405
      %v1472 = vpack.c.b16 %v1409, %v1406
      %v1473 = vpack.c.b16 %v1410, %v1407
      %v1474 = vpack.c.b16 %v1411, %v1411
      %v1475 = vpack.c.b16 %v1412, %v1412
      %v1476 = vpack.c.b16 %v1413, %v1413
      %vm1537 = vcmask 556032
      %v1538 = vsel %vm1537, %v607, 0
      %v1540 = vsel %vm1537, %v609, 0
      %v1542 = vsel %vm1537, %v611, 0
      %v1544 = vsel %vm1537, %v1118, 0
      %v1547 = vsel %vm1537, %v1052, 0
      %v1550 = vsel %vm1537, %v1058, 0
      %v1553 = vsel %vm1537, %v1064, 0
      %v1555 = vsel %vm1537, %v887, 0
      %v1557 = vsel %vm1537, %v889, 0
      %v1559 = vsel %vm1537, %v891, 0
      %v1561 = vsel %vm1537, %v1126, 0
      %v1564 = vsel %vm1537, %v1091, 0
      %v1567 = vsel %vm1537, %v1097, 0
      %v1570 = vsel %vm1537, %v1103, 0
      %vm1572 = vcmask 1041408
      %v1574 = vsel %vm1572, %v1474, 0
      %v1577 = vsel %vm1572, %v1475, 0
      %v1580 = vsel %vm1572, %v1476, 0
      %1582 = vmatpush.bf16.msra.mxu0 %v1435
      %1583 = vmatpush.bf16.msra.mxu0 %v1432
      %1584 = vmatpush.bf16.msra.mxu0 %v1429
      %1585 = vmatpush.bf16.msra.mxu0 %v1426
      %1586 = vmatpush.bf16.msra.mxu0 %v1423
      %1587 = vmatpush.bf16.msra.mxu0 %v1420
      %1588 = vmatpush.bf16.msra.mxu0 %v1417
      %1589 = vmatpush.bf16.msra.mxu0 %v1414
      %1590 = vmatmul.bf16.gmra.mxu0 %v556
      %v1591 = vpop.f32.mrf.mxu0
      %v1592 = vadd.f32 0.0, %v1591
      %v1593 = vpop.f32.mrf.mxu0
      %v1594 = vadd.f32 0.0, %v1593
      %1595 = vmatmul.bf16.gmra.mxu0 %v559
      %v1596 = vpop.f32.mrf.mxu0
      %v1597 = vadd.f32 0.0, %v1596
      %v1598 = vpop.f32.mrf.mxu0
      %v1599 = vadd.f32 0.0, %v1598
      %1600 = vmatmul.bf16.gmra.mxu0 %v562
      %v1601 = vpop.f32.mrf.mxu0
      %v1602 = vadd.f32 0.0, %v1601
      %v1603 = vpop.f32.mrf.mxu0
      %v1604 = vadd.f32 0.0, %v1603
      %1605 = vmatmul.bf16.gmra.mxu0 %v1112
      %v1606 = vpop.f32.mrf.mxu0
      %v1607 = vadd.f32 0.0, %v1606
      %v1608 = vpop.f32.mrf.mxu0
      %v1609 = vadd.f32 0.0, %v1608
      %1610 = vmatmul.bf16.gmra.mxu0 %v1048
      %v1611 = vpop.f32.mrf.mxu0
      %v1612 = vadd.f32 0.0, %v1611
      %v1613 = vpop.f32.mrf.mxu0
      %v1614 = vadd.f32 0.0, %v1613
      %1615 = vmatmul.bf16.gmra.mxu0 %v1054
      %v1616 = vpop.f32.mrf.mxu0
      %v1617 = vadd.f32 0.0, %v1616
      %v1618 = vpop.f32.mrf.mxu0
      %v1619 = vadd.f32 0.0, %v1618
      %1620 = vmatmul.bf16.gmra.mxu0 %v1060
      %v1621 = vpop.f32.mrf.mxu0
      %v1622 = vadd.f32 0.0, %v1621
      %v1623 = vpop.f32.mrf.mxu0
      %v1624 = vadd.f32 0.0, %v1623
      %1625 = vmatmul.bf16.gmra.mxu0 %v841
      %v1626 = vpop.f32.mrf.mxu0
      %v1627 = vadd.f32 0.0, %v1626
      %v1628 = vpop.f32.mrf.mxu0
      %v1629 = vadd.f32 0.0, %v1628
      %1630 = vmatmul.bf16.gmra.mxu0 %v844
      %v1631 = vpop.f32.mrf.mxu0
      %v1632 = vadd.f32 0.0, %v1631
      %v1633 = vpop.f32.mrf.mxu0
      %v1634 = vadd.f32 0.0, %v1633
      %1635 = vmatmul.bf16.gmra.mxu0 %v847
      %v1636 = vpop.f32.mrf.mxu0
      %v1637 = vadd.f32 0.0, %v1636
      %v1638 = vpop.f32.mrf.mxu0
      %v1639 = vadd.f32 0.0, %v1638
      %1640 = vmatmul.bf16.gmra.mxu0 %v1120
      %v1641 = vpop.f32.mrf.mxu0
      %v1642 = vadd.f32 0.0, %v1641
      %v1643 = vpop.f32.mrf.mxu0
      %v1644 = vadd.f32 0.0, %v1643
      %1645 = vmatmul.bf16.gmra.mxu0 %v1087
      %v1646 = vpop.f32.mrf.mxu0
      %v1647 = vadd.f32 0.0, %v1646
      %v1648 = vpop.f32.mrf.mxu0
      %v1649 = vadd.f32 0.0, %v1648
      %1650 = vmatmul.bf16.gmra.mxu0 %v1093
      %v1651 = vpop.f32.mrf.mxu0
      %v1652 = vadd.f32 0.0, %v1651
      %v1653 = vpop.f32.mrf.mxu0
      %v1654 = vadd.f32 0.0, %v1653
      %1655 = vmatmul.bf16.gmra.mxu0 %v1099
      %v1656 = vpop.f32.mrf.mxu0
      %v1657 = vadd.f32 0.0, %v1656
      %v1658 = vpop.f32.mrf.mxu0
      %v1659 = vadd.f32 0.0, %v1658
      %1660 = vdwg.mxu0
      %1661 = vmatpush.bf16.msra.mxu0 %v1459
      %1662 = vmatpush.bf16.msra.mxu0 %v1456
      %1663 = vmatpush.bf16.msra.mxu0 %v1453
      %1664 = vmatpush.bf16.msra.mxu0 %v1450
      %1665 = vmatpush.bf16.msra.mxu0 %v1447
      %1666 = vmatpush.bf16.msra.mxu0 %v1444
      %1667 = vmatpush.bf16.msra.mxu0 %v1441
      %1668 = vmatpush.bf16.msra.mxu0 %v1438
      %1669 = vmatmul.bf16.gmra.mxu0 %v595
      %v1670 = vpop.f32.mrf.mxu0
      %v1671 = vadd.f32 %v1592, %v1670
      %v1672 = vpop.f32.mrf.mxu0
      %v1673 = vadd.f32 %v1594, %v1672
      %1674 = vmatmul.bf16.gmra.mxu0 %v598
      %v1675 = vpop.f32.mrf.mxu0
      %v1676 = vadd.f32 %v1597, %v1675
      %v1677 = vpop.f32.mrf.mxu0
      %v1678 = vadd.f32 %v1599, %v1677
      %1679 = vmatmul.bf16.gmra.mxu0 %v601
      %v1680 = vpop.f32.mrf.mxu0
      %v1681 = vadd.f32 %v1602, %v1680
      %v1682 = vpop.f32.mrf.mxu0
      %v1683 = vadd.f32 %v1604, %v1682
      %1684 = vmatmul.bf16.gmra.mxu0 %v1115
      %v1685 = vpop.f32.mrf.mxu0
      %v1686 = vadd.f32 %v1607, %v1685
      %v1687 = vpop.f32.mrf.mxu0
      %v1688 = vadd.f32 %v1609, %v1687
      %1689 = vmatmul.bf16.gmra.mxu0 %v1050
      %v1690 = vpop.f32.mrf.mxu0
      %v1691 = vadd.f32 %v1612, %v1690
      %v1692 = vpop.f32.mrf.mxu0
      %v1693 = vadd.f32 %v1614, %v1692
      %1694 = vmatmul.bf16.gmra.mxu0 %v1056
      %v1695 = vpop.f32.mrf.mxu0
      %v1696 = vadd.f32 %v1617, %v1695
      %v1697 = vpop.f32.mrf.mxu0
      %v1698 = vadd.f32 %v1619, %v1697
      %1699 = vmatmul.bf16.gmra.mxu0 %v1062
      %v1700 = vpop.f32.mrf.mxu0
      %v1701 = vadd.f32 %v1622, %v1700
      %v1702 = vpop.f32.mrf.mxu0
      %v1703 = vadd.f32 %v1624, %v1702
      %1704 = vmatmul.bf16.gmra.mxu0 %v876
      %v1705 = vpop.f32.mrf.mxu0
      %v1706 = vadd.f32 %v1627, %v1705
      %v1707 = vpop.f32.mrf.mxu0
      %v1708 = vadd.f32 %v1629, %v1707
      %1709 = vmatmul.bf16.gmra.mxu0 %v879
      %v1710 = vpop.f32.mrf.mxu0
      %v1711 = vadd.f32 %v1632, %v1710
      %v1712 = vpop.f32.mrf.mxu0
      %v1713 = vadd.f32 %v1634, %v1712
      %1714 = vmatmul.bf16.gmra.mxu0 %v882
      %v1715 = vpop.f32.mrf.mxu0
      %v1716 = vadd.f32 %v1637, %v1715
      %v1717 = vpop.f32.mrf.mxu0
      %v1718 = vadd.f32 %v1639, %v1717
      %1719 = vmatmul.bf16.gmra.mxu0 %v1123
      %v1720 = vpop.f32.mrf.mxu0
      %v1721 = vadd.f32 %v1642, %v1720
      %v1722 = vpop.f32.mrf.mxu0
      %v1723 = vadd.f32 %v1644, %v1722
      %1724 = vmatmul.bf16.gmra.mxu0 %v1089
      %v1725 = vpop.f32.mrf.mxu0
      %v1726 = vadd.f32 %v1647, %v1725
      %v1727 = vpop.f32.mrf.mxu0
      %v1728 = vadd.f32 %v1649, %v1727
      %1729 = vmatmul.bf16.gmra.mxu0 %v1095
      %v1730 = vpop.f32.mrf.mxu0
      %v1731 = vadd.f32 %v1652, %v1730
      %v1732 = vpop.f32.mrf.mxu0
      %v1733 = vadd.f32 %v1654, %v1732
      %1734 = vmatmul.bf16.gmra.mxu0 %v1101
      %v1735 = vpop.f32.mrf.mxu0
      %v1736 = vadd.f32 %v1657, %v1735
      %v1737 = vpop.f32.mrf.mxu0
      %v1738 = vadd.f32 %v1659, %v1737
      %1739 = vdwg.mxu0
      %1740 = vmatpush.bf16.msra.mxu0 0
      %1741 = vmatpush.bf16.msra.mxu0 0
      %1742 = vmatpush.bf16.msra.mxu0 0
      %1743 = vmatpush.bf16.msra.mxu0 %v1574
      %1744 = vmatpush.bf16.msra.mxu0 %v1471
      %1745 = vmatpush.bf16.msra.mxu0 %v1468
      %1746 = vmatpush.bf16.msra.mxu0 %v1465
      %1747 = vmatpush.bf16.msra.mxu0 %v1462
      %1748 = vmatmul.bf16.gmra.mxu0 %v1538
      %v1749 = vpop.f32.mrf.mxu0
      %v1750 = vadd.f32 %v1671, %v1749
      %v1751 = vpop.f32.mrf.mxu0
      %v1752 = vadd.f32 %v1673, %v1751
      %1753 = vmatmul.bf16.gmra.mxu0 %v1540
      %v1754 = vpop.f32.mrf.mxu0
      %v1755 = vadd.f32 %v1676, %v1754
      %v1756 = vpop.f32.mrf.mxu0
      %v1757 = vadd.f32 %v1678, %v1756
      %1758 = vmatmul.bf16.gmra.mxu0 %v1542
      %v1759 = vpop.f32.mrf.mxu0
      %v1760 = vadd.f32 %v1681, %v1759
      %v1761 = vpop.f32.mrf.mxu0
      %v1762 = vadd.f32 %v1683, %v1761
      %1763 = vmatmul.bf16.gmra.mxu0 %v1544
      %v1764 = vpop.f32.mrf.mxu0
      %v1765 = vadd.f32 %v1686, %v1764
      %v1766 = vpop.f32.mrf.mxu0
      %v1767 = vadd.f32 %v1688, %v1766
      %1768 = vmatmul.bf16.gmra.mxu0 %v1547
      %v1769 = vpop.f32.mrf.mxu0
      %v1770 = vadd.f32 %v1691, %v1769
      %v1771 = vpop.f32.mrf.mxu0
      %v1772 = vadd.f32 %v1693, %v1771
      %1773 = vmatmul.bf16.gmra.mxu0 %v1550
      %v1774 = vpop.f32.mrf.mxu0
      %v1775 = vadd.f32 %v1696, %v1774
      %v1776 = vpop.f32.mrf.mxu0
      %v1777 = vadd.f32 %v1698, %v1776
      %1778 = vmatmul.bf16.gmra.mxu0 %v1553
      %v1779 = vpop.f32.mrf.mxu0
      %v1780 = vadd.f32 %v1701, %v1779
      %v1781 = vpop.f32.mrf.mxu0
      %v1782 = vadd.f32 %v1703, %v1781
      %1783 = vmatmul.bf16.gmra.mxu0 %v1555
      %v1784 = vpop.f32.mrf.mxu0
      %v1785 = vadd.f32 %v1706, %v1784
      %v1786 = vpop.f32.mrf.mxu0
      %v1787 = vadd.f32 %v1708, %v1786
      %1788 = vmatmul.bf16.gmra.mxu0 %v1557
      %v1789 = vpop.f32.mrf.mxu0
      %v1790 = vadd.f32 %v1711, %v1789
      %v1791 = vpop.f32.mrf.mxu0
      %v1792 = vadd.f32 %v1713, %v1791
      %1793 = vmatmul.bf16.gmra.mxu0 %v1559
      %v1794 = vpop.f32.mrf.mxu0
      %v1795 = vadd.f32 %v1716, %v1794
      %v1796 = vpop.f32.mrf.mxu0
      %v1797 = vadd.f32 %v1718, %v1796
      %1798 = vmatmul.bf16.gmra.mxu0 %v1561
      %v1799 = vpop.f32.mrf.mxu0
      %v1800 = vadd.f32 %v1721, %v1799
      %v1801 = vpop.f32.mrf.mxu0
      %v1802 = vadd.f32 %v1723, %v1801
      %1803 = vmatmul.bf16.gmra.mxu0 %v1564
      %v1804 = vpop.f32.mrf.mxu0
      %v1805 = vadd.f32 %v1726, %v1804
      %v1806 = vpop.f32.mrf.mxu0
      %v1807 = vadd.f32 %v1728, %v1806
      %1808 = vmatmul.bf16.gmra.mxu0 %v1567
      %v1809 = vpop.f32.mrf.mxu0
      %v1810 = vadd.f32 %v1731, %v1809
      %v1811 = vpop.f32.mrf.mxu0
      %v1812 = vadd.f32 %v1733, %v1811
      %1813 = vmatmul.bf16.gmra.mxu0 %v1570
      %v1814 = vpop.f32.mrf.mxu0
      %v1815 = vadd.f32 %v1736, %v1814
      %v1816 = vpop.f32.mrf.mxu0
      %v1817 = vadd.f32 %v1738, %v1816
      %1818 = vdwg.mxu0
      %1819 = vmatpush.bf16.msra.mxu0 %v1436
      %1820 = vmatpush.bf16.msra.mxu0 %v1433
      %1821 = vmatpush.bf16.msra.mxu0 %v1430
      %1822 = vmatpush.bf16.msra.mxu0 %v1427
      %1823 = vmatpush.bf16.msra.mxu0 %v1424
      %1824 = vmatpush.bf16.msra.mxu0 %v1421
      %1825 = vmatpush.bf16.msra.mxu0 %v1418
      %1826 = vmatpush.bf16.msra.mxu0 %v1415
      %1827 = vmatmul.bf16.gmra.mxu0 %v556
      %v1828 = vpop.f32.mrf.mxu0
      %v1829 = vadd.f32 0.0, %v1828
      %v1830 = vpop.f32.mrf.mxu0
      %v1831 = vadd.f32 0.0, %v1830
      %1832 = vmatmul.bf16.gmra.mxu0 %v559
      %v1833 = vpop.f32.mrf.mxu0
      %v1834 = vadd.f32 0.0, %v1833
      %v1835 = vpop.f32.mrf.mxu0
      %v1836 = vadd.f32 0.0, %v1835
      %1837 = vmatmul.bf16.gmra.mxu0 %v562
      %v1838 = vpop.f32.mrf.mxu0
      %v1839 = vadd.f32 0.0, %v1838
      %v1840 = vpop.f32.mrf.mxu0
      %v1841 = vadd.f32 0.0, %v1840
      %1842 = vmatmul.bf16.gmra.mxu0 %v1112
      %v1843 = vpop.f32.mrf.mxu0
      %v1844 = vadd.f32 0.0, %v1843
      %v1845 = vpop.f32.mrf.mxu0
      %v1846 = vadd.f32 0.0, %v1845
      %1847 = vmatmul.bf16.gmra.mxu0 %v1048
      %v1848 = vpop.f32.mrf.mxu0
      %v1849 = vadd.f32 0.0, %v1848
      %v1850 = vpop.f32.mrf.mxu0
      %v1851 = vadd.f32 0.0, %v1850
      %1852 = vmatmul.bf16.gmra.mxu0 %v1054
      %v1853 = vpop.f32.mrf.mxu0
      %v1854 = vadd.f32 0.0, %v1853
      %v1855 = vpop.f32.mrf.mxu0
      %v1856 = vadd.f32 0.0, %v1855
      %1857 = vmatmul.bf16.gmra.mxu0 %v1060
      %v1858 = vpop.f32.mrf.mxu0
      %v1859 = vadd.f32 0.0, %v1858
      %v1860 = vpop.f32.mrf.mxu0
      %v1861 = vadd.f32 0.0, %v1860
      %1862 = vmatmul.bf16.gmra.mxu0 %v841
      %v1863 = vpop.f32.mrf.mxu0
      %v1864 = vadd.f32 0.0, %v1863
      %v1865 = vpop.f32.mrf.mxu0
      %v1866 = vadd.f32 0.0, %v1865
      %1867 = vmatmul.bf16.gmra.mxu0 %v844
      %v1868 = vpop.f32.mrf.mxu0
      %v1869 = vadd.f32 0.0, %v1868
      %v1870 = vpop.f32.mrf.mxu0
      %v1871 = vadd.f32 0.0, %v1870
      %1872 = vmatmul.bf16.gmra.mxu0 %v847
      %v1873 = vpop.f32.mrf.mxu0
      %v1874 = vadd.f32 0.0, %v1873
      %v1875 = vpop.f32.mrf.mxu0
      %v1876 = vadd.f32 0.0, %v1875
      %1877 = vmatmul.bf16.gmra.mxu0 %v1120
      %v1878 = vpop.f32.mrf.mxu0
      %v1879 = vadd.f32 0.0, %v1878
      %v1880 = vpop.f32.mrf.mxu0
      %v1881 = vadd.f32 0.0, %v1880
      %1882 = vmatmul.bf16.gmra.mxu0 %v1087
      %v1883 = vpop.f32.mrf.mxu0
      %v1884 = vadd.f32 0.0, %v1883
      %v1885 = vpop.f32.mrf.mxu0
      %v1886 = vadd.f32 0.0, %v1885
      %1887 = vmatmul.bf16.gmra.mxu0 %v1093
      %v1888 = vpop.f32.mrf.mxu0
      %v1889 = vadd.f32 0.0, %v1888
      %v1890 = vpop.f32.mrf.mxu0
      %v1891 = vadd.f32 0.0, %v1890
      %1892 = vmatmul.bf16.gmra.mxu0 %v1099
      %v1893 = vpop.f32.mrf.mxu0
      %v1894 = vadd.f32 0.0, %v1893
      %v1895 = vpop.f32.mrf.mxu0
      %v1896 = vadd.f32 0.0, %v1895
      %1897 = vdwg.mxu0
      %1898 = vmatpush.bf16.msra.mxu0 %v1460
      %1899 = vmatpush.bf16.msra.mxu0 %v1457
      %1900 = vmatpush.bf16.msra.mxu0 %v1454
      %1901 = vmatpush.bf16.msra.mxu0 %v1451
      %1902 = vmatpush.bf16.msra.mxu0 %v1448
      %1903 = vmatpush.bf16.msra.mxu0 %v1445
      %1904 = vmatpush.bf16.msra.mxu0 %v1442
      %1905 = vmatpush.bf16.msra.mxu0 %v1439
      %1906 = vmatmul.bf16.gmra.mxu0 %v595
      %v1907 = vpop.f32.mrf.mxu0
      %v1908 = vadd.f32 %v1829, %v1907
      %v1909 = vpop.f32.mrf.mxu0
      %v1910 = vadd.f32 %v1831, %v1909
      %1911 = vmatmul.bf16.gmra.mxu0 %v598
      %v1912 = vpop.f32.mrf.mxu0
      %v1913 = vadd.f32 %v1834, %v1912
      %v1914 = vpop.f32.mrf.mxu0
      %v1915 = vadd.f32 %v1836, %v1914
      %1916 = vmatmul.bf16.gmra.mxu0 %v601
      %v1917 = vpop.f32.mrf.mxu0
      %v1918 = vadd.f32 %v1839, %v1917
      %v1919 = vpop.f32.mrf.mxu0
      %v1920 = vadd.f32 %v1841, %v1919
      %1921 = vmatmul.bf16.gmra.mxu0 %v1115
      %v1922 = vpop.f32.mrf.mxu0
      %v1923 = vadd.f32 %v1844, %v1922
      %v1924 = vpop.f32.mrf.mxu0
      %v1925 = vadd.f32 %v1846, %v1924
      %1926 = vmatmul.bf16.gmra.mxu0 %v1050
      %v1927 = vpop.f32.mrf.mxu0
      %v1928 = vadd.f32 %v1849, %v1927
      %v1929 = vpop.f32.mrf.mxu0
      %v1930 = vadd.f32 %v1851, %v1929
      %1931 = vmatmul.bf16.gmra.mxu0 %v1056
      %v1932 = vpop.f32.mrf.mxu0
      %v1933 = vadd.f32 %v1854, %v1932
      %v1934 = vpop.f32.mrf.mxu0
      %v1935 = vadd.f32 %v1856, %v1934
      %1936 = vmatmul.bf16.gmra.mxu0 %v1062
      %v1937 = vpop.f32.mrf.mxu0
      %v1938 = vadd.f32 %v1859, %v1937
      %v1939 = vpop.f32.mrf.mxu0
      %v1940 = vadd.f32 %v1861, %v1939
      %1941 = vmatmul.bf16.gmra.mxu0 %v876
      %v1942 = vpop.f32.mrf.mxu0
      %v1943 = vadd.f32 %v1864, %v1942
      %v1944 = vpop.f32.mrf.mxu0
      %v1945 = vadd.f32 %v1866, %v1944
      %1946 = vmatmul.bf16.gmra.mxu0 %v879
      %v1947 = vpop.f32.mrf.mxu0
      %v1948 = vadd.f32 %v1869, %v1947
      %v1949 = vpop.f32.mrf.mxu0
      %v1950 = vadd.f32 %v1871, %v1949
      %1951 = vmatmul.bf16.gmra.mxu0 %v882
      %v1952 = vpop.f32.mrf.mxu0
      %v1953 = vadd.f32 %v1874, %v1952
      %v1954 = vpop.f32.mrf.mxu0
      %v1955 = vadd.f32 %v1876, %v1954
      %1956 = vmatmul.bf16.gmra.mxu0 %v1123
      %v1957 = vpop.f32.mrf.mxu0
      %v1958 = vadd.f32 %v1879, %v1957
      %v1959 = vpop.f32.mrf.mxu0
      %v1960 = vadd.f32 %v1881, %v1959
      %1961 = vmatmul.bf16.gmra.mxu0 %v1089
      %v1962 = vpop.f32.mrf.mxu0
      %v1963 = vadd.f32 %v1884, %v1962
      %v1964 = vpop.f32.mrf.mxu0
      %v1965 = vadd.f32 %v1886, %v1964
      %1966 = vmatmul.bf16.gmra.mxu0 %v1095
      %v1967 = vpop.f32.mrf.mxu0
      %v1968 = vadd.f32 %v1889, %v1967
      %v1969 = vpop.f32.mrf.mxu0
      %v1970 = vadd.f32 %v1891, %v1969
      %1971 = vmatmul.bf16.gmra.mxu0 %v1101
      %v1972 = vpop.f32.mrf.mxu0
      %v1973 = vadd.f32 %v1894, %v1972
      %v1974 = vpop.f32.mrf.mxu0
      %v1975 = vadd.f32 %v1896, %v1974
      %1976 = vdwg.mxu0
      %1977 = vmatpush.bf16.msra.mxu0 0
      %1978 = vmatpush.bf16.msra.mxu0 0
      %1979 = vmatpush.bf16.msra.mxu0 0
      %1980 = vmatpush.bf16.msra.mxu0 %v1577
      %1981 = vmatpush.bf16.msra.mxu0 %v1472
      %1982 = vmatpush.bf16.msra.mxu0 %v1469
      %1983 = vmatpush.bf16.msra.mxu0 %v1466
      %1984 = vmatpush.bf16.msra.mxu0 %v1463
      %1985 = vmatmul.bf16.gmra.mxu0 %v1538
      %v1986 = vpop.f32.mrf.mxu0
      %v1987 = vadd.f32 %v1908, %v1986
      %v1988 = vpop.f32.mrf.mxu0
      %v1989 = vadd.f32 %v1910, %v1988
      %1990 = vmatmul.bf16.gmra.mxu0 %v1540
      %v1991 = vpop.f32.mrf.mxu0
      %v1992 = vadd.f32 %v1913, %v1991
      %v1993 = vpop.f32.mrf.mxu0
      %v1994 = vadd.f32 %v1915, %v1993
      %1995 = vmatmul.bf16.gmra.mxu0 %v1542
      %v1996 = vpop.f32.mrf.mxu0
      %v1997 = vadd.f32 %v1918, %v1996
      %v1998 = vpop.f32.mrf.mxu0
      %v1999 = vadd.f32 %v1920, %v1998
      %2000 = vmatmul.bf16.gmra.mxu0 %v1544
      %v2001 = vpop.f32.mrf.mxu0
      %v2002 = vadd.f32 %v1923, %v2001
      %v2003 = vpop.f32.mrf.mxu0
      %v2004 = vadd.f32 %v1925, %v2003
      %2005 = vmatmul.bf16.gmra.mxu0 %v1547
      %v2006 = vpop.f32.mrf.mxu0
      %v2007 = vadd.f32 %v1928, %v2006
      %v2008 = vpop.f32.mrf.mxu0
      %v2009 = vadd.f32 %v1930, %v2008
      %2010 = vmatmul.bf16.gmra.mxu0 %v1550
      %v2011 = vpop.f32.mrf.mxu0
      %v2012 = vadd.f32 %v1933, %v2011
      %v2013 = vpop.f32.mrf.mxu0
      %v2014 = vadd.f32 %v1935, %v2013
      %2015 = vmatmul.bf16.gmra.mxu0 %v1553
      %v2016 = vpop.f32.mrf.mxu0
      %v2017 = vadd.f32 %v1938, %v2016
      %v2018 = vpop.f32.mrf.mxu0
      %v2019 = vadd.f32 %v1940, %v2018
      %2020 = vmatmul.bf16.gmra.mxu0 %v1555
      %v2021 = vpop.f32.mrf.mxu0
      %v2022 = vadd.f32 %v1943, %v2021
      %v2023 = vpop.f32.mrf.mxu0
      %v2024 = vadd.f32 %v1945, %v2023
      %2025 = vmatmul.bf16.gmra.mxu0 %v1557
      %v2026 = vpop.f32.mrf.mxu0
      %v2027 = vadd.f32 %v1948, %v2026
      %v2028 = vpop.f32.mrf.mxu0
      %v2029 = vadd.f32 %v1950, %v2028
      %2030 = vmatmul.bf16.gmra.mxu0 %v1559
      %v2031 = vpop.f32.mrf.mxu0
      %v2032 = vadd.f32 %v1953, %v2031
      %v2033 = vpop.f32.mrf.mxu0
      %v2034 = vadd.f32 %v1955, %v2033
      %2035 = vmatmul.bf16.gmra.mxu0 %v1561
      %v2036 = vpop.f32.mrf.mxu0
      %v2037 = vadd.f32 %v1958, %v2036
      %v2038 = vpop.f32.mrf.mxu0
      %v2039 = vadd.f32 %v1960, %v2038
      %2040 = vmatmul.bf16.gmra.mxu0 %v1564
      %v2041 = vpop.f32.mrf.mxu0
      %v2042 = vadd.f32 %v1963, %v2041
      %v2043 = vpop.f32.mrf.mxu0
      %v2044 = vadd.f32 %v1965, %v2043
      %2045 = vmatmul.bf16.gmra.mxu0 %v1567
      %v2046 = vpop.f32.mrf.mxu0
      %v2047 = vadd.f32 %v1968, %v2046
      %v2048 = vpop.f32.mrf.mxu0
      %v2049 = vadd.f32 %v1970, %v2048
      %2050 = vmatmul.bf16.gmra.mxu0 %v1570
      %v2051 = vpop.f32.mrf.mxu0
      %v2052 = vadd.f32 %v1973, %v2051
      %v2053 = vpop.f32.mrf.mxu0
      %v2054 = vadd.f32 %v1975, %v2053
      %2055 = vdwg.mxu0
      %2056 = vmatpush.bf16.msra.mxu0 %v1437
      %2057 = vmatpush.bf16.msra.mxu0 %v1434
      %2058 = vmatpush.bf16.msra.mxu0 %v1431
      %2059 = vmatpush.bf16.msra.mxu0 %v1428
      %2060 = vmatpush.bf16.msra.mxu0 %v1425
      %2061 = vmatpush.bf16.msra.mxu0 %v1422
      %2062 = vmatpush.bf16.msra.mxu0 %v1419
      %2063 = vmatpush.bf16.msra.mxu0 %v1416
      %2064 = vmatmul.bf16.gmra.mxu0 %v556
      %v2065 = vpop.f32.mrf.mxu0
      %v2066 = vadd.f32 0.0, %v2065
      %v2067 = vpop.f32.mrf.mxu0
      %v2068 = vadd.f32 0.0, %v2067
      %2069 = vmatmul.bf16.gmra.mxu0 %v559
      %v2070 = vpop.f32.mrf.mxu0
      %v2071 = vadd.f32 0.0, %v2070
      %v2072 = vpop.f32.mrf.mxu0
      %v2073 = vadd.f32 0.0, %v2072
      %2074 = vmatmul.bf16.gmra.mxu0 %v562
      %v2075 = vpop.f32.mrf.mxu0
      %v2076 = vadd.f32 0.0, %v2075
      %v2077 = vpop.f32.mrf.mxu0
      %v2078 = vadd.f32 0.0, %v2077
      %2079 = vmatmul.bf16.gmra.mxu0 %v1112
      %v2080 = vpop.f32.mrf.mxu0
      %v2081 = vadd.f32 0.0, %v2080
      %v2082 = vpop.f32.mrf.mxu0
      %v2083 = vadd.f32 0.0, %v2082
      %2084 = vmatmul.bf16.gmra.mxu0 %v1048
      %v2085 = vpop.f32.mrf.mxu0
      %v2086 = vadd.f32 0.0, %v2085
      %v2087 = vpop.f32.mrf.mxu0
      %v2088 = vadd.f32 0.0, %v2087
      %2089 = vmatmul.bf16.gmra.mxu0 %v1054
      %v2090 = vpop.f32.mrf.mxu0
      %v2091 = vadd.f32 0.0, %v2090
      %v2092 = vpop.f32.mrf.mxu0
      %v2093 = vadd.f32 0.0, %v2092
      %2094 = vmatmul.bf16.gmra.mxu0 %v1060
      %v2095 = vpop.f32.mrf.mxu0
      %v2096 = vadd.f32 0.0, %v2095
      %v2097 = vpop.f32.mrf.mxu0
      %v2098 = vadd.f32 0.0, %v2097
      %2099 = vmatmul.bf16.gmra.mxu0 %v841
      %v2100 = vpop.f32.mrf.mxu0
      %v2101 = vadd.f32 0.0, %v2100
      %v2102 = vpop.f32.mrf.mxu0
      %v2103 = vadd.f32 0.0, %v2102
      %2104 = vmatmul.bf16.gmra.mxu0 %v844
      %v2105 = vpop.f32.mrf.mxu0
      %v2106 = vadd.f32 0.0, %v2105
      %v2107 = vpop.f32.mrf.mxu0
      %v2108 = vadd.f32 0.0, %v2107
      %2109 = vmatmul.bf16.gmra.mxu0 %v847
      %v2110 = vpop.f32.mrf.mxu0
      %v2111 = vadd.f32 0.0, %v2110
      %v2112 = vpop.f32.mrf.mxu0
      %v2113 = vadd.f32 0.0, %v2112
      %2114 = vmatmul.bf16.gmra.mxu0 %v1120
      %v2115 = vpop.f32.mrf.mxu0
      %v2116 = vadd.f32 0.0, %v2115
      %v2117 = vpop.f32.mrf.mxu0
      %v2118 = vadd.f32 0.0, %v2117
      %2119 = vmatmul.bf16.gmra.mxu0 %v1087
      %v2120 = vpop.f32.mrf.mxu0
      %v2121 = vadd.f32 0.0, %v2120
      %v2122 = vpop.f32.mrf.mxu0
      %v2123 = vadd.f32 0.0, %v2122
      %2124 = vmatmul.bf16.gmra.mxu0 %v1093
      %v2125 = vpop.f32.mrf.mxu0
      %v2126 = vadd.f32 0.0, %v2125
      %v2127 = vpop.f32.mrf.mxu0
      %v2128 = vadd.f32 0.0, %v2127
      %2129 = vmatmul.bf16.gmra.mxu0 %v1099
      %v2130 = vpop.f32.mrf.mxu0
      %v2131 = vadd.f32 0.0, %v2130
      %v2132 = vpop.f32.mrf.mxu0
      %v2133 = vadd.f32 0.0, %v2132
      %2134 = vdwg.mxu0
      %2135 = vmatpush.bf16.msra.mxu0 %v1461
      %2136 = vmatpush.bf16.msra.mxu0 %v1458
      %2137 = vmatpush.bf16.msra.mxu0 %v1455
      %2138 = vmatpush.bf16.msra.mxu0 %v1452
      %2139 = vmatpush.bf16.msra.mxu0 %v1449
      %2140 = vmatpush.bf16.msra.mxu0 %v1446
      %2141 = vmatpush.bf16.msra.mxu0 %v1443
      %2142 = vmatpush.bf16.msra.mxu0 %v1440
      %2143 = vmatmul.bf16.gmra.mxu0 %v595
      %v2144 = vpop.f32.mrf.mxu0
      %v2145 = vadd.f32 %v2066, %v2144
      %v2146 = vpop.f32.mrf.mxu0
      %v2147 = vadd.f32 %v2068, %v2146
      %2148 = vmatmul.bf16.gmra.mxu0 %v598
      %v2149 = vpop.f32.mrf.mxu0
      %v2150 = vadd.f32 %v2071, %v2149
      %v2151 = vpop.f32.mrf.mxu0
      %v2152 = vadd.f32 %v2073, %v2151
      %2153 = vmatmul.bf16.gmra.mxu0 %v601
      %v2154 = vpop.f32.mrf.mxu0
      %v2155 = vadd.f32 %v2076, %v2154
      %v2156 = vpop.f32.mrf.mxu0
      %v2157 = vadd.f32 %v2078, %v2156
      %2158 = vmatmul.bf16.gmra.mxu0 %v1115
      %v2159 = vpop.f32.mrf.mxu0
      %v2160 = vadd.f32 %v2081, %v2159
      %v2161 = vpop.f32.mrf.mxu0
      %v2162 = vadd.f32 %v2083, %v2161
      %2163 = vmatmul.bf16.gmra.mxu0 %v1050
      %v2164 = vpop.f32.mrf.mxu0
      %v2165 = vadd.f32 %v2086, %v2164
      %v2166 = vpop.f32.mrf.mxu0
      %v2167 = vadd.f32 %v2088, %v2166
      %2168 = vmatmul.bf16.gmra.mxu0 %v1056
      %v2169 = vpop.f32.mrf.mxu0
      %v2170 = vadd.f32 %v2091, %v2169
      %v2171 = vpop.f32.mrf.mxu0
      %v2172 = vadd.f32 %v2093, %v2171
      %2173 = vmatmul.bf16.gmra.mxu0 %v1062
      %v2174 = vpop.f32.mrf.mxu0
      %v2175 = vadd.f32 %v2096, %v2174
      %v2176 = vpop.f32.mrf.mxu0
      %v2177 = vadd.f32 %v2098, %v2176
      %2178 = vmatmul.bf16.gmra.mxu0 %v876
      %v2179 = vpop.f32.mrf.mxu0
      %v2180 = vadd.f32 %v2101, %v2179
      %v2181 = vpop.f32.mrf.mxu0
      %v2182 = vadd.f32 %v2103, %v2181
      %2183 = vmatmul.bf16.gmra.mxu0 %v879
      %v2184 = vpop.f32.mrf.mxu0
      %v2185 = vadd.f32 %v2106, %v2184
      %v2186 = vpop.f32.mrf.mxu0
      %v2187 = vadd.f32 %v2108, %v2186
      %2188 = vmatmul.bf16.gmra.mxu0 %v882
      %v2189 = vpop.f32.mrf.mxu0
      %v2190 = vadd.f32 %v2111, %v2189
      %v2191 = vpop.f32.mrf.mxu0
      %v2192 = vadd.f32 %v2113, %v2191
      %2193 = vmatmul.bf16.gmra.mxu0 %v1123
      %v2194 = vpop.f32.mrf.mxu0
      %v2195 = vadd.f32 %v2116, %v2194
      %v2196 = vpop.f32.mrf.mxu0
      %v2197 = vadd.f32 %v2118, %v2196
      %2198 = vmatmul.bf16.gmra.mxu0 %v1089
      %v2199 = vpop.f32.mrf.mxu0
      %v2200 = vadd.f32 %v2121, %v2199
      %v2201 = vpop.f32.mrf.mxu0
      %v2202 = vadd.f32 %v2123, %v2201
      %2203 = vmatmul.bf16.gmra.mxu0 %v1095
      %v2204 = vpop.f32.mrf.mxu0
      %v2205 = vadd.f32 %v2126, %v2204
      %v2206 = vpop.f32.mrf.mxu0
      %v2207 = vadd.f32 %v2128, %v2206
      %2208 = vmatmul.bf16.gmra.mxu0 %v1101
      %v2209 = vpop.f32.mrf.mxu0
      %v2210 = vadd.f32 %v2131, %v2209
      %v2211 = vpop.f32.mrf.mxu0
      %v2212 = vadd.f32 %v2133, %v2211
      %2213 = vdwg.mxu0
      %2214 = vmatpush.bf16.msra.mxu0 0
      %2215 = vmatpush.bf16.msra.mxu0 0
      %2216 = vmatpush.bf16.msra.mxu0 0
      %2217 = vmatpush.bf16.msra.mxu0 %v1580
      %2218 = vmatpush.bf16.msra.mxu0 %v1473
      %2219 = vmatpush.bf16.msra.mxu0 %v1470
      %2220 = vmatpush.bf16.msra.mxu0 %v1467
      %2221 = vmatpush.bf16.msra.mxu0 %v1464
      %2222 = vmatmul.bf16.gmra.mxu0 %v1538
      %v2223 = vpop.f32.mrf.mxu0
      %v2224 = vadd.f32 %v2145, %v2223
      %v2225 = vpop.f32.mrf.mxu0
      %v2226 = vadd.f32 %v2147, %v2225
      %2227 = vmatmul.bf16.gmra.mxu0 %v1540
      %v2228 = vpop.f32.mrf.mxu0
      %v2229 = vadd.f32 %v2150, %v2228
      %v2230 = vpop.f32.mrf.mxu0
      %v2231 = vadd.f32 %v2152, %v2230
      %2232 = vmatmul.bf16.gmra.mxu0 %v1542
      %v2233 = vpop.f32.mrf.mxu0
      %v2234 = vadd.f32 %v2155, %v2233
      %v2235 = vpop.f32.mrf.mxu0
      %v2236 = vadd.f32 %v2157, %v2235
      %2237 = vmatmul.bf16.gmra.mxu0 %v1544
      %v2238 = vpop.f32.mrf.mxu0
      %v2239 = vadd.f32 %v2160, %v2238
      %v2240 = vpop.f32.mrf.mxu0
      %v2241 = vadd.f32 %v2162, %v2240
      %2242 = vmatmul.bf16.gmra.mxu0 %v1547
      %v2243 = vpop.f32.mrf.mxu0
      %v2244 = vadd.f32 %v2165, %v2243
      %v2245 = vpop.f32.mrf.mxu0
      %v2246 = vadd.f32 %v2167, %v2245
      %2247 = vmatmul.bf16.gmra.mxu0 %v1550
      %v2248 = vpop.f32.mrf.mxu0
      %v2249 = vadd.f32 %v2170, %v2248
      %v2250 = vpop.f32.mrf.mxu0
      %v2251 = vadd.f32 %v2172, %v2250
      %2252 = vmatmul.bf16.gmra.mxu0 %v1553
      %v2253 = vpop.f32.mrf.mxu0
      %v2254 = vadd.f32 %v2175, %v2253
      %v2255 = vpop.f32.mrf.mxu0
      %v2256 = vadd.f32 %v2177, %v2255
      %2257 = vmatmul.bf16.gmra.mxu0 %v1555
      %v2258 = vpop.f32.mrf.mxu0
      %v2259 = vadd.f32 %v2180, %v2258
      %v2260 = vpop.f32.mrf.mxu0
      %v2261 = vadd.f32 %v2182, %v2260
      %2262 = vmatmul.bf16.gmra.mxu0 %v1557
      %v2263 = vpop.f32.mrf.mxu0
      %v2264 = vadd.f32 %v2185, %v2263
      %v2265 = vpop.f32.mrf.mxu0
      %v2266 = vadd.f32 %v2187, %v2265
      %2267 = vmatmul.bf16.gmra.mxu0 %v1559
      %v2268 = vpop.f32.mrf.mxu0
      %v2269 = vadd.f32 %v2190, %v2268
      %v2270 = vpop.f32.mrf.mxu0
      %v2271 = vadd.f32 %v2192, %v2270
      %2272 = vmatmul.bf16.gmra.mxu0 %v1561
      %v2273 = vpop.f32.mrf.mxu0
      %v2274 = vadd.f32 %v2195, %v2273
      %v2275 = vpop.f32.mrf.mxu0
      %v2276 = vadd.f32 %v2197, %v2275
      %2277 = vmatmul.bf16.gmra.mxu0 %v1564
      %v2278 = vpop.f32.mrf.mxu0
      %v2279 = vadd.f32 %v2200, %v2278
      %v2280 = vpop.f32.mrf.mxu0
      %v2281 = vadd.f32 %v2202, %v2280
      %2282 = vmatmul.bf16.gmra.mxu0 %v1567
      %v2283 = vpop.f32.mrf.mxu0
      %v2284 = vadd.f32 %v2205, %v2283
      %v2285 = vpop.f32.mrf.mxu0
      %v2286 = vadd.f32 %v2207, %v2285
      %2287 = vmatmul.bf16.gmra.mxu0 %v1570
      %v2288 = vpop.f32.mrf.mxu0
      %v2289 = vadd.f32 %v2210, %v2288
      %v2290 = vpop.f32.mrf.mxu0
      %v2291 = vadd.f32 %v2212, %v2290
      %2292 = vdwg.mxu0
      %v2293 = vmax.f32 %v1750, %v1767
      %v2294 = vmax.f32 %v1987, %v2004
      %v2295 = vmax.f32 %v2224, %v2241
      %v2296 = vmax.f32 %v1752, %v1770
      %v2297 = vmax.f32 %v1989, %v2007
      %v2298 = vmax.f32 %v2226, %v2244
      %v2299 = vmax.f32 %v1755, %v1772
      %v2300 = vmax.f32 %v1992, %v2009
      %v2301 = vmax.f32 %v2229, %v2246
      %v2302 = vmax.f32 %v1757, %v1775
      %v2303 = vmax.f32 %v1994, %v2012
      %v2304 = vmax.f32 %v2231, %v2249
      %v2305 = vmax.f32 %v1760, %v1777
      %v2306 = vmax.f32 %v1997, %v2014
      %v2307 = vmax.f32 %v2234, %v2251
      %v2308 = vmax.f32 %v1762, %v1780
      %v2309 = vmax.f32 %v1999, %v2017
      %v2310 = vmax.f32 %v2236, %v2254
      %v2311 = vmax.f32 %v1765, %v1782
      %v2312 = vmax.f32 %v2002, %v2019
      %v2313 = vmax.f32 %v2239, %v2256
      %2328 = vrot.lane.b32.xlu0 %v2294, 116
      %v2329 = vpop.permute.xlu0 %2328
      %2330 = vrot.lane.b32.xlu0 %v2295, 116
      %v2331 = vpop.permute.xlu0 %2330
      %2332 = vrot.lane.b32.xlu0 %v2297, 116
      %v2333 = vpop.permute.xlu0 %2332
      %2334 = vrot.lane.b32.xlu0 %v2298, 116
      %v2335 = vpop.permute.xlu0 %2334
      %2336 = vrot.lane.b32.xlu0 %v2300, 116
      %v2337 = vpop.permute.xlu0 %2336
      %2338 = vrot.lane.b32.xlu0 %v2301, 116
      %v2339 = vpop.permute.xlu0 %2338
      %2340 = vrot.lane.b32.xlu0 %v2303, 116
      %v2341 = vpop.permute.xlu0 %2340
      %2342 = vrot.lane.b32.xlu0 %v2304, 116
      %v2343 = vpop.permute.xlu0 %2342
      %2344 = vrot.lane.b32.xlu0 %v2306, 116
      %v2345 = vpop.permute.xlu0 %2344
      %2346 = vrot.lane.b32.xlu0 %v2307, 116
      %v2347 = vpop.permute.xlu0 %2346
      %2348 = vrot.lane.b32.xlu0 %v2309, 116
      %v2349 = vpop.permute.xlu0 %2348
      %2350 = vrot.lane.b32.xlu0 %v2310, 116
      %v2351 = vpop.permute.xlu0 %2350
      %2352 = vrot.lane.b32.xlu0 %v2312, 116
      %v2353 = vpop.permute.xlu0 %2352
      %2354 = vrot.lane.b32.xlu0 %v2313, 116
      %v2355 = vpop.permute.xlu0 %2354
      %vm2356 = vcmask 949248
      %v2357 = vsel %vm2356, %v2329, %v2331
      %v2358 = vsel %vm2356, %v2333, %v2335
      %v2359 = vsel %vm2356, %v2337, %v2339
      %v2360 = vsel %vm2356, %v2341, %v2343
      %v2361 = vsel %vm2356, %v2345, %v2347
      %v2362 = vsel %vm2356, %v2349, %v2351
      %v2363 = vsel %vm2356, %v2353, %v2355
      %v2378 = vmax.f32 %v2293, %v2357
      %v2379 = vmax.f32 %v2294, %v2331
      %v2380 = vmax.f32 %v2296, %v2358
      %v2381 = vmax.f32 %v2297, %v2335
      %v2382 = vmax.f32 %v2299, %v2359
      %v2383 = vmax.f32 %v2300, %v2339
      %v2384 = vmax.f32 %v2302, %v2360
      %v2385 = vmax.f32 %v2303, %v2343
      %v2386 = vmax.f32 %v2305, %v2361
      %v2387 = vmax.f32 %v2306, %v2347
      %v2388 = vmax.f32 %v2308, %v2362
      %v2389 = vmax.f32 %v2309, %v2351
      %v2390 = vmax.f32 %v2311, %v2363
      %v2391 = vmax.f32 %v2312, %v2355
      %v2392 = vld [vmem:[%s2] sm:$0x3]
      %v2394 = vperm.slane %v2392, 0
      %v2395 = vperm.slane %v2392, 1
      %v2398 = vadd.f32 %v2378, %v2394
      %v2399 = vadd.f32 %v2379, %v2395
      %v2400 = vadd.f32 %v2380, %v2394
      %v2401 = vadd.f32 %v2381, %v2395
      %v2402 = vadd.f32 %v2382, %v2394
      %v2403 = vadd.f32 %v2383, %v2395
      %v2404 = vadd.f32 %v2384, %v2394
      %v2405 = vadd.f32 %v2385, %v2395
      %v2406 = vadd.f32 %v2386, %v2394
      %v2407 = vadd.f32 %v2387, %v2395
      %v2408 = vadd.f32 %v2388, %v2394
      %v2409 = vadd.f32 %v2389, %v2395
      %v2410 = vadd.f32 %v2390, %v2394
      %v2411 = vadd.f32 %v2391, %v2395
      %v2412 = vmax.f32 %v2398, 0.0
      %v2413 = vmax.f32 %v2399, 0.0
      %v2414 = vmax.f32 %v2400, 0.0
      %v2415 = vmax.f32 %v2401, 0.0
      %v2416 = vmax.f32 %v2402, 0.0
      %v2417 = vmax.f32 %v2403, 0.0
      %v2418 = vmax.f32 %v2404, 0.0
      %v2419 = vmax.f32 %v2405, 0.0
      %v2420 = vmax.f32 %v2406, 0.0
      %v2421 = vmax.f32 %v2407, 0.0
      %v2422 = vmax.f32 %v2408, 0.0
      %v2423 = vmax.f32 %v2409, 0.0
      %v2424 = vmax.f32 %v2410, 0.0
      %v2425 = vmax.f32 %v2411, 0.0
      %v2426 = vpack.c.bf16 %v2413, %v2412
      %v2427 = vpack.c.bf16 %v2415, %v2414
      %v2428 = vpack.c.bf16 %v2417, %v2416
      %v2429 = vpack.c.bf16 %v2419, %v2418
      %v2430 = vpack.c.bf16 %v2421, %v2420
      %v2431 = vpack.c.bf16 %v2423, %v2422
      %v2432 = vpack.c.bf16 %v2425, %v2424
      %v2433 = vmax.f32 %v1785, %v1802
      %v2434 = vmax.f32 %v2022, %v2039
      %v2435 = vmax.f32 %v2259, %v2276
      %v2436 = vmax.f32 %v1787, %v1805
      %v2437 = vmax.f32 %v2024, %v2042
      %v2438 = vmax.f32 %v2261, %v2279
      %v2439 = vmax.f32 %v1790, %v1807
      %v2440 = vmax.f32 %v2027, %v2044
      %v2441 = vmax.f32 %v2264, %v2281
      %v2442 = vmax.f32 %v1792, %v1810
      %v2443 = vmax.f32 %v2029, %v2047
      %v2444 = vmax.f32 %v2266, %v2284
      %v2445 = vmax.f32 %v1795, %v1812
      %v2446 = vmax.f32 %v2032, %v2049
      %v2447 = vmax.f32 %v2269, %v2286
      %v2448 = vmax.f32 %v1797, %v1815
      %v2449 = vmax.f32 %v2034, %v2052
      %v2450 = vmax.f32 %v2271, %v2289
      %v2451 = vmax.f32 %v1800, %v1817
      %v2452 = vmax.f32 %v2037, %v2054
      %v2453 = vmax.f32 %v2274, %v2291
      %2468 = vrot.lane.b32.xlu0 %v2434, 116
      %v2469 = vpop.permute.xlu0 %2468
      %2470 = vrot.lane.b32.xlu0 %v2435, 116
      %v2471 = vpop.permute.xlu0 %2470
      %2472 = vrot.lane.b32.xlu0 %v2437, 116
      %v2473 = vpop.permute.xlu0 %2472
      %2474 = vrot.lane.b32.xlu0 %v2438, 116
      %v2475 = vpop.permute.xlu0 %2474
      %2476 = vrot.lane.b32.xlu0 %v2440, 116
      %v2477 = vpop.permute.xlu0 %2476
      %2478 = vrot.lane.b32.xlu0 %v2441, 116
      %v2479 = vpop.permute.xlu0 %2478
      %2480 = vrot.lane.b32.xlu0 %v2443, 116
      %v2481 = vpop.permute.xlu0 %2480
      %2482 = vrot.lane.b32.xlu0 %v2444, 116
      %v2483 = vpop.permute.xlu0 %2482
      %2484 = vrot.lane.b32.xlu0 %v2446, 116
      %v2485 = vpop.permute.xlu0 %2484
      %2486 = vrot.lane.b32.xlu0 %v2447, 116
      %v2487 = vpop.permute.xlu0 %2486
      %2488 = vrot.lane.b32.xlu0 %v2449, 116
      %v2489 = vpop.permute.xlu0 %2488
      %2490 = vrot.lane.b32.xlu0 %v2450, 116
      %v2491 = vpop.permute.xlu0 %2490
      %2492 = vrot.lane.b32.xlu0 %v2452, 116
      %v2493 = vpop.permute.xlu0 %2492
      %2494 = vrot.lane.b32.xlu0 %v2453, 116
      %v2495 = vpop.permute.xlu0 %2494
      %v2496 = vsel %vm2356, %v2469, %v2471
      %v2497 = vsel %vm2356, %v2473, %v2475
      %v2498 = vsel %vm2356, %v2477, %v2479
      %v2499 = vsel %vm2356, %v2481, %v2483
      %v2500 = vsel %vm2356, %v2485, %v2487
      %v2501 = vsel %vm2356, %v2489, %v2491
      %v2502 = vsel %vm2356, %v2493, %v2495
      %v2517 = vmax.f32 %v2433, %v2496
      %v2518 = vmax.f32 %v2434, %v2471
      %v2519 = vmax.f32 %v2436, %v2497
      %v2520 = vmax.f32 %v2437, %v2475
      %v2521 = vmax.f32 %v2439, %v2498
      %v2522 = vmax.f32 %v2440, %v2479
      %v2523 = vmax.f32 %v2442, %v2499
      %v2524 = vmax.f32 %v2443, %v2483
      %v2525 = vmax.f32 %v2445, %v2500
      %v2526 = vmax.f32 %v2446, %v2487
      %v2527 = vmax.f32 %v2448, %v2501
      %v2528 = vmax.f32 %v2449, %v2491
      %v2529 = vmax.f32 %v2451, %v2502
      %v2530 = vmax.f32 %v2452, %v2495
      %v2531 = vadd.f32 %v2517, %v2394
      %v2532 = vadd.f32 %v2518, %v2395
      %v2533 = vadd.f32 %v2519, %v2394
      %v2534 = vadd.f32 %v2520, %v2395
      %v2535 = vadd.f32 %v2521, %v2394
      %v2536 = vadd.f32 %v2522, %v2395
      %v2537 = vadd.f32 %v2523, %v2394
      %v2538 = vadd.f32 %v2524, %v2395
      %v2539 = vadd.f32 %v2525, %v2394
      %v2540 = vadd.f32 %v2526, %v2395
      %v2541 = vadd.f32 %v2527, %v2394
      %v2542 = vadd.f32 %v2528, %v2395
      %v2543 = vadd.f32 %v2529, %v2394
      %v2544 = vadd.f32 %v2530, %v2395
      %v2545 = vmax.f32 %v2531, 0.0
      %v2546 = vmax.f32 %v2532, 0.0
      %v2547 = vmax.f32 %v2533, 0.0
      %v2548 = vmax.f32 %v2534, 0.0
      %v2549 = vmax.f32 %v2535, 0.0
      %v2550 = vmax.f32 %v2536, 0.0
      %v2551 = vmax.f32 %v2537, 0.0
      %v2552 = vmax.f32 %v2538, 0.0
      %v2553 = vmax.f32 %v2539, 0.0
      %v2554 = vmax.f32 %v2540, 0.0
      %v2555 = vmax.f32 %v2541, 0.0
      %v2556 = vmax.f32 %v2542, 0.0
      %v2557 = vmax.f32 %v2543, 0.0
      %v2558 = vmax.f32 %v2544, 0.0
      %v2559 = vpack.c.bf16 %v2546, %v2545
      %v2560 = vpack.c.bf16 %v2548, %v2547
      %v2561 = vpack.c.bf16 %v2550, %v2549
      %v2562 = vpack.c.bf16 %v2552, %v2551
      %v2563 = vpack.c.bf16 %v2554, %v2553
      %v2564 = vpack.c.bf16 %v2556, %v2555
      %v2565 = vpack.c.bf16 %v2558, %v2557
      %v2571 = vunpack.c.l.b16 %v2426
      %v2572 = vunpack.c.h.b16 %v2426
      %v2573 = vunpack.c.l.b16 %v2427
      %v2574 = vunpack.c.h.b16 %v2427
      %v2575 = vunpack.c.l.b16 %v2428
      %v2576 = vunpack.c.h.b16 %v2428
      %v2577 = vunpack.c.l.b16 %v2429
      %v2578 = vunpack.c.h.b16 %v2429
      %v2579 = vunpack.c.l.b16 %v2430
      %v2580 = vunpack.c.h.b16 %v2430
      %v2581 = vpack.c.b16 %v2573, %v2571
      %v2582 = vpack.c.b16 %v2574, %v2572
      %v2583 = vpack.c.b16 %v2577, %v2575
      %v2584 = vpack.c.b16 %v2578, %v2576
      %v2585 = vpack.c.b16 %v2579, %v2579
      %v2586 = vpack.c.b16 %v2580, %v2580
      %v2594 = vunpack.c.l.b16 %v2559
      %v2595 = vunpack.c.h.b16 %v2559
      %v2596 = vunpack.c.l.b16 %v2560
      %v2597 = vunpack.c.h.b16 %v2560
      %v2598 = vunpack.c.l.b16 %v2561
      %v2599 = vunpack.c.h.b16 %v2561
      %v2600 = vunpack.c.l.b16 %v2562
      %v2601 = vunpack.c.h.b16 %v2562
      %v2602 = vunpack.c.l.b16 %v2563
      %v2603 = vunpack.c.h.b16 %v2563
      %v2604 = vpack.c.b16 %v2596, %v2594
      %v2605 = vpack.c.b16 %v2597, %v2595
      %v2606 = vpack.c.b16 %v2600, %v2598
      %v2607 = vpack.c.b16 %v2601, %v2599
      %v2608 = vpack.c.b16 %v2602, %v2602
      %v2609 = vpack.c.b16 %v2603, %v2603
      %2610 = vrot.lane.b32.xlu0 %v2604, 12
      %v2611 = vpop.permute.xlu0 %2610
      %2612 = vrot.lane.b32.xlu0 %v2605, 12
      %v2613 = vpop.permute.xlu0 %2612
      %2614 = vrot.lane.b32.xlu0 %v2606, 12
      %v2615 = vpop.permute.xlu0 %2614
      %2616 = vrot.lane.b32.xlu0 %v2607, 12
      %v2617 = vpop.permute.xlu0 %2616
      %2618 = vrot.lane.b32.xlu0 %v2608, 12
      %v2619 = vpop.permute.xlu0 %2618
      %2620 = vrot.lane.b32.xlu0 %v2609, 12
      %v2621 = vpop.permute.xlu0 %2620
      %vm2622 = vcmask 97280
      %v2623 = vsel %vm2622, %v2611, %v2613
      %v2624 = vsel %vm2622, %v2615, %v2617
      %v2625 = vsel %vm2622, %v2619, %v2621
      %v2627 = vunpack.c.l.b16 %v2431
      %v2628 = vunpack.c.h.b16 %v2431
      %v2629 = vpack.c.b16 %v2575, %v2573
      %v2630 = vpack.c.b16 %v2576, %v2574
      %v2631 = vpack.c.b16 %v2579, %v2577
      %v2632 = vpack.c.b16 %v2580, %v2578
      %v2633 = vpack.c.b16 %v2627, %v2627
      %v2634 = vpack.c.b16 %v2628, %v2628
      %2635 = vrot.lane.b32.xlu0 %v2629, 24
      %v2636 = vpop.permute.xlu0 %2635
      %2637 = vrot.lane.b32.xlu0 %v2630, 24
      %v2638 = vpop.permute.xlu0 %2637
      %2639 = vrot.lane.b32.xlu0 %v2631, 24
      %v2640 = vpop.permute.xlu0 %2639
      %2641 = vrot.lane.b32.xlu0 %v2632, 24
      %v2642 = vpop.permute.xlu0 %2641
      %2643 = vrot.lane.b32.xlu0 %v2633, 24
      %v2644 = vpop.permute.xlu0 %2643
      %2645 = vrot.lane.b32.xlu0 %v2634, 24
      %v2646 = vpop.permute.xlu0 %2645
      %vm2647 = vcmask 195584
      %v2648 = vsel %vm2647, %v2636, %v2638
      %v2649 = vsel %vm2647, %v2640, %v2642
      %v2650 = vsel %vm2647, %v2644, %v2646
      %v2652 = vunpack.c.l.b16 %v2564
      %v2653 = vunpack.c.h.b16 %v2564
      %v2654 = vpack.c.b16 %v2598, %v2596
      %v2655 = vpack.c.b16 %v2599, %v2597
      %v2656 = vpack.c.b16 %v2602, %v2600
      %v2657 = vpack.c.b16 %v2603, %v2601
      %v2658 = vpack.c.b16 %v2652, %v2652
      %v2659 = vpack.c.b16 %v2653, %v2653
      %2660 = vrot.lane.b32.xlu0 %v2654, 36
      %v2661 = vpop.permute.xlu0 %2660
      %2662 = vrot.lane.b32.xlu0 %v2655, 36
      %v2663 = vpop.permute.xlu0 %2662
      %2664 = vrot.lane.b32.xlu0 %v2656, 36
      %v2665 = vpop.permute.xlu0 %2664
      %2666 = vrot.lane.b32.xlu0 %v2657, 36
      %v2667 = vpop.permute.xlu0 %2666
      %2668 = vrot.lane.b32.xlu0 %v2658, 36
      %v2669 = vpop.permute.xlu0 %2668
      %2670 = vrot.lane.b32.xlu0 %v2659, 36
      %v2671 = vpop.permute.xlu0 %2670
      %vm2672 = vcmask 293888
      %v2673 = vsel %vm2672, %v2661, %v2663
      %v2674 = vsel %vm2672, %v2665, %v2667
      %v2675 = vsel %vm2672, %v2669, %v2671
      %v2677 = vunpack.c.l.b16 %v2432
      %v2678 = vunpack.c.h.b16 %v2432
      %v2679 = vpack.c.b16 %v2627, %v2579
      %v2680 = vpack.c.b16 %v2628, %v2580
      %v2681 = vpack.c.b16 %v2677, %v2677
      %v2682 = vpack.c.b16 %v2678, %v2678
      %2683 = vrot.lane.b32.xlu0 %v2583, 48
      %v2684 = vpop.permute.xlu0 %2683
      %2685 = vrot.lane.b32.xlu0 %v2584, 48
      %v2686 = vpop.permute.xlu0 %2685
      %2687 = vrot.lane.b32.xlu0 %v2679, 48
      %v2688 = vpop.permute.xlu0 %2687
      %2689 = vrot.lane.b32.xlu0 %v2680, 48
      %v2690 = vpop.permute.xlu0 %2689
      %2691 = vrot.lane.b32.xlu0 %v2681, 48
      %v2692 = vpop.permute.xlu0 %2691
      %2693 = vrot.lane.b32.xlu0 %v2682, 48
      %v2694 = vpop.permute.xlu0 %2693
      %vm2695 = vcmask 392192
      %v2696 = vsel %vm2695, %v2684, %v2686
      %v2697 = vsel %vm2695, %v2688, %v2690
      %v2698 = vsel %vm2695, %v2692, %v2694
      %vm2699 = vcmask 97280
      %v2702 = vsel %vm2699, %v2582, %v2611
      %v2706 = vsel %vm2699, %v2584, %v2615
      %v2710 = vsel %vm2699, %v2586, %v2619
      %vm2711 = vcmask 195584
      %v2714 = vsel %vm2711, %v2623, %v2636
      %v2718 = vsel %vm2711, %v2624, %v2640
      %v2722 = vsel %vm2711, %v2625, %v2644
      %v2725 = vsel %vm532, %v2648, %v2661
      %v2729 = vsel %vm532, %v2649, %v2665
      %v2733 = vsel %vm532, %v2650, %v2669
      %vm2734 = vcmask 392192
      %v2737 = vsel %vm2734, %v2673, %v2684
      %v2741 = vsel %vm2734, %v2674, %v2688
      %v2745 = vsel %vm2734, %v2675, %v2692
      %2746 = vrot.lane.b32.xlu0 %v2629, 12
      %v2747 = vpop.permute.xlu0 %2746
      %2748 = vrot.lane.b32.xlu0 %v2630, 12
      %v2749 = vpop.permute.xlu0 %2748
      %2750 = vrot.lane.b32.xlu0 %v2631, 12
      %v2751 = vpop.permute.xlu0 %2750
      %2752 = vrot.lane.b32.xlu0 %v2632, 12
      %v2753 = vpop.permute.xlu0 %2752
      %2754 = vrot.lane.b32.xlu0 %v2633, 12
      %v2755 = vpop.permute.xlu0 %2754
      %2756 = vrot.lane.b32.xlu0 %v2634, 12
      %v2757 = vpop.permute.xlu0 %2756
      %v2758 = vsel %vm2622, %v2747, %v2749
      %v2759 = vsel %vm2622, %v2751, %v2753
      %v2760 = vsel %vm2622, %v2755, %v2757
      %2761 = vrot.lane.b32.xlu0 %v2654, 24
      %v2762 = vpop.permute.xlu0 %2761
      %2763 = vrot.lane.b32.xlu0 %v2655, 24
      %v2764 = vpop.permute.xlu0 %2763
      %2765 = vrot.lane.b32.xlu0 %v2656, 24
      %v2766 = vpop.permute.xlu0 %2765
      %2767 = vrot.lane.b32.xlu0 %v2657, 24
      %v2768 = vpop.permute.xlu0 %2767
      %2769 = vrot.lane.b32.xlu0 %v2658, 24
      %v2770 = vpop.permute.xlu0 %2769
      %2771 = vrot.lane.b32.xlu0 %v2659, 24
      %v2772 = vpop.permute.xlu0 %2771
      %v2773 = vsel %vm2647, %v2762, %v2764
      %v2774 = vsel %vm2647, %v2766, %v2768
      %v2775 = vsel %vm2647, %v2770, %v2772
      %2776 = vrot.lane.b32.xlu0 %v2583, 36
      %v2777 = vpop.permute.xlu0 %2776
      %2778 = vrot.lane.b32.xlu0 %v2584, 36
      %v2779 = vpop.permute.xlu0 %2778
      %2780 = vrot.lane.b32.xlu0 %v2679, 36
      %v2781 = vpop.permute.xlu0 %2780
      %2782 = vrot.lane.b32.xlu0 %v2680, 36
      %v2783 = vpop.permute.xlu0 %2782
      %2784 = vrot.lane.b32.xlu0 %v2681, 36
      %v2785 = vpop.permute.xlu0 %2784
      %2786 = vrot.lane.b32.xlu0 %v2682, 36
      %v2787 = vpop.permute.xlu0 %2786
      %v2788 = vsel %vm2672, %v2777, %v2779
      %v2789 = vsel %vm2672, %v2781, %v2783
      %v2790 = vsel %vm2672, %v2785, %v2787
      %v2792 = vunpack.c.l.b16 %v2565
      %v2793 = vunpack.c.h.b16 %v2565
      %v2794 = vpack.c.b16 %v2652, %v2602
      %v2795 = vpack.c.b16 %v2653, %v2603
      %v2796 = vpack.c.b16 %v2792, %v2792
      %v2797 = vpack.c.b16 %v2793, %v2793
      %2798 = vrot.lane.b32.xlu0 %v2606, 48
      %v2799 = vpop.permute.xlu0 %2798
      %2800 = vrot.lane.b32.xlu0 %v2607, 48
      %v2801 = vpop.permute.xlu0 %2800
      %2802 = vrot.lane.b32.xlu0 %v2794, 48
      %v2803 = vpop.permute.xlu0 %2802
      %2804 = vrot.lane.b32.xlu0 %v2795, 48
      %v2805 = vpop.permute.xlu0 %2804
      %2806 = vrot.lane.b32.xlu0 %v2796, 48
      %v2807 = vpop.permute.xlu0 %2806
      %2808 = vrot.lane.b32.xlu0 %v2797, 48
      %v2809 = vpop.permute.xlu0 %2808
      %v2810 = vsel %vm2695, %v2799, %v2801
      %v2811 = vsel %vm2695, %v2803, %v2805
      %v2812 = vsel %vm2695, %v2807, %v2809
      %v2815 = vsel %vm2699, %v2605, %v2747
      %v2818 = vsel %vm2699, %v2607, %v2751
      %v2821 = vsel %vm2699, %v2609, %v2755
      %v2824 = vsel %vm2711, %v2758, %v2762
      %v2827 = vsel %vm2711, %v2759, %v2766
      %v2830 = vsel %vm2711, %v2760, %v2770
      %v2833 = vsel %vm532, %v2773, %v2777
      %v2836 = vsel %vm532, %v2774, %v2781
      %v2839 = vsel %vm532, %v2775, %v2785
      %v2842 = vsel %vm2734, %v2788, %v2799
      %v2845 = vsel %vm2734, %v2789, %v2803
      %v2848 = vsel %vm2734, %v2790, %v2807
      %v2861 = vrot.slane %v2604, 4
      %v2862 = vrot.slane %v2815, 4
      %v2863 = vrot.slane %v2824, 4
      %v2864 = vrot.slane %v2833, 4
      %v2865 = vrot.slane %v2842, 4
      %v2866 = vrot.slane %v2810, 4
      %v2867 = vrot.slane %v2606, 4
      %v2868 = vsel %vm1043, %v2861, %v2867
      %v2869 = vrot.slane %v2818, 4
      %v2870 = vsel %vm1043, %v2862, %v2869
      %v2871 = vrot.slane %v2827, 4
      %v2872 = vsel %vm1043, %v2863, %v2871
      %v2873 = vrot.slane %v2836, 4
      %v2874 = vsel %vm1043, %v2864, %v2873
      %v2875 = vrot.slane %v2845, 4
      %v2876 = vsel %vm1043, %v2865, %v2875
      %v2877 = vrot.slane %v2811, 4
      %v2878 = vsel %vm1043, %v2866, %v2877
      %v2879 = vrot.slane %v2608, 4
      %v2880 = vsel %vm1043, %v2867, %v2879
      %v2881 = vrot.slane %v2821, 4
      %v2882 = vsel %vm1043, %v2869, %v2881
      %v2883 = vrot.slane %v2830, 4
      %v2884 = vsel %vm1043, %v2871, %v2883
      %v2885 = vrot.slane %v2839, 4
      %v2886 = vsel %vm1043, %v2873, %v2885
      %v2887 = vrot.slane %v2848, 4
      %v2888 = vsel %vm1043, %v2875, %v2887
      %v2889 = vrot.slane %v2812, 4
      %v2890 = vsel %vm1043, %v2877, %v2889
      %v2903 = vsel %vm1110, %v2585, %v2861
      %v2906 = vsel %vm1110, %v2710, %v2862
      %v2909 = vsel %vm1110, %v2722, %v2863
      %v2912 = vsel %vm1110, %v2733, %v2864
      %v2915 = vsel %vm1110, %v2745, %v2865
      %v2919 = vsel %vm1110, %v2698, %v2866
      %v2920 = vld [vmem:[%s3] sm:$0xff]
      %v2921 = vld [vmem:[%s3 + $0x8] sm:$0xff]
      %v2922 = vld [vmem:[%s3 + $0x10] sm:$0xff]
      %v2923 = vld [vmem:[%s3 + $0x18] sm:$0xff]
      %v2924 = vld [vmem:[%s3 + $0x20] sm:$0xff]
      %v2925 = vld [vmem:[%s3 + $0x28] sm:$0xff]
      %v2926 = vld [vmem:[%s3 + $0x30] sm:$0xff]
      %v2927 = vld [vmem:[%s3 + $0x38] sm:$0xff]
      %v2928 = vld [vmem:[%s3 + $0x40] sm:$0xff]
      %v2929 = vld [vmem:[%s3 + $0x48] sm:$0xff]
      %v2930 = vld [vmem:[%s3 + $0x50] sm:$0xff]
      %v2931 = vld [vmem:[%s3 + $0x58] sm:$0xff]
      %v2932 = vld [vmem:[%s3 + $0x60] sm:$0xff]
      %v2933 = vld [vmem:[%s3 + $0x68] sm:$0xff]
      %v2934 = vld [vmem:[%s3 + $0x70] sm:$0xff]
      %v2935 = vld [vmem:[%s3 + $0x78] sm:$0xff]
      %v2936 = vld [vmem:[%s3 + $0x80] sm:$0xff]
      %v2937 = vld [vmem:[%s3 + $0x88] sm:$0xff]
      %v2938 = vld [vmem:[%s3 + $0x90] sm:$0xff]
      %v2939 = vld [vmem:[%s3 + $0x98] sm:$0xff]
      %v2940 = vld [vmem:[%s3 + $0xa0] sm:$0xff]
      %v2941 = vld [vmem:[%s3 + $0xa8] sm:$0xff]
      %v2942 = vld [vmem:[%s3 + $0xb0] sm:$0xff]
      %v2943 = vld [vmem:[%s3 + $0xb8] sm:$0xff]
      %v2944 = vld [vmem:[%s3 + $0xc0] sm:$0xff]
      %v2945 = vld [vmem:[%s3 + $0xc8] sm:$0xff]
      %v2946 = vld [vmem:[%s3 + $0xd0] sm:$0xff]
      %v2947 = vld [vmem:[%s3 + $0xd8] sm:$0xff]
      %v2948 = vld [vmem:[%s3 + $0xe0] sm:$0xff]
      %v2949 = vld [vmem:[%s3 + $0xe8] sm:$0xff]
      %v2950 = vld [vmem:[%s3 + $0xf0] sm:$0xff]
      %v2951 = vld [vmem:[%s3 + $0xf8] sm:$0xff]
      %v2952 = vld [vmem:[%s3 + $0x100] sm:$0xff]
      %v2953 = vld [vmem:[%s3 + $0x108] sm:$0xff]
      %v2954 = vld [vmem:[%s3 + $0x110] sm:$0xff]
      %v2955 = vld [vmem:[%s3 + $0x118] sm:$0xff]
      %v2956 = vld [vmem:[%s3 + $0x120] sm:$0xff]
      %v2957 = vld [vmem:[%s3 + $0x128] sm:$0xff]
      %v2958 = vld [vmem:[%s3 + $0x130] sm:$0xff]
      %v2959 = vld [vmem:[%s3 + $0x138] sm:$0xff]
      %v2960 = vld [vmem:[%s3 + $0x140] sm:$0xff]
      %v2961 = vld [vmem:[%s3 + $0x148] sm:$0xff]
      %v2962 = vld [vmem:[%s3 + $0x150] sm:$0xff]
      %v2963 = vld [vmem:[%s3 + $0x158] sm:$0xff]
      %v2964 = vld [vmem:[%s3 + $0x160] sm:$0xff]
      %v2965 = vld [vmem:[%s3 + $0x168] sm:$0xff]
      %v2966 = vld [vmem:[%s3 + $0x170] sm:$0xff]
      %v2967 = vld [vmem:[%s3 + $0x178] sm:$0xff]
      %v2968 = vld [vmem:[%s3 + $0x180] sm:$0xff]
      %v2969 = vld [vmem:[%s3 + $0x188] sm:$0xff]
      %v2970 = vld [vmem:[%s3 + $0x190] sm:$0xff]
      %v2971 = vld [vmem:[%s3 + $0x198] sm:$0xff]
      %v2972 = vld [vmem:[%s3 + $0x1a0] sm:$0xff]
      %v2973 = vld [vmem:[%s3 + $0x1a8] sm:$0xff]
      %v2974 = vld [vmem:[%s3 + $0x1b0] sm:$0xff]
      %v2975 = vld [vmem:[%s3 + $0x1b8] sm:$0xff]
      %v2976 = vld [vmem:[%s3 + $0x1c0] sm:$0xff]
      %v2977 = vld [vmem:[%s3 + $0x1c8] sm:$0xff]
      %v2978 = vld [vmem:[%s3 + $0x1d0] sm:$0xff]
      %v2979 = vld [vmem:[%s3 + $0x1d8] sm:$0xff]
      %v2980 = vld [vmem:[%s3 + $0x1e0] sm:$0xff]
      %v2981 = vld [vmem:[%s3 + $0x1e8] sm:$0xff]
      %v2982 = vld [vmem:[%s3 + $0x1f0] sm:$0xff]
      %v2983 = vld [vmem:[%s3 + $0x1f8] sm:$0xff]
      %v2984 = vld [vmem:[%s3 + $0x200] sm:$0xff]
      %v2985 = vld [vmem:[%s3 + $0x208] sm:$0xff]
      %v2986 = vld [vmem:[%s3 + $0x210] sm:$0xff]
      %v2987 = vld [vmem:[%s3 + $0x218] sm:$0xff]
      %v2988 = vld [vmem:[%s3 + $0x220] sm:$0xff]
      %v2989 = vld [vmem:[%s3 + $0x228] sm:$0xff]
      %v2990 = vld [vmem:[%s3 + $0x230] sm:$0xff]
      %v2991 = vld [vmem:[%s3 + $0x238] sm:$0xff]
      %v2992 = vld [vmem:[%s3 + $0x240] sm:$0xff]
      %v2993 = vld [vmem:[%s3 + $0x248] sm:$0xff]
      %v2994 = vld [vmem:[%s3 + $0x250] sm:$0xff]
      %v2995 = vld [vmem:[%s3 + $0x258] sm:$0xff]
      %v2996 = vld [vmem:[%s3 + $0x260] sm:$0xff]
      %v2997 = vld [vmem:[%s3 + $0x268] sm:$0xff]
      %v2998 = vld [vmem:[%s3 + $0x270] sm:$0xff]
      %v2999 = vld [vmem:[%s3 + $0x278] sm:$0xff]
      %v3000 = vld [vmem:[%s3 + $0x280] sm:$0xff]
      %v3001 = vld [vmem:[%s3 + $0x288] sm:$0xff]
      %v3002 = vld [vmem:[%s3 + $0x290] sm:$0xff]
      %v3003 = vld [vmem:[%s3 + $0x298] sm:$0xff]
      %v3004 = vld [vmem:[%s3 + $0x2a0] sm:$0xff]
      %v3005 = vld [vmem:[%s3 + $0x2a8] sm:$0xff]
      %v3006 = vld [vmem:[%s3 + $0x2b0] sm:$0xff]
      %v3007 = vld [vmem:[%s3 + $0x2b8] sm:$0x33]
      %v3096 = vunpack.c.l.b16 %v2920
      %v3097 = vunpack.c.h.b16 %v2920
      %v3098 = vunpack.c.l.b16 %v2921
      %v3099 = vunpack.c.h.b16 %v2921
      %v3100 = vunpack.c.l.b16 %v2922
      %v3101 = vunpack.c.h.b16 %v2922
      %v3102 = vunpack.c.l.b16 %v2923
      %v3103 = vunpack.c.h.b16 %v2923
      %v3104 = vunpack.c.l.b16 %v2924
      %v3105 = vunpack.c.h.b16 %v2924
      %v3106 = vunpack.c.l.b16 %v2925
      %v3107 = vunpack.c.h.b16 %v2925
      %v3108 = vunpack.c.l.b16 %v2926
      %v3109 = vunpack.c.h.b16 %v2926
      %v3110 = vunpack.c.l.b16 %v2927
      %v3111 = vunpack.c.h.b16 %v2927
      %v3112 = vunpack.c.l.b16 %v2928
      %v3113 = vunpack.c.h.b16 %v2928
      %v3114 = vunpack.c.l.b16 %v2929
      %v3115 = vunpack.c.h.b16 %v2929
      %v3116 = vunpack.c.l.b16 %v2930
      %v3117 = vunpack.c.h.b16 %v2930
      %v3118 = vunpack.c.l.b16 %v2931
      %v3119 = vunpack.c.h.b16 %v2931
      %v3120 = vunpack.c.l.b16 %v2932
      %v3121 = vunpack.c.h.b16 %v2932
      %v3122 = vunpack.c.l.b16 %v2933
      %v3123 = vunpack.c.h.b16 %v2933
      %v3124 = vunpack.c.l.b16 %v2934
      %v3125 = vunpack.c.h.b16 %v2934
      %v3126 = vunpack.c.l.b16 %v2935
      %v3127 = vunpack.c.h.b16 %v2935
      %v3128 = vunpack.c.l.b16 %v2936
      %v3129 = vunpack.c.h.b16 %v2936
      %v3130 = vunpack.c.l.b16 %v2937
      %v3131 = vunpack.c.h.b16 %v2937
      %v3132 = vunpack.c.l.b16 %v2938
      %v3133 = vunpack.c.h.b16 %v2938
      %v3134 = vunpack.c.l.b16 %v2939
      %v3135 = vunpack.c.h.b16 %v2939
      %v3136 = vunpack.c.l.b16 %v2940
      %v3137 = vunpack.c.h.b16 %v2940
      %v3138 = vunpack.c.l.b16 %v2941
      %v3139 = vunpack.c.h.b16 %v2941
      %v3140 = vunpack.c.l.b16 %v2942
      %v3141 = vunpack.c.h.b16 %v2942
      %v3142 = vunpack.c.l.b16 %v2943
      %v3143 = vunpack.c.h.b16 %v2943
      %v3144 = vunpack.c.l.b16 %v2944
      %v3145 = vunpack.c.h.b16 %v2944
      %v3146 = vunpack.c.l.b16 %v2945
      %v3147 = vunpack.c.h.b16 %v2945
      %v3148 = vunpack.c.l.b16 %v2946
      %v3149 = vunpack.c.h.b16 %v2946
      %v3150 = vunpack.c.l.b16 %v2947
      %v3151 = vunpack.c.h.b16 %v2947
      %v3152 = vunpack.c.l.b16 %v2948
      %v3153 = vunpack.c.h.b16 %v2948
      %v3154 = vunpack.c.l.b16 %v2949
      %v3155 = vunpack.c.h.b16 %v2949
      %v3156 = vunpack.c.l.b16 %v2950
      %v3157 = vunpack.c.h.b16 %v2950
      %v3158 = vunpack.c.l.b16 %v2951
      %v3159 = vunpack.c.h.b16 %v2951
      %v3160 = vunpack.c.l.b16 %v2952
      %v3161 = vunpack.c.h.b16 %v2952
      %v3162 = vunpack.c.l.b16 %v2953
      %v3163 = vunpack.c.h.b16 %v2953
      %v3164 = vunpack.c.l.b16 %v2954
      %v3165 = vunpack.c.h.b16 %v2954
      %v3166 = vunpack.c.l.b16 %v2955
      %v3167 = vunpack.c.h.b16 %v2955
      %v3168 = vunpack.c.l.b16 %v2956
      %v3169 = vunpack.c.h.b16 %v2956
      %v3170 = vunpack.c.l.b16 %v2957
      %v3171 = vunpack.c.h.b16 %v2957
      %v3172 = vunpack.c.l.b16 %v2958
      %v3173 = vunpack.c.h.b16 %v2958
      %v3174 = vunpack.c.l.b16 %v2959
      %v3175 = vunpack.c.h.b16 %v2959
      %v3176 = vunpack.c.l.b16 %v2960
      %v3177 = vunpack.c.h.b16 %v2960
      %v3178 = vunpack.c.l.b16 %v2961
      %v3179 = vunpack.c.h.b16 %v2961
      %v3180 = vunpack.c.l.b16 %v2962
      %v3181 = vunpack.c.h.b16 %v2962
      %v3182 = vunpack.c.l.b16 %v2963
      %v3183 = vunpack.c.h.b16 %v2963
      %v3184 = vunpack.c.l.b16 %v2964
      %v3185 = vunpack.c.h.b16 %v2964
      %v3186 = vunpack.c.l.b16 %v2965
      %v3187 = vunpack.c.h.b16 %v2965
      %v3188 = vunpack.c.l.b16 %v2966
      %v3189 = vunpack.c.h.b16 %v2966
      %v3190 = vunpack.c.l.b16 %v2967
      %v3191 = vunpack.c.h.b16 %v2967
      %v3192 = vunpack.c.l.b16 %v2968
      %v3193 = vunpack.c.h.b16 %v2968
      %v3194 = vunpack.c.l.b16 %v2969
      %v3195 = vunpack.c.h.b16 %v2969
      %v3196 = vunpack.c.l.b16 %v2970
      %v3197 = vunpack.c.h.b16 %v2970
      %v3198 = vunpack.c.l.b16 %v2971
      %v3199 = vunpack.c.h.b16 %v2971
      %v3200 = vunpack.c.l.b16 %v2972
      %v3201 = vunpack.c.h.b16 %v2972
      %v3202 = vunpack.c.l.b16 %v2973
      %v3203 = vunpack.c.h.b16 %v2973
      %v3204 = vunpack.c.l.b16 %v2974
      %v3205 = vunpack.c.h.b16 %v2974
      %v3206 = vunpack.c.l.b16 %v2975
      %v3207 = vunpack.c.h.b16 %v2975
      %v3208 = vunpack.c.l.b16 %v2976
      %v3209 = vunpack.c.h.b16 %v2976
      %v3210 = vunpack.c.l.b16 %v2977
      %v3211 = vunpack.c.h.b16 %v2977
      %v3212 = vunpack.c.l.b16 %v2978
      %v3213 = vunpack.c.h.b16 %v2978
      %v3214 = vunpack.c.l.b16 %v2979
      %v3215 = vunpack.c.h.b16 %v2979
      %v3216 = vunpack.c.l.b16 %v2980
      %v3217 = vunpack.c.h.b16 %v2980
      %v3218 = vunpack.c.l.b16 %v2981
      %v3219 = vunpack.c.h.b16 %v2981
      %v3220 = vunpack.c.l.b16 %v2982
      %v3221 = vunpack.c.h.b16 %v2982
      %v3222 = vunpack.c.l.b16 %v2983
      %v3223 = vunpack.c.h.b16 %v2983
      %v3224 = vunpack.c.l.b16 %v2984
      %v3225 = vunpack.c.h.b16 %v2984
      %v3226 = vunpack.c.l.b16 %v2985
      %v3227 = vunpack.c.h.b16 %v2985
      %v3228 = vunpack.c.l.b16 %v2986
      %v3229 = vunpack.c.h.b16 %v2986
      %v3230 = vunpack.c.l.b16 %v2987
      %v3231 = vunpack.c.h.b16 %v2987
      %v3232 = vunpack.c.l.b16 %v2988
      %v3233 = vunpack.c.h.b16 %v2988
      %v3234 = vunpack.c.l.b16 %v2989
      %v3235 = vunpack.c.h.b16 %v2989
      %v3236 = vunpack.c.l.b16 %v2990
      %v3237 = vunpack.c.h.b16 %v2990
      %v3238 = vunpack.c.l.b16 %v2991
      %v3239 = vunpack.c.h.b16 %v2991
      %v3240 = vunpack.c.l.b16 %v2992
      %v3241 = vunpack.c.h.b16 %v2992
      %v3242 = vunpack.c.l.b16 %v2993
      %v3243 = vunpack.c.h.b16 %v2993
      %v3244 = vunpack.c.l.b16 %v2994
      %v3245 = vunpack.c.h.b16 %v2994
      %v3246 = vunpack.c.l.b16 %v2995
      %v3247 = vunpack.c.h.b16 %v2995
      %v3248 = vunpack.c.l.b16 %v2996
      %v3249 = vunpack.c.h.b16 %v2996
      %v3250 = vunpack.c.l.b16 %v2997
      %v3251 = vunpack.c.h.b16 %v2997
      %v3252 = vunpack.c.l.b16 %v2998
      %v3253 = vunpack.c.h.b16 %v2998
      %v3254 = vunpack.c.l.b16 %v2999
      %v3255 = vunpack.c.h.b16 %v2999
      %v3256 = vunpack.c.l.b16 %v3000
      %v3257 = vunpack.c.h.b16 %v3000
      %v3258 = vunpack.c.l.b16 %v3001
      %v3259 = vunpack.c.h.b16 %v3001
      %v3260 = vunpack.c.l.b16 %v3002
      %v3261 = vunpack.c.h.b16 %v3002
      %v3262 = vunpack.c.l.b16 %v3003
      %v3263 = vunpack.c.h.b16 %v3003
      %v3264 = vunpack.c.l.b16 %v3004
      %v3265 = vunpack.c.h.b16 %v3004
      %v3266 = vunpack.c.l.b16 %v3005
      %v3267 = vunpack.c.h.b16 %v3005
      %v3268 = vunpack.c.l.b16 %v3006
      %v3269 = vunpack.c.h.b16 %v3006
      %v3270 = vunpack.c.l.b16 %v3007
      %v3271 = vunpack.c.h.b16 %v3007
      %v3272 = vpack.c.b16 %v3098, %v3096
      %v3273 = vpack.c.b16 %v3099, %v3097
      %v3274 = vpack.c.b16 %v3102, %v3100
      %v3275 = vpack.c.b16 %v3103, %v3101
      %v3276 = vpack.c.b16 %v3106, %v3104
      %v3277 = vpack.c.b16 %v3107, %v3105
      %v3278 = vpack.c.b16 %v3110, %v3108
      %v3279 = vpack.c.b16 %v3111, %v3109
      %v3280 = vpack.c.b16 %v3114, %v3112
      %v3281 = vpack.c.b16 %v3115, %v3113
      %v3282 = vpack.c.b16 %v3118, %v3116
      %v3283 = vpack.c.b16 %v3119, %v3117
      %v3284 = vpack.c.b16 %v3122, %v3120
      %v3285 = vpack.c.b16 %v3123, %v3121
      %v3286 = vpack.c.b16 %v3126, %v3124
      %v3287 = vpack.c.b16 %v3127, %v3125
      %v3288 = vpack.c.b16 %v3130, %v3128
      %v3289 = vpack.c.b16 %v3131, %v3129
      %v3290 = vpack.c.b16 %v3134, %v3132
      %v3291 = vpack.c.b16 %v3135, %v3133
      %v3292 = vpack.c.b16 %v3138, %v3136
      %v3293 = vpack.c.b16 %v3139, %v3137
      %v3294 = vpack.c.b16 %v3142, %v3140
      %v3295 = vpack.c.b16 %v3143, %v3141
      %v3296 = vpack.c.b16 %v3146, %v3144
      %v3297 = vpack.c.b16 %v3147, %v3145
      %v3298 = vpack.c.b16 %v3150, %v3148
      %v3299 = vpack.c.b16 %v3151, %v3149
      %v3300 = vpack.c.b16 %v3154, %v3152
      %v3301 = vpack.c.b16 %v3155, %v3153
      %v3302 = vpack.c.b16 %v3158, %v3156
      %v3303 = vpack.c.b16 %v3159, %v3157
      %v3304 = vpack.c.b16 %v3162, %v3160
      %v3305 = vpack.c.b16 %v3163, %v3161
      %v3306 = vpack.c.b16 %v3166, %v3164
      %v3307 = vpack.c.b16 %v3167, %v3165
      %v3308 = vpack.c.b16 %v3170, %v3168
      %v3309 = vpack.c.b16 %v3171, %v3169
      %v3310 = vpack.c.b16 %v3174, %v3172
      %v3311 = vpack.c.b16 %v3175, %v3173
      %v3312 = vpack.c.b16 %v3178, %v3176
      %v3313 = vpack.c.b16 %v3179, %v3177
      %v3314 = vpack.c.b16 %v3182, %v3180
      %v3315 = vpack.c.b16 %v3183, %v3181
      %v3316 = vpack.c.b16 %v3186, %v3184
      %v3317 = vpack.c.b16 %v3187, %v3185
      %v3318 = vpack.c.b16 %v3190, %v3188
      %v3319 = vpack.c.b16 %v3191, %v3189
      %v3320 = vpack.c.b16 %v3194, %v3192
      %v3321 = vpack.c.b16 %v3195, %v3193
      %v3322 = vpack.c.b16 %v3198, %v3196
      %v3323 = vpack.c.b16 %v3199, %v3197
      %v3324 = vpack.c.b16 %v3202, %v3200
      %v3325 = vpack.c.b16 %v3203, %v3201
      %v3326 = vpack.c.b16 %v3206, %v3204
      %v3327 = vpack.c.b16 %v3207, %v3205
      %v3328 = vpack.c.b16 %v3210, %v3208
      %v3329 = vpack.c.b16 %v3211, %v3209
      %v3330 = vpack.c.b16 %v3214, %v3212
      %v3331 = vpack.c.b16 %v3215, %v3213
      %v3332 = vpack.c.b16 %v3218, %v3216
      %v3333 = vpack.c.b16 %v3219, %v3217
      %v3334 = vpack.c.b16 %v3222, %v3220
      %v3335 = vpack.c.b16 %v3223, %v3221
      %v3336 = vpack.c.b16 %v3226, %v3224
      %v3337 = vpack.c.b16 %v3227, %v3225
      %v3338 = vpack.c.b16 %v3230, %v3228
      %v3339 = vpack.c.b16 %v3231, %v3229
      %v3340 = vpack.c.b16 %v3234, %v3232
      %v3341 = vpack.c.b16 %v3235, %v3233
      %v3342 = vpack.c.b16 %v3238, %v3236
      %v3343 = vpack.c.b16 %v3239, %v3237
      %v3344 = vpack.c.b16 %v3242, %v3240
      %v3345 = vpack.c.b16 %v3243, %v3241
      %v3346 = vpack.c.b16 %v3246, %v3244
      %v3347 = vpack.c.b16 %v3247, %v3245
      %v3348 = vpack.c.b16 %v3250, %v3248
      %v3349 = vpack.c.b16 %v3251, %v3249
      %v3350 = vpack.c.b16 %v3254, %v3252
      %v3351 = vpack.c.b16 %v3255, %v3253
      %v3352 = vpack.c.b16 %v3258, %v3256
      %v3353 = vpack.c.b16 %v3259, %v3257
      %v3354 = vpack.c.b16 %v3262, %v3260
      %v3355 = vpack.c.b16 %v3263, %v3261
      %v3356 = vpack.c.b16 %v3266, %v3264
      %v3357 = vpack.c.b16 %v3267, %v3265
      %v3358 = vpack.c.b16 %v3270, %v3268
      %v3359 = vpack.c.b16 %v3271, %v3269
      %vm3446 = vcmask 490496
      %v3448 = vsel %vm3446, %v2696, 0
      %v3451 = vsel %vm3446, %v2697, 0
      %v3453 = vsel %vm3446, %v2919, 0
      %v3456 = vsel %vm3446, %v2878, 0
      %v3459 = vsel %vm3446, %v2890, 0
      %vm3461 = vcmask 1045504
      %v3463 = vsel %vm3461, %v3358, 0
      %v3466 = vsel %vm3461, %v3359, 0
      %3468 = vmatpush.bf16.msra.mxu0 %v3286
      %3469 = vmatpush.bf16.msra.mxu0 %v3284
      %3470 = vmatpush.bf16.msra.mxu0 %v3282
      %3471 = vmatpush.bf16.msra.mxu0 %v3280
      %3472 = vmatpush.bf16.msra.mxu0 %v3278
      %3473 = vmatpush.bf16.msra.mxu0 %v3276
      %3474 = vmatpush.bf16.msra.mxu0 %v3274
      %3475 = vmatpush.bf16.msra.mxu0 %v3272
      %3476 = vmatmul.bf16.gmra.mxu0 %v2581
      %v3477 = vpop.f32.mrf.mxu0
      %v3478 = vadd.f32 0.0, %v3477
      %v3479 = vpop.f32.mrf.mxu0
      %v3480 = vadd.f32 0.0, %v3479
      %3481 = vmatmul.bf16.gmra.mxu0 %v2583
      %v3482 = vpop.f32.mrf.mxu0
      %v3483 = vadd.f32 0.0, %v3482
      %v3484 = vpop.f32.mrf.mxu0
      %v3485 = vadd.f32 0.0, %v3484
      %3486 = vmatmul.bf16.gmra.mxu0 %v2903
      %v3487 = vpop.f32.mrf.mxu0
      %v3488 = vadd.f32 0.0, %v3487
      %v3489 = vpop.f32.mrf.mxu0
      %v3490 = vadd.f32 0.0, %v3489
      %3491 = vmatmul.bf16.gmra.mxu0 %v2868
      %v3492 = vpop.f32.mrf.mxu0
      %v3493 = vadd.f32 0.0, %v3492
      %v3494 = vpop.f32.mrf.mxu0
      %v3495 = vadd.f32 0.0, %v3494
      %3496 = vmatmul.bf16.gmra.mxu0 %v2880
      %v3497 = vpop.f32.mrf.mxu0
      %v3498 = vadd.f32 0.0, %v3497
      %v3499 = vpop.f32.mrf.mxu0
      %v3500 = vadd.f32 0.0, %v3499
      %3501 = vdwg.mxu0
      %3502 = vmatpush.bf16.msra.mxu0 %v3302
      %3503 = vmatpush.bf16.msra.mxu0 %v3300
      %3504 = vmatpush.bf16.msra.mxu0 %v3298
      %3505 = vmatpush.bf16.msra.mxu0 %v3296
      %3506 = vmatpush.bf16.msra.mxu0 %v3294
      %3507 = vmatpush.bf16.msra.mxu0 %v3292
      %3508 = vmatpush.bf16.msra.mxu0 %v3290
      %3509 = vmatpush.bf16.msra.mxu0 %v3288
      %3510 = vmatmul.bf16.gmra.mxu0 %v2702
      %v3511 = vpop.f32.mrf.mxu0
      %v3512 = vadd.f32 %v3478, %v3511
      %v3513 = vpop.f32.mrf.mxu0
      %v3514 = vadd.f32 %v3480, %v3513
      %3515 = vmatmul.bf16.gmra.mxu0 %v2706
      %v3516 = vpop.f32.mrf.mxu0
      %v3517 = vadd.f32 %v3483, %v3516
      %v3518 = vpop.f32.mrf.mxu0
      %v3519 = vadd.f32 %v3485, %v3518
      %3520 = vmatmul.bf16.gmra.mxu0 %v2906
      %v3521 = vpop.f32.mrf.mxu0
      %v3522 = vadd.f32 %v3488, %v3521
      %v3523 = vpop.f32.mrf.mxu0
      %v3524 = vadd.f32 %v3490, %v3523
      %3525 = vmatmul.bf16.gmra.mxu0 %v2870
      %v3526 = vpop.f32.mrf.mxu0
      %v3527 = vadd.f32 %v3493, %v3526
      %v3528 = vpop.f32.mrf.mxu0
      %v3529 = vadd.f32 %v3495, %v3528
      %3530 = vmatmul.bf16.gmra.mxu0 %v2882
      %v3531 = vpop.f32.mrf.mxu0
      %v3532 = vadd.f32 %v3498, %v3531
      %v3533 = vpop.f32.mrf.mxu0
      %v3534 = vadd.f32 %v3500, %v3533
      %3535 = vdwg.mxu0
      %3536 = vmatpush.bf16.msra.mxu0 %v3318
      %3537 = vmatpush.bf16.msra.mxu0 %v3316
      %3538 = vmatpush.bf16.msra.mxu0 %v3314
      %3539 = vmatpush.bf16.msra.mxu0 %v3312
      %3540 = vmatpush.bf16.msra.mxu0 %v3310
      %3541 = vmatpush.bf16.msra.mxu0 %v3308
      %3542 = vmatpush.bf16.msra.mxu0 %v3306
      %3543 = vmatpush.bf16.msra.mxu0 %v3304
      %3544 = vmatmul.bf16.gmra.mxu0 %v2714
      %v3545 = vpop.f32.mrf.mxu0
      %v3546 = vadd.f32 %v3512, %v3545
      %v3547 = vpop.f32.mrf.mxu0
      %v3548 = vadd.f32 %v3514, %v3547
      %3549 = vmatmul.bf16.gmra.mxu0 %v2718
      %v3550 = vpop.f32.mrf.mxu0
      %v3551 = vadd.f32 %v3517, %v3550
      %v3552 = vpop.f32.mrf.mxu0
      %v3553 = vadd.f32 %v3519, %v3552
      %3554 = vmatmul.bf16.gmra.mxu0 %v2909
      %v3555 = vpop.f32.mrf.mxu0
      %v3556 = vadd.f32 %v3522, %v3555
      %v3557 = vpop.f32.mrf.mxu0
      %v3558 = vadd.f32 %v3524, %v3557
      %3559 = vmatmul.bf16.gmra.mxu0 %v2872
      %v3560 = vpop.f32.mrf.mxu0
      %v3561 = vadd.f32 %v3527, %v3560
      %v3562 = vpop.f32.mrf.mxu0
      %v3563 = vadd.f32 %v3529, %v3562
      %3564 = vmatmul.bf16.gmra.mxu0 %v2884
      %v3565 = vpop.f32.mrf.mxu0
      %v3566 = vadd.f32 %v3532, %v3565
      %v3567 = vpop.f32.mrf.mxu0
      %v3568 = vadd.f32 %v3534, %v3567
      %3569 = vdwg.mxu0
      %3570 = vmatpush.bf16.msra.mxu0 %v3334
      %3571 = vmatpush.bf16.msra.mxu0 %v3332
      %3572 = vmatpush.bf16.msra.mxu0 %v3330
      %3573 = vmatpush.bf16.msra.mxu0 %v3328
      %3574 = vmatpush.bf16.msra.mxu0 %v3326
      %3575 = vmatpush.bf16.msra.mxu0 %v3324
      %3576 = vmatpush.bf16.msra.mxu0 %v3322
      %3577 = vmatpush.bf16.msra.mxu0 %v3320
      %3578 = vmatmul.bf16.gmra.mxu0 %v2725
      %v3579 = vpop.f32.mrf.mxu0
      %v3580 = vadd.f32 %v3546, %v3579
      %v3581 = vpop.f32.mrf.mxu0
      %v3582 = vadd.f32 %v3548, %v3581
      %3583 = vmatmul.bf16.gmra.mxu0 %v2729
      %v3584 = vpop.f32.mrf.mxu0
      %v3585 = vadd.f32 %v3551, %v3584
      %v3586 = vpop.f32.mrf.mxu0
      %v3587 = vadd.f32 %v3553, %v3586
      %3588 = vmatmul.bf16.gmra.mxu0 %v2912
      %v3589 = vpop.f32.mrf.mxu0
      %v3590 = vadd.f32 %v3556, %v3589
      %v3591 = vpop.f32.mrf.mxu0
      %v3592 = vadd.f32 %v3558, %v3591
      %3593 = vmatmul.bf16.gmra.mxu0 %v2874
      %v3594 = vpop.f32.mrf.mxu0
      %v3595 = vadd.f32 %v3561, %v3594
      %v3596 = vpop.f32.mrf.mxu0
      %v3597 = vadd.f32 %v3563, %v3596
      %3598 = vmatmul.bf16.gmra.mxu0 %v2886
      %v3599 = vpop.f32.mrf.mxu0
      %v3600 = vadd.f32 %v3566, %v3599
      %v3601 = vpop.f32.mrf.mxu0
      %v3602 = vadd.f32 %v3568, %v3601
      %3603 = vdwg.mxu0
      %3604 = vmatpush.bf16.msra.mxu0 %v3350
      %3605 = vmatpush.bf16.msra.mxu0 %v3348
      %3606 = vmatpush.bf16.msra.mxu0 %v3346
      %3607 = vmatpush.bf16.msra.mxu0 %v3344
      %3608 = vmatpush.bf16.msra.mxu0 %v3342
      %3609 = vmatpush.bf16.msra.mxu0 %v3340
      %3610 = vmatpush.bf16.msra.mxu0 %v3338
      %3611 = vmatpush.bf16.msra.mxu0 %v3336
      %3612 = vmatmul.bf16.gmra.mxu0 %v2737
      %v3613 = vpop.f32.mrf.mxu0
      %v3614 = vadd.f32 %v3580, %v3613
      %v3615 = vpop.f32.mrf.mxu0
      %v3616 = vadd.f32 %v3582, %v3615
      %3617 = vmatmul.bf16.gmra.mxu0 %v2741
      %v3618 = vpop.f32.mrf.mxu0
      %v3619 = vadd.f32 %v3585, %v3618
      %v3620 = vpop.f32.mrf.mxu0
      %v3621 = vadd.f32 %v3587, %v3620
      %3622 = vmatmul.bf16.gmra.mxu0 %v2915
      %v3623 = vpop.f32.mrf.mxu0
      %v3624 = vadd.f32 %v3590, %v3623
      %v3625 = vpop.f32.mrf.mxu0
      %v3626 = vadd.f32 %v3592, %v3625
      %3627 = vmatmul.bf16.gmra.mxu0 %v2876
      %v3628 = vpop.f32.mrf.mxu0
      %v3629 = vadd.f32 %v3595, %v3628
      %v3630 = vpop.f32.mrf.mxu0
      %v3631 = vadd.f32 %v3597, %v3630
      %3632 = vmatmul.bf16.gmra.mxu0 %v2888
      %v3633 = vpop.f32.mrf.mxu0
      %v3634 = vadd.f32 %v3600, %v3633
      %v3635 = vpop.f32.mrf.mxu0
      %v3636 = vadd.f32 %v3602, %v3635
      %3637 = vdwg.mxu0
      %3638 = vmatpush.bf16.msra.mxu0 0
      %3639 = vmatpush.bf16.msra.mxu0 0
      %3640 = vmatpush.bf16.msra.mxu0 0
      %3641 = vmatpush.bf16.msra.mxu0 0
      %3642 = vmatpush.bf16.msra.mxu0 %v3463
      %3643 = vmatpush.bf16.msra.mxu0 %v3356
      %3644 = vmatpush.bf16.msra.mxu0 %v3354
      %3645 = vmatpush.bf16.msra.mxu0 %v3352
      %3646 = vmatmul.bf16.gmra.mxu0 %v3448
      %v3647 = vpop.f32.mrf.mxu0
      %v3648 = vadd.f32 %v3614, %v3647
      %v3649 = vpop.f32.mrf.mxu0
      %v3650 = vadd.f32 %v3616, %v3649
      %3651 = vmatmul.bf16.gmra.mxu0 %v3451
      %v3652 = vpop.f32.mrf.mxu0
      %v3653 = vadd.f32 %v3619, %v3652
      %v3654 = vpop.f32.mrf.mxu0
      %v3655 = vadd.f32 %v3621, %v3654
      %3656 = vmatmul.bf16.gmra.mxu0 %v3453
      %v3657 = vpop.f32.mrf.mxu0
      %v3658 = vadd.f32 %v3624, %v3657
      %v3659 = vpop.f32.mrf.mxu0
      %v3660 = vadd.f32 %v3626, %v3659
      %3661 = vmatmul.bf16.gmra.mxu0 %v3456
      %v3662 = vpop.f32.mrf.mxu0
      %v3663 = vadd.f32 %v3629, %v3662
      %v3664 = vpop.f32.mrf.mxu0
      %v3665 = vadd.f32 %v3631, %v3664
      %3666 = vmatmul.bf16.gmra.mxu0 %v3459
      %v3667 = vpop.f32.mrf.mxu0
      %v3668 = vadd.f32 %v3634, %v3667
      %v3669 = vpop.f32.mrf.mxu0
      %v3670 = vadd.f32 %v3636, %v3669
      %3671 = vdwg.mxu0
      %3672 = vmatpush.bf16.msra.mxu0 %v3287
      %3673 = vmatpush.bf16.msra.mxu0 %v3285
      %3674 = vmatpush.bf16.msra.mxu0 %v3283
      %3675 = vmatpush.bf16.msra.mxu0 %v3281
      %3676 = vmatpush.bf16.msra.mxu0 %v3279
      %3677 = vmatpush.bf16.msra.mxu0 %v3277
      %3678 = vmatpush.bf16.msra.mxu0 %v3275
      %3679 = vmatpush.bf16.msra.mxu0 %v3273
      %3680 = vmatmul.bf16.gmra.mxu0 %v2581
      %v3681 = vpop.f32.mrf.mxu0
      %v3682 = vadd.f32 0.0, %v3681
      %v3683 = vpop.f32.mrf.mxu0
      %v3684 = vadd.f32 0.0, %v3683
      %3685 = vmatmul.bf16.gmra.mxu0 %v2583
      %v3686 = vpop.f32.mrf.mxu0
      %v3687 = vadd.f32 0.0, %v3686
      %v3688 = vpop.f32.mrf.mxu0
      %v3689 = vadd.f32 0.0, %v3688
      %3690 = vmatmul.bf16.gmra.mxu0 %v2903
      %v3691 = vpop.f32.mrf.mxu0
      %v3692 = vadd.f32 0.0, %v3691
      %v3693 = vpop.f32.mrf.mxu0
      %v3694 = vadd.f32 0.0, %v3693
      %3695 = vmatmul.bf16.gmra.mxu0 %v2868
      %v3696 = vpop.f32.mrf.mxu0
      %v3697 = vadd.f32 0.0, %v3696
      %v3698 = vpop.f32.mrf.mxu0
      %v3699 = vadd.f32 0.0, %v3698
      %3700 = vmatmul.bf16.gmra.mxu0 %v2880
      %v3701 = vpop.f32.mrf.mxu0
      %v3702 = vadd.f32 0.0, %v3701
      %v3703 = vpop.f32.mrf.mxu0
      %v3704 = vadd.f32 0.0, %v3703
      %3705 = vdwg.mxu0
      %3706 = vmatpush.bf16.msra.mxu0 %v3303
      %3707 = vmatpush.bf16.msra.mxu0 %v3301
      %3708 = vmatpush.bf16.msra.mxu0 %v3299
      %3709 = vmatpush.bf16.msra.mxu0 %v3297
      %3710 = vmatpush.bf16.msra.mxu0 %v3295
      %3711 = vmatpush.bf16.msra.mxu0 %v3293
      %3712 = vmatpush.bf16.msra.mxu0 %v3291
      %3713 = vmatpush.bf16.msra.mxu0 %v3289
      %3714 = vmatmul.bf16.gmra.mxu0 %v2702
      %v3715 = vpop.f32.mrf.mxu0
      %v3716 = vadd.f32 %v3682, %v3715
      %v3717 = vpop.f32.mrf.mxu0
      %v3718 = vadd.f32 %v3684, %v3717
      %3719 = vmatmul.bf16.gmra.mxu0 %v2706
      %v3720 = vpop.f32.mrf.mxu0
      %v3721 = vadd.f32 %v3687, %v3720
      %v3722 = vpop.f32.mrf.mxu0
      %v3723 = vadd.f32 %v3689, %v3722
      %3724 = vmatmul.bf16.gmra.mxu0 %v2906
      %v3725 = vpop.f32.mrf.mxu0
      %v3726 = vadd.f32 %v3692, %v3725
      %v3727 = vpop.f32.mrf.mxu0
      %v3728 = vadd.f32 %v3694, %v3727
      %3729 = vmatmul.bf16.gmra.mxu0 %v2870
      %v3730 = vpop.f32.mrf.mxu0
      %v3731 = vadd.f32 %v3697, %v3730
      %v3732 = vpop.f32.mrf.mxu0
      %v3733 = vadd.f32 %v3699, %v3732
      %3734 = vmatmul.bf16.gmra.mxu0 %v2882
      %v3735 = vpop.f32.mrf.mxu0
      %v3736 = vadd.f32 %v3702, %v3735
      %v3737 = vpop.f32.mrf.mxu0
      %v3738 = vadd.f32 %v3704, %v3737
      %3739 = vdwg.mxu0
      %3740 = vmatpush.bf16.msra.mxu0 %v3319
      %3741 = vmatpush.bf16.msra.mxu0 %v3317
      %3742 = vmatpush.bf16.msra.mxu0 %v3315
      %3743 = vmatpush.bf16.msra.mxu0 %v3313
      %3744 = vmatpush.bf16.msra.mxu0 %v3311
      %3745 = vmatpush.bf16.msra.mxu0 %v3309
      %3746 = vmatpush.bf16.msra.mxu0 %v3307
      %3747 = vmatpush.bf16.msra.mxu0 %v3305
      %3748 = vmatmul.bf16.gmra.mxu0 %v2714
      %v3749 = vpop.f32.mrf.mxu0
      %v3750 = vadd.f32 %v3716, %v3749
      %v3751 = vpop.f32.mrf.mxu0
      %v3752 = vadd.f32 %v3718, %v3751
      %3753 = vmatmul.bf16.gmra.mxu0 %v2718
      %v3754 = vpop.f32.mrf.mxu0
      %v3755 = vadd.f32 %v3721, %v3754
      %v3756 = vpop.f32.mrf.mxu0
      %v3757 = vadd.f32 %v3723, %v3756
      %3758 = vmatmul.bf16.gmra.mxu0 %v2909
      %v3759 = vpop.f32.mrf.mxu0
      %v3760 = vadd.f32 %v3726, %v3759
      %v3761 = vpop.f32.mrf.mxu0
      %v3762 = vadd.f32 %v3728, %v3761
      %3763 = vmatmul.bf16.gmra.mxu0 %v2872
      %v3764 = vpop.f32.mrf.mxu0
      %v3765 = vadd.f32 %v3731, %v3764
      %v3766 = vpop.f32.mrf.mxu0
      %v3767 = vadd.f32 %v3733, %v3766
      %3768 = vmatmul.bf16.gmra.mxu0 %v2884
      %v3769 = vpop.f32.mrf.mxu0
      %v3770 = vadd.f32 %v3736, %v3769
      %v3771 = vpop.f32.mrf.mxu0
      %v3772 = vadd.f32 %v3738, %v3771
      %3773 = vdwg.mxu0
      %3774 = vmatpush.bf16.msra.mxu0 %v3335
      %3775 = vmatpush.bf16.msra.mxu0 %v3333
      %3776 = vmatpush.bf16.msra.mxu0 %v3331
      %3777 = vmatpush.bf16.msra.mxu0 %v3329
      %3778 = vmatpush.bf16.msra.mxu0 %v3327
      %3779 = vmatpush.bf16.msra.mxu0 %v3325
      %3780 = vmatpush.bf16.msra.mxu0 %v3323
      %3781 = vmatpush.bf16.msra.mxu0 %v3321
      %3782 = vmatmul.bf16.gmra.mxu0 %v2725
      %v3783 = vpop.f32.mrf.mxu0
      %v3784 = vadd.f32 %v3750, %v3783
      %v3785 = vpop.f32.mrf.mxu0
      %v3786 = vadd.f32 %v3752, %v3785
      %3787 = vmatmul.bf16.gmra.mxu0 %v2729
      %v3788 = vpop.f32.mrf.mxu0
      %v3789 = vadd.f32 %v3755, %v3788
      %v3790 = vpop.f32.mrf.mxu0
      %v3791 = vadd.f32 %v3757, %v3790
      %3792 = vmatmul.bf16.gmra.mxu0 %v2912
      %v3793 = vpop.f32.mrf.mxu0
      %v3794 = vadd.f32 %v3760, %v3793
      %v3795 = vpop.f32.mrf.mxu0
      %v3796 = vadd.f32 %v3762, %v3795
      %3797 = vmatmul.bf16.gmra.mxu0 %v2874
      %v3798 = vpop.f32.mrf.mxu0
      %v3799 = vadd.f32 %v3765, %v3798
      %v3800 = vpop.f32.mrf.mxu0
      %v3801 = vadd.f32 %v3767, %v3800
      %3802 = vmatmul.bf16.gmra.mxu0 %v2886
      %v3803 = vpop.f32.mrf.mxu0
      %v3804 = vadd.f32 %v3770, %v3803
      %v3805 = vpop.f32.mrf.mxu0
      %v3806 = vadd.f32 %v3772, %v3805
      %3807 = vdwg.mxu0
      %3808 = vmatpush.bf16.msra.mxu0 %v3351
      %3809 = vmatpush.bf16.msra.mxu0 %v3349
      %3810 = vmatpush.bf16.msra.mxu0 %v3347
      %3811 = vmatpush.bf16.msra.mxu0 %v3345
      %3812 = vmatpush.bf16.msra.mxu0 %v3343
      %3813 = vmatpush.bf16.msra.mxu0 %v3341
      %3814 = vmatpush.bf16.msra.mxu0 %v3339
      %3815 = vmatpush.bf16.msra.mxu0 %v3337
      %3816 = vmatmul.bf16.gmra.mxu0 %v2737
      %v3817 = vpop.f32.mrf.mxu0
      %v3818 = vadd.f32 %v3784, %v3817
      %v3819 = vpop.f32.mrf.mxu0
      %v3820 = vadd.f32 %v3786, %v3819
      %3821 = vmatmul.bf16.gmra.mxu0 %v2741
      %v3822 = vpop.f32.mrf.mxu0
      %v3823 = vadd.f32 %v3789, %v3822
      %v3824 = vpop.f32.mrf.mxu0
      %v3825 = vadd.f32 %v3791, %v3824
      %3826 = vmatmul.bf16.gmra.mxu0 %v2915
      %v3827 = vpop.f32.mrf.mxu0
      %v3828 = vadd.f32 %v3794, %v3827
      %v3829 = vpop.f32.mrf.mxu0
      %v3830 = vadd.f32 %v3796, %v3829
      %3831 = vmatmul.bf16.gmra.mxu0 %v2876
      %v3832 = vpop.f32.mrf.mxu0
      %v3833 = vadd.f32 %v3799, %v3832
      %v3834 = vpop.f32.mrf.mxu0
      %v3835 = vadd.f32 %v3801, %v3834
      %3836 = vmatmul.bf16.gmra.mxu0 %v2888
      %v3837 = vpop.f32.mrf.mxu0
      %v3838 = vadd.f32 %v3804, %v3837
      %v3839 = vpop.f32.mrf.mxu0
      %v3840 = vadd.f32 %v3806, %v3839
      %3841 = vdwg.mxu0
      %3842 = vmatpush.bf16.msra.mxu0 0
      %3843 = vmatpush.bf16.msra.mxu0 0
      %3844 = vmatpush.bf16.msra.mxu0 0
      %3845 = vmatpush.bf16.msra.mxu0 0
      %3846 = vmatpush.bf16.msra.mxu0 %v3466
      %3847 = vmatpush.bf16.msra.mxu0 %v3357
      %3848 = vmatpush.bf16.msra.mxu0 %v3355
      %3849 = vmatpush.bf16.msra.mxu0 %v3353
      %3850 = vmatmul.bf16.gmra.mxu0 %v3448
      %v3851 = vpop.f32.mrf.mxu0
      %v3852 = vadd.f32 %v3818, %v3851
      %v3853 = vpop.f32.mrf.mxu0
      %v3854 = vadd.f32 %v3820, %v3853
      %3855 = vmatmul.bf16.gmra.mxu0 %v3451
      %v3856 = vpop.f32.mrf.mxu0
      %v3857 = vadd.f32 %v3823, %v3856
      %v3858 = vpop.f32.mrf.mxu0
      %v3859 = vadd.f32 %v3825, %v3858
      %3860 = vmatmul.bf16.gmra.mxu0 %v3453
      %v3861 = vpop.f32.mrf.mxu0
      %v3862 = vadd.f32 %v3828, %v3861
      %v3863 = vpop.f32.mrf.mxu0
      %v3864 = vadd.f32 %v3830, %v3863
      %3865 = vmatmul.bf16.gmra.mxu0 %v3456
      %v3866 = vpop.f32.mrf.mxu0
      %v3867 = vadd.f32 %v3833, %v3866
      %v3868 = vpop.f32.mrf.mxu0
      %v3869 = vadd.f32 %v3835, %v3868
      %3870 = vmatmul.bf16.gmra.mxu0 %v3459
      %v3871 = vpop.f32.mrf.mxu0
      %v3872 = vadd.f32 %v3838, %v3871
      %v3873 = vpop.f32.mrf.mxu0
      %v3874 = vadd.f32 %v3840, %v3873
      %3875 = vdwg.mxu0
      %v3876 = vmax.f32 %v3648, %v3660
      %v3877 = vmax.f32 %v3852, %v3864
      %v3878 = vmax.f32 %v3650, %v3663
      %v3879 = vmax.f32 %v3854, %v3867
      %v3880 = vmax.f32 %v3653, %v3665
      %v3881 = vmax.f32 %v3857, %v3869
      %v3882 = vmax.f32 %v3655, %v3668
      %v3883 = vmax.f32 %v3859, %v3872
      %v3884 = vmax.f32 %v3658, %v3670
      %v3885 = vmax.f32 %v3862, %v3874
      %3896 = vrot.lane.b32.xlu0 %v3876, 28
      %v3897 = vpop.permute.xlu0 %3896
      %3898 = vrot.lane.b32.xlu0 %v3877, 28
      %v3899 = vpop.permute.xlu0 %3898
      %3900 = vrot.lane.b32.xlu0 %v3878, 28
      %v3901 = vpop.permute.xlu0 %3900
      %3902 = vrot.lane.b32.xlu0 %v3879, 28
      %v3903 = vpop.permute.xlu0 %3902
      %3904 = vrot.lane.b32.xlu0 %v3880, 28
      %v3905 = vpop.permute.xlu0 %3904
      %3906 = vrot.lane.b32.xlu0 %v3881, 28
      %v3907 = vpop.permute.xlu0 %3906
      %3908 = vrot.lane.b32.xlu0 %v3882, 28
      %v3909 = vpop.permute.xlu0 %3908
      %3910 = vrot.lane.b32.xlu0 %v3883, 28
      %v3911 = vpop.permute.xlu0 %3910
      %3912 = vrot.lane.b32.xlu0 %v3884, 28
      %v3913 = vpop.permute.xlu0 %3912
      %3914 = vrot.lane.b32.xlu0 %v3885, 28
      %v3915 = vpop.permute.xlu0 %3914
      %vm3916 = vcmask 228352
      %v3917 = vsel %vm3916, %v3897, %v3899
      %v3918 = vsel %vm3916, %v3901, %v3903
      %v3919 = vsel %vm3916, %v3905, %v3907
      %v3920 = vsel %vm3916, %v3909, %v3911
      %v3921 = vsel %vm3916, %v3913, %v3915
      %v3927 = vmax.f32 %v3876, %v3917
      %v3928 = vmax.f32 %v3878, %v3918
      %v3929 = vmax.f32 %v3880, %v3919
      %v3930 = vmax.f32 %v3882, %v3920
      %v3931 = vmax.f32 %v3884, %v3921
      %v3932 = vld [vmem:[%s4] sm:$0x1]
      %v3934 = vperm.slane %v3932, 0
      %v3936 = vadd.f32 %v3927, %v3934
      %v3937 = vadd.f32 %v3928, %v3934
      %v3938 = vadd.f32 %v3929, %v3934
      %v3939 = vadd.f32 %v3930, %v3934
      %v3940 = vadd.f32 %v3931, %v3934
      %v3941 = vmax.f32 %v3936, 0.0
      %v3942 = vmax.f32 %v3937, 0.0
      %v3943 = vmax.f32 %v3938, 0.0
      %v3944 = vmax.f32 %v3939, 0.0
      %v3945 = vmax.f32 %v3940, 0.0
      %v3946 = vpack.c.bf16 %v3941, %v3941
      %v3947 = vpack.c.bf16 %v3942, %v3942
      %v3948 = vpack.c.bf16 %v3943, %v3943
      %v3949 = vpack.c.bf16 %v3944, %v3944
      %v3950 = vpack.c.bf16 %v3945, %v3945
      %v3952 = vunpack.c.l.b16 %v3947
      %v3953 = vpack.c.b16 %v3952, %v3952
      %3954 = vrot.lane.b32.xlu0 %v3953, 100
      %v3955 = vpop.permute.xlu0 %3954
      %v3957 = vunpack.c.l.b16 %v3948
      %v3958 = vpack.c.b16 %v3957, %v3957
      %3959 = vrot.lane.b32.xlu0 %v3958, 72
      %v3960 = vpop.permute.xlu0 %3959
      %v3962 = vunpack.c.l.b16 %v3949
      %v3963 = vpack.c.b16 %v3962, %v3962
      %3964 = vrot.lane.b32.xlu0 %v3963, 44
      %v3965 = vpop.permute.xlu0 %3964
      %v3967 = vunpack.c.l.b16 %v3950
      %v3968 = vpack.c.b16 %v3967, %v3967
      %3969 = vrot.lane.b32.xlu0 %v3968, 16
      %v3970 = vpop.permute.xlu0 %3969
      %vm3971 = vcmask 818176
      %v3974 = vsel %vm3971, %v3946, %v3955
      %v3977 = vsel %vm545, %v3955, %v3960
      %vm3979 = vcmask 359424
      %v3981 = vsel %vm3979, %v3960, %v3965
      %v3984 = vsel %vm566, %v3965, %v3970
      %v3985 = vld [vmem:[%s5] sm:$0xf]
      %v3986 = vld [vmem:[%s5 + $0x4] sm:$0xf]
      %v3987 = vld [vmem:[%s5 + $0x8] sm:$0xf]
      %v3988 = vld [vmem:[%s5 + $0xc] sm:$0xf]
      %v3989 = vld [vmem:[%s5 + $0x10] sm:$0xf]
      %v3990 = vld [vmem:[%s5 + $0x14] sm:$0xf]
      %v3991 = vld [vmem:[%s5 + $0x18] sm:$0xf]
      %v3992 = vld [vmem:[%s5 + $0x1c] sm:$0xf]
      %v3993 = vld [vmem:[%s5 + $0x20] sm:$0xf]
      %v3994 = vld [vmem:[%s5 + $0x24] sm:$0xf]
      %v3995 = vld [vmem:[%s5 + $0x28] sm:$0xf]
      %v3996 = vld [vmem:[%s5 + $0x2c] sm:$0xf]
      %v3997 = vld [vmem:[%s5 + $0x30] sm:$0xf]
      %v3998 = vld [vmem:[%s5 + $0x34] sm:$0xf]
      %v3999 = vld [vmem:[%s5 + $0x38] sm:$0xf]
      %v4000 = vld [vmem:[%s5 + $0x3c] sm:$0xf]
      %v4001 = vld [vmem:[%s5 + $0x40] sm:$0xf]
      %v4002 = vld [vmem:[%s5 + $0x44] sm:$0xf]
      %v4003 = vld [vmem:[%s5 + $0x48] sm:$0xf]
      %v4004 = vld [vmem:[%s5 + $0x4c] sm:$0xf]
      %v4005 = vld [vmem:[%s5 + $0x50] sm:$0xf]
      %v4006 = vld [vmem:[%s5 + $0x54] sm:$0xf]
      %v4007 = vld [vmem:[%s5 + $0x58] sm:$0xf]
      %v4008 = vld [vmem:[%s5 + $0x5c] sm:$0xf]
      %v4009 = vld [vmem:[%s5 + $0x60] sm:$0xf]
      %v4010 = vld [vmem:[%s5 + $0x64] sm:$0xf]
      %v4011 = vld [vmem:[%s5 + $0x68] sm:$0xf]
      %v4012 = vld [vmem:[%s5 + $0x6c] sm:$0xf]
      %v4013 = vld [vmem:[%s5 + $0x70] sm:$0xf]
      %v4014 = vld [vmem:[%s5 + $0x74] sm:$0xf]
      %v4015 = vld [vmem:[%s5 + $0x78] sm:$0xf]
      %v4016 = vld [vmem:[%s5 + $0x7c] sm:$0xf]
      %v4017 = vld [vmem:[%s5 + $0x80] sm:$0xf]
      %v4018 = vld [vmem:[%s5 + $0x84] sm:$0xf]
      %v4019 = vld [vmem:[%s5 + $0x88] sm:$0xf]
      %v4020 = vld [vmem:[%s5 + $0x8c] sm:$0xf]
      %v4021 = vld [vmem:[%s5 + $0x90] sm:$0xf]
      %v4022 = vld [vmem:[%s5 + $0x94] sm:$0xf]
      %v4023 = vld [vmem:[%s5 + $0x98] sm:$0xf]
      %v4024 = vld [vmem:[%s5 + $0x9c] sm:$0xf]
      %v4025 = vld [vmem:[%s5 + $0xa0] sm:$0xf]
      %v4026 = vld [vmem:[%s5 + $0xa4] sm:$0xf]
      %v4027 = vld [vmem:[%s5 + $0xa8] sm:$0xf]
      %v4028 = vld [vmem:[%s5 + $0xac] sm:$0xf]
      %v4029 = vld [vmem:[%s5 + $0xb0] sm:$0xf]
      %v4030 = vld [vmem:[%s5 + $0xb4] sm:$0xf]
      %v4031 = vld [vmem:[%s5 + $0xb8] sm:$0xf]
      %v4032 = vld [vmem:[%s5 + $0xbc] sm:$0xf]
      %v4033 = vld [vmem:[%s5 + $0xc0] sm:$0xf]
      %v4034 = vld [vmem:[%s5 + $0xc4] sm:$0xf]
      %v4035 = vld [vmem:[%s5 + $0xc8] sm:$0xf]
      %v4036 = vld [vmem:[%s5 + $0xcc] sm:$0xf]
      %v4037 = vld [vmem:[%s5 + $0xd0] sm:$0xf]
      %v4038 = vld [vmem:[%s5 + $0xd4] sm:$0xf]
      %v4039 = vld [vmem:[%s5 + $0xd8] sm:$0xf]
      %v4040 = vld [vmem:[%s5 + $0xdc] sm:$0xf]
      %v4041 = vld [vmem:[%s5 + $0xe0] sm:$0xf]
      %v4042 = vld [vmem:[%s5 + $0xe4] sm:$0xf]
      %v4043 = vld [vmem:[%s5 + $0xe8] sm:$0xf]
      %v4044 = vld [vmem:[%s5 + $0xec] sm:$0xf]
      %v4045 = vld [vmem:[%s5 + $0xf0] sm:$0xf]
      %v4046 = vld [vmem:[%s5 + $0xf4] sm:$0xf]
      %v4047 = vld [vmem:[%s5 + $0xf8] sm:$0x3]
      %v4048 = vld [vmem:[%s6] sm:$0x1]
      %v4050 = vperm.slane %v4048, 0
      %v4115 = vunpack.c.l.b16 %v3985
      %v4116 = vunpack.c.l.b16 %v3986
      %v4117 = vunpack.c.l.b16 %v3987
      %v4118 = vunpack.c.l.b16 %v3988
      %v4119 = vunpack.c.l.b16 %v3989
      %v4120 = vunpack.c.l.b16 %v3990
      %v4121 = vunpack.c.l.b16 %v3991
      %v4122 = vunpack.c.l.b16 %v3992
      %v4123 = vunpack.c.l.b16 %v3993
      %v4124 = vunpack.c.l.b16 %v3994
      %v4125 = vunpack.c.l.b16 %v3995
      %v4126 = vunpack.c.l.b16 %v3996
      %v4127 = vunpack.c.l.b16 %v3997
      %v4128 = vunpack.c.l.b16 %v3998
      %v4129 = vunpack.c.l.b16 %v3999
      %v4130 = vunpack.c.l.b16 %v4000
      %v4131 = vunpack.c.l.b16 %v4001
      %v4132 = vunpack.c.l.b16 %v4002
      %v4133 = vunpack.c.l.b16 %v4003
      %v4134 = vunpack.c.l.b16 %v4004
      %v4135 = vunpack.c.l.b16 %v4005
      %v4136 = vunpack.c.l.b16 %v4006
      %v4137 = vunpack.c.l.b16 %v4007
      %v4138 = vunpack.c.l.b16 %v4008
      %v4139 = vunpack.c.l.b16 %v4009
      %v4140 = vunpack.c.l.b16 %v4010
      %v4141 = vunpack.c.l.b16 %v4011
      %v4142 = vunpack.c.l.b16 %v4012
      %v4143 = vunpack.c.l.b16 %v4013
      %v4144 = vunpack.c.l.b16 %v4014
      %v4145 = vunpack.c.l.b16 %v4015
      %v4146 = vunpack.c.l.b16 %v4016
      %v4147 = vunpack.c.l.b16 %v4017
      %v4148 = vunpack.c.l.b16 %v4018
      %v4149 = vunpack.c.l.b16 %v4019
      %v4150 = vunpack.c.l.b16 %v4020
      %v4151 = vunpack.c.l.b16 %v4021
      %v4152 = vunpack.c.l.b16 %v4022
      %v4153 = vunpack.c.l.b16 %v4023
      %v4154 = vunpack.c.l.b16 %v4024
      %v4155 = vunpack.c.l.b16 %v4025
      %v4156 = vunpack.c.l.b16 %v4026
      %v4157 = vunpack.c.l.b16 %v4027
      %v4158 = vunpack.c.l.b16 %v4028
      %v4159 = vunpack.c.l.b16 %v4029
      %v4160 = vunpack.c.l.b16 %v4030
      %v4161 = vunpack.c.l.b16 %v4031
      %v4162 = vunpack.c.l.b16 %v4032
      %v4163 = vunpack.c.l.b16 %v4033
      %v4164 = vunpack.c.l.b16 %v4034
      %v4165 = vunpack.c.l.b16 %v4035
      %v4166 = vunpack.c.l.b16 %v4036
      %v4167 = vunpack.c.l.b16 %v4037
      %v4168 = vunpack.c.l.b16 %v4038
      %v4169 = vunpack.c.l.b16 %v4039
      %v4170 = vunpack.c.l.b16 %v4040
      %v4171 = vunpack.c.l.b16 %v4041
      %v4172 = vunpack.c.l.b16 %v4042
      %v4173 = vunpack.c.l.b16 %v4043
      %v4174 = vunpack.c.l.b16 %v4044
      %v4175 = vunpack.c.l.b16 %v4045
      %v4176 = vunpack.c.l.b16 %v4046
      %v4177 = vunpack.c.l.b16 %v4047
      %v4178 = vpack.c.b16 %v4116, %v4115
      %v4179 = vpack.c.b16 %v4118, %v4117
      %v4180 = vpack.c.b16 %v4120, %v4119
      %v4181 = vpack.c.b16 %v4122, %v4121
      %v4182 = vpack.c.b16 %v4124, %v4123
      %v4183 = vpack.c.b16 %v4126, %v4125
      %v4184 = vpack.c.b16 %v4128, %v4127
      %v4185 = vpack.c.b16 %v4130, %v4129
      %v4186 = vpack.c.b16 %v4132, %v4131
      %v4187 = vpack.c.b16 %v4134, %v4133
      %v4188 = vpack.c.b16 %v4136, %v4135
      %v4189 = vpack.c.b16 %v4138, %v4137
      %v4190 = vpack.c.b16 %v4140, %v4139
      %v4191 = vpack.c.b16 %v4142, %v4141
      %v4192 = vpack.c.b16 %v4144, %v4143
      %v4193 = vpack.c.b16 %v4146, %v4145
      %v4194 = vpack.c.b16 %v4148, %v4147
      %v4195 = vpack.c.b16 %v4150, %v4149
      %v4196 = vpack.c.b16 %v4152, %v4151
      %v4197 = vpack.c.b16 %v4154, %v4153
      %v4198 = vpack.c.b16 %v4156, %v4155
      %v4199 = vpack.c.b16 %v4158, %v4157
      %v4200 = vpack.c.b16 %v4160, %v4159
      %v4201 = vpack.c.b16 %v4162, %v4161
      %v4202 = vpack.c.b16 %v4164, %v4163
      %v4203 = vpack.c.b16 %v4166, %v4165
      %v4204 = vpack.c.b16 %v4168, %v4167
      %v4205 = vpack.c.b16 %v4170, %v4169
      %v4206 = vpack.c.b16 %v4172, %v4171
      %v4207 = vpack.c.b16 %v4174, %v4173
      %v4208 = vpack.c.b16 %v4176, %v4175
      %v4209 = vpack.c.b16 %v4177, %v4177
      %v4241 = vsel %vm2356, %v3984, 0
      %v4244 = vsel %vm1572, %v4209, 0
      %4246 = vmatpush.bf16.msra.mxu0 %v4185
      %4247 = vmatpush.bf16.msra.mxu0 %v4184
      %4248 = vmatpush.bf16.msra.mxu0 %v4183
      %4249 = vmatpush.bf16.msra.mxu0 %v4182
      %4250 = vmatpush.bf16.msra.mxu0 %v4181
      %4251 = vmatpush.bf16.msra.mxu0 %v4180
      %4252 = vmatpush.bf16.msra.mxu0 %v4179
      %4253 = vmatpush.bf16.msra.mxu0 %v4178
      %4254 = vmatmul.bf16.gmra.mxu0 %v3974
      %v4255 = vpop.f32.mrf.mxu0
      %v4256 = vadd.f32 %v4050, %v4255
      %v4257 = vpop.f32.mrf.mxu0
      %4258 = vdwg.mxu0
      %4259 = vmatpush.bf16.msra.mxu0 %v4193
      %4260 = vmatpush.bf16.msra.mxu0 %v4192
      %4261 = vmatpush.bf16.msra.mxu0 %v4191
      %4262 = vmatpush.bf16.msra.mxu0 %v4190
      %4263 = vmatpush.bf16.msra.mxu0 %v4189
      %4264 = vmatpush.bf16.msra.mxu0 %v4188
      %4265 = vmatpush.bf16.msra.mxu0 %v4187
      %4266 = vmatpush.bf16.msra.mxu0 %v4186
      %4267 = vmatmul.bf16.gmra.mxu0 %v3977
      %v4268 = vpop.f32.mrf.mxu0
      %v4269 = vadd.f32 %v4256, %v4268
      %v4270 = vpop.f32.mrf.mxu0
      %4271 = vdwg.mxu0
      %4272 = vmatpush.bf16.msra.mxu0 %v4201
      %4273 = vmatpush.bf16.msra.mxu0 %v4200
      %4274 = vmatpush.bf16.msra.mxu0 %v4199
      %4275 = vmatpush.bf16.msra.mxu0 %v4198
      %4276 = vmatpush.bf16.msra.mxu0 %v4197
      %4277 = vmatpush.bf16.msra.mxu0 %v4196
      %4278 = vmatpush.bf16.msra.mxu0 %v4195
      %4279 = vmatpush.bf16.msra.mxu0 %v4194
      %4280 = vmatmul.bf16.gmra.mxu0 %v3981
      %v4281 = vpop.f32.mrf.mxu0
      %v4282 = vadd.f32 %v4269, %v4281
      %v4283 = vpop.f32.mrf.mxu0
      %4284 = vdwg.mxu0
      %4285 = vmatpush.bf16.msra.mxu0 %v4244
      %4286 = vmatpush.bf16.msra.mxu0 %v4208
      %4287 = vmatpush.bf16.msra.mxu0 %v4207
      %4288 = vmatpush.bf16.msra.mxu0 %v4206
      %4289 = vmatpush.bf16.msra.mxu0 %v4205
      %4290 = vmatpush.bf16.msra.mxu0 %v4204
      %4291 = vmatpush.bf16.msra.mxu0 %v4203
      %4292 = vmatpush.bf16.msra.mxu0 %v4202
      %4293 = vmatmul.bf16.gmra.mxu0 %v4241
      %v4294 = vpop.f32.mrf.mxu0
      %v4295 = vadd.f32 %v4282, %v4294
      %v4296 = vpop.f32.mrf.mxu0
      %4297 = vdwg.mxu0
      %v4298 = vmax.f32 %v4295, 0.0
      %v4299 = vpack.c.bf16 %v4298, %v4298
      %v4300 = vld [vmem:[%s7] sm:$0xf]
      %v4301 = vld [vmem:[%s7 + $0x4] sm:$0xf]
      %v4302 = vld [vmem:[%s7 + $0x8] sm:$0xf]
      %v4303 = vld [vmem:[%s7 + $0xc] sm:$0xf]
      %v4304 = vld [vmem:[%s7 + $0x10] sm:$0xf]
      %v4305 = vld [vmem:[%s7 + $0x14] sm:$0xf]
      %v4306 = vld [vmem:[%s7 + $0x18] sm:$0xf]
      %v4307 = vld [vmem:[%s7 + $0x1c] sm:$0xf]
      %v4308 = vld [vmem:[%s8] sm:$0x1]
      %v4310 = vperm.slane %v4308, 0
      %v4320 = vunpack.c.l.b16 %v4300
      %v4321 = vunpack.c.l.b16 %v4301
      %v4322 = vunpack.c.l.b16 %v4302
      %v4323 = vunpack.c.l.b16 %v4303
      %v4324 = vunpack.c.l.b16 %v4304
      %v4325 = vunpack.c.l.b16 %v4305
      %v4326 = vunpack.c.l.b16 %v4306
      %v4327 = vunpack.c.l.b16 %v4307
      %v4328 = vpack.c.b16 %v4321, %v4320
      %v4329 = vpack.c.b16 %v4323, %v4322
      %v4330 = vpack.c.b16 %v4325, %v4324
      %v4331 = vpack.c.b16 %v4327, %v4326
      %vm4336 = vcmask 523264
      %v4338 = vsel %vm4336, %v4299, 0
      %4340 = vmatpush.bf16.msra.mxu0 0
      %4341 = vmatpush.bf16.msra.mxu0 0
      %4342 = vmatpush.bf16.msra.mxu0 0
      %4343 = vmatpush.bf16.msra.mxu0 0
      %4344 = vmatpush.bf16.msra.mxu0 %v4331
      %4345 = vmatpush.bf16.msra.mxu0 %v4330
      %4346 = vmatpush.bf16.msra.mxu0 %v4329
      %4347 = vmatpush.bf16.msra.mxu0 %v4328
      %4348 = vmatmul.bf16.gmra.mxu0 %v4338
      %v4349 = vpop.f32.mrf.mxu0
      %v4350 = vadd.f32 %v4310, %v4349
      %v4351 = vpop.f32.mrf.mxu0
      %4352 = vdwg.mxu0
      %4353 = vst [vmem:[%s330] sm:$0xff] %v4350
      %p4354 = scmp.lt.s32.totalorder %s20, 1
      %s4355 = scalar_select %p4354, %s20, 1
      %s4356 = smul.addr %s4355, 8
      %s4357 = scalar_lea.vmem %s9, %s4356
      // Predicated region
      $region57: #{regression_model_forward.1} parent=55 // pred_check
        %p4358 = pneg %p232
      $region58: #{regression_model_forward.1} parent=55 // pred_check_branch
        %4360 = sbr.rel (%p4358) target = $region60
      $region59: #{regression_model_forward.1} parent=55 // pred_region
        _
      $region60: #{regression_model_forward.1} parent=55 // pred_fallthru
        _
    $region56: #{regression_model_forward.1} parent=5 // pred_fallthru
      _
    %p4361 = scmp.le.s32.totalorder 2, %s15
    // Predicated region
    $region61: #{regression_model_forward.1} parent=5 // pred_check
      %p4362 = pneg %p4361
    $region62: #{regression_model_forward.1} parent=5 // pred_check_branch
      %4364 = sbr.rel (%p4362) target = $region64
    $region63: #{regression_model_forward.1} parent=5 // pred_region
      %s4365 = ssub.s32 %s15, 2
      // Predicated region
      $region65: #{regression_model_forward.1} parent=63 // pred_check
        %p4366 = pneg %p238
      $region66: #{regression_model_forward.1} parent=63 // pred_check_branch
        %4368 = sbr.rel (%p4366) target = $region68
      $region67: #{regression_model_forward.1} parent=63 // pred_region
        %p4369 = scmp.lt.s32.totalorder %s21, 1
        %s4370 = scalar_select %p4369, %s21, 1
        %s4371 = smul.addr %s4370, 8
        %s4372 = scalar_lea.vmem %s9, %s4371
      $region68: #{regression_model_forward.1} parent=63 // pred_fallthru
        _
    $region64: #{regression_model_forward.1} parent=5 // pred_fallthru
      _
  $region6: #{regression_model_forward.1} parent=0 // loop_footer
    %s19 = sadd.s32 1, %s15
  $region7: #{regression_model_forward.1} parent=0 // loop_footer_branch
    %14 = sbr.rel target = $region3
  $region8: #{regression_model_forward.1} parent=0 // loop_exit
    _

</llo_original>
